<compile_context>
chip_gen: v6e
topology: v6e:2x2x1
jax: 0.10.0
libtpu: 0.0.40
codegen_flags: <defaults>
</compile_context>

<pallas_src>
import math

import jax
import jax.numpy as jnp
from jax import lax
from jax.experimental import pallas as pl
from jax.experimental.pallas import tpu as pltpu

_LN_EPS = 1e-6
_INV_SQRT2 = 0.7071067811865476
_BF16 = jnp.bfloat16


def _derive_vmem_limit():
    # Re-derive per generation (v5e/v6e: 128 MiB physical, v7x: 64 MiB).
    try:
        cap = int(pltpu.get_tpu_info().vmem_capacity_bytes)
        return max(16 * 1024 * 1024, min(cap // 2, 96 * 1024 * 1024))
    except Exception:
        return 32 * 1024 * 1024


_VMEM_LIMIT = _derive_vmem_limit()


# ----------------------------------------------------------------------------
# kernels (weights arrive as bf16; activations cast to bf16 right at the dots)
# ----------------------------------------------------------------------------
def _layernorm_f32(x, g, b):
    mu = jnp.mean(x, axis=-1, keepdims=True)
    xc = x - mu
    var = jnp.mean(xc * xc, axis=-1, keepdims=True)
    return xc * lax.rsqrt(var + _LN_EPS) * g + b


def _gelu_f32(x):
    return 0.5 * x * (1.0 + lax.erf(x * _INV_SQRT2))


def _linear_kernel(x_ref, w_ref, bias_ref, o_ref):
    # o = x @ W + b
    y = jnp.dot(x_ref[...].astype(_BF16), w_ref[...],
                preferred_element_type=jnp.float32)
    o_ref[...] = (y + bias_ref[...]).astype(o_ref.dtype)


def _ln_linear_kernel(x_ref, g_ref, b_ref, w_ref, bias_ref, o_ref):
    # o = LayerNorm(x) @ W + b      (fused LN -> matmul)
    # NOTE: zero-padded rows have var=0 -> LN output = beta; harmless, they
    # are masked in attention and sliced off before the classifier head.
    h = _layernorm_f32(x_ref[...].astype(jnp.float32), g_ref[...], b_ref[...])
    y = jnp.dot(h.astype(_BF16), w_ref[...], preferred_element_type=jnp.float32)
    o_ref[...] = (y + bias_ref[...]).astype(o_ref.dtype)


def _linear_residual_kernel(x_ref, res_ref, w_ref, bias_ref, o_ref):
    # o = res + x @ W + b           (fused residual add)
    y = jnp.dot(x_ref[...].astype(_BF16), w_ref[...],
                preferred_element_type=jnp.float32)
    o_ref[...] = (res_ref[...] + y + bias_ref[...]).astype(o_ref.dtype)


def _ln_ffn_residual_kernel(x_ref, g_ref, b_ref, w1_ref, b1_ref, w2_ref, b2_ref,
                            o_ref):
    # o = x + GELU(LN(x) @ W1 + b1) @ W2 + b2
    x = x_ref[...].astype(jnp.float32)
    h = _layernorm_f32(x, g_ref[...], b_ref[...])
    h = jnp.dot(h.astype(_BF16), w1_ref[...],
                preferred_element_type=jnp.float32) + b1_ref[...]
    h = _gelu_f32(h)
    y = jnp.dot(h.astype(_BF16), w2_ref[...],
                preferred_element_type=jnp.float32)
    o_ref[...] = (x + y + b2_ref[...]).astype(o_ref.dtype)


# ----------------------------------------------------------------------------
# row-tiled pallas_call helper
# ----------------------------------------------------------------------------
def _round_up(x, m):
    return ((x + m - 1) // m) * m


def _pick_tm(M):
    # At least 2 grid steps when possible (keeps both v7x TensorCores busy and
    # gives the pipeline something to overlap), capped so tiles stay in VMEM,
    # remainder waste bounded by <8 rows.
    tm = _round_up(max(-(-M // 2), 8), 8)
    return max(8, min(256, tm))


def _row_call(kernel, row_inputs, side_inputs, side_specs, out_dim, cost=None):
    M = row_inputs[0].shape[0]
    tm = _pick_tm(M)
    M_pad = _round_up(M, tm)
    if M_pad != M:
        row_inputs = [jnp.pad(r, ((0, M_pad - M), (0, 0))) for r in row_inputs]
    row_specs = [pl.BlockSpec((tm, r.shape[1]), lambda i: (i, 0))
                 for r in row_inputs]
    out = pl.pallas_call(
        kernel,
        out_shape=jax.ShapeDtypeStruct((M_pad, out_dim), jnp.float32),
        grid_spec=pltpu.PrefetchScalarGridSpec(
            num_scalar_prefetch=0,
            grid=(M_pad // tm,),
            in_specs=row_specs + list(side_specs),
            out_specs=pl.BlockSpec((tm, out_dim), lambda i: (i, 0)),
        ),
        compiler_params=pltpu.CompilerParams(
            dimension_semantics=("parallel",),
            vmem_limit_bytes=_VMEM_LIMIT),
        cost_estimate=cost,
    )(*row_inputs, *side_inputs)
    return out[:M] if M_pad != M else out


def linear_pallas(x2d, w, b):
    M, K = x2d.shape
    N = w.shape[1]
    cost = pl.CostEstimate(flops=int(2 * M * K * N), transcendentals=0,
                           bytes_accessed=int(4 * (M * K + M * N + N) + 2 * K * N))
    return _row_call(
        _linear_kernel, [x2d],
        side_inputs=[w, b.reshape(1, N)],
        side_specs=[pl.BlockSpec((K, N), lambda i: (0, 0)),
                    pl.BlockSpec((1, N), lambda i: (0, 0))],
        out_dim=N, cost=cost)


def ln_linear_pallas(x2d, g, b_ln, w, bias):
    M, K = x2d.shape
    N = w.shape[1]
    cost = pl.CostEstimate(flops=int(2 * M * K * N + 8 * M * K),
                           transcendentals=int(M),
                           bytes_accessed=int(4 * (M * K + M * N + 2 * K + N)
                                              + 2 * K * N))
    return _row_call(
        _ln_linear_kernel, [x2d],
        side_inputs=[g.reshape(1, K), b_ln.reshape(1, K), w, bias.reshape(1, N)],
        side_specs=[pl.BlockSpec((1, K), lambda i: (0, 0)),
                    pl.BlockSpec((1, K), lambda i: (0, 0)),
                    pl.BlockSpec((K, N), lambda i: (0, 0)),
                    pl.BlockSpec((1, N), lambda i: (0, 0))],
        out_dim=N, cost=cost)


def linear_residual_pallas(x2d, res2d, w, b):
    M, K = x2d.shape
    N = w.shape[1]
    cost = pl.CostEstimate(flops=int(2 * M * K * N + M * N), transcendentals=0,
                           bytes_accessed=int(4 * (M * K + 2 * M * N + N)
                                              + 2 * K * N))
    return _row_call(
        _linear_residual_kernel, [x2d, res2d],
        side_inputs=[w, b.reshape(1, N)],
        side_specs=[pl.BlockSpec((K, N), lambda i: (0, 0)),
                    pl.BlockSpec((1, N), lambda i: (0, 0))],
        out_dim=N, cost=cost)


def ln_ffn_residual_pallas(x2d, g, b_ln, w1, b1, w2, b2):
    M, D = x2d.shape
    F = w1.shape[1]
    cost = pl.CostEstimate(flops=int(4 * M * D * F + 10 * M * D + 8 * M * F),
                           transcendentals=int(M * F),
                           bytes_accessed=int(4 * (2 * M * D + 2 * D + D + F)
                                              + 2 * (D * F + F * D)))
    return _row_call(
        _ln_ffn_residual_kernel, [x2d],
        side_inputs=[g.reshape(1, D), b_ln.reshape(1, D),
                     w1, b1.reshape(1, F), w2, b2.reshape(1, D)],
        side_specs=[pl.BlockSpec((1, D), lambda i: (0, 0)),
                    pl.BlockSpec((1, D), lambda i: (0, 0)),
                    pl.BlockSpec((D, F), lambda i: (0, 0)),
                    pl.BlockSpec((1, F), lambda i: (0, 0)),
                    pl.BlockSpec((F, D), lambda i: (0, 0)),
                    pl.BlockSpec((1, D), lambda i: (0, 0))],
        out_dim=D, cost=cost)


# ----------------------------------------------------------------------------
# attention: one grid step per batch, all heads in-kernel, packed QKV input,
# masked softmax over zero-padded key positions, lane-dense (S, D) output.
# ----------------------------------------------------------------------------
def attention_pallas(qkv, s_real, num_heads):
    B, S_pad, threeD = qkv.shape
    D = threeD // 3
    dh = D // num_heads
    scale = 1.0 / math.sqrt(dh)

    def kernel(qkv_ref, o_ref):
        x = qkv_ref[0]                                    # (S_pad, 3D) f32
        col = lax.broadcasted_iota(jnp.int32, (S_pad, S_pad), 1)
        key_mask = jnp.where(col < s_real, 0.0, -1e30).astype(jnp.float32)
        outs = []
        for h in range(num_heads):                        # static unroll
            q = x[:, h * dh:(h + 1) * dh].astype(_BF16)
            k = x[:, D + h * dh:D + (h + 1) * dh].astype(_BF16)
            v = x[:, 2 * D + h * dh:2 * D + (h + 1) * dh].astype(_BF16)
            s = jnp.einsum("qd,kd->qk", q, k,
                           preferred_element_type=jnp.float32)
            s = s * scale + key_mask
            m = jnp.max(s, axis=-1, keepdims=True)
            p = jnp.exp(s - m)
            denom = jnp.sum(p, axis=-1, keepdims=True)
            p = p * pl.reciprocal(denom, approx=True)     # EUP slot, ~free
            outs.append(jnp.dot(p.astype(_BF16), v,
                                preferred_element_type=jnp.float32))
        # single lane-dense (S_pad, D) store
        o_ref[0] = jnp.concatenate(outs, axis=-1).astype(o_ref.dtype)

    in_spec = pl.BlockSpec((1, S_pad, threeD), lambda b: (b, 0, 0))
    out_spec = pl.BlockSpec((1, S_pad, D), lambda b: (b, 0, 0))
    cost = pl.CostEstimate(
        flops=int(B * num_heads * (4 * S_pad * S_pad * dh + 6 * S_pad * S_pad)),
        transcendentals=int(B * num_heads * S_pad * S_pad),
        bytes_accessed=int(4 * B * S_pad * (threeD + D)))
    return pl.pallas_call(
        kernel,
        out_shape=jax.ShapeDtypeStruct((B, S_pad, D), jnp.float32),
        grid_spec=pltpu.PrefetchScalarGridSpec(
            num_scalar_prefetch=0, grid=(B,),
            in_specs=[in_spec], out_specs=out_spec),
        compiler_params=pltpu.CompilerParams(
            dimension_semantics=("parallel",),
            vmem_limit_bytes=_VMEM_LIMIT),
        cost_estimate=cost,
    )(qkv)


# ----------------------------------------------------------------------------
# full TDiscriminator forward
# ----------------------------------------------------------------------------
def tdiscriminator_forward(params, x_img, *, patches, num_heads):
    B, C, H, W = x_img.shape
    ph, pw = patches
    n, m = H // ph, W // pw
    d_model = params["w_patch"].shape[1]
    s_real = n * m + 1
    s_pad = _round_up(s_real, 8)

    # patch embedding: Conv2d(kernel=stride=patch) == patch-extract + matmul
    p = x_img.reshape(B, C, n, ph, m, pw).transpose(0, 2, 4, 1, 3, 5)
    p = p.reshape(B * n * m, C * ph * pw)
    x = linear_pallas(p, params["w_patch"], params["b_patch"])
    x = x.reshape(B, n * m, d_model)

    # class token + position embedding, then pad the sequence ONCE.
    cls = jnp.broadcast_to(params["cls"], (B, 1, d_model))
    x = jnp.concatenate([cls, x], axis=1) + params["pos"]          # (B, s_real, D)
    x = jnp.pad(x, ((0, 0), (0, s_pad - s_real), (0, 0)))          # (B, s_pad, D)

    for lp in params["layers"]:
        x2d = x.reshape(B * s_pad, d_model)
        # fused LN1 + packed QKV projection
        qkv = ln_linear_pallas(x2d, lp["ln1_g"], lp["ln1_b"],
                               lp["w_qkv"], lp["b_qkv"])
        # per-batch multi-head attention on the packed QKV
        attn = attention_pallas(qkv.reshape(B, s_pad, 3 * d_model),
                                s_real, num_heads)
        # fused output projection + residual
        x2d = linear_residual_pallas(attn.reshape(B * s_pad, d_model), x2d,
                                     lp["w_proj"], lp["b_proj"])
        # fused LN2 + FFN + residual
        x2d = ln_ffn_residual_pallas(x2d, lp["ln2_g"], lp["ln2_b"],
                                     lp["w_ff1"], lp["b_ff1"],
                                     lp["w_ff2"], lp["b_ff2"])
        x = x2d.reshape(B, s_pad, d_model)

    # final LayerNorm + classification head on the CLS token only
    cls_tok = x[:, 0]                                               # (B, d_model)
    return ln_linear_pallas(cls_tok, params["ln_g"], params["ln_b"],
                            params["w_mlp"], params["b_mlp"])


# ----------------------------------------------------------------------------
# pure-JAX reference (mirrors the kernels' bf16-MXU / f32-accumulate math)
# ----------------------------------------------------------------------------
def _reference_forward(params, x_img, *, patches, num_heads):
    B, C, H, W = x_img.shape
    ph, pw = patches
    n, m = H // ph, W // pw
    d_model = params["w_patch"].shape[1]
    nh = num_heads
    dh = d_model // nh

    def bdot(a, w):  # bf16 operands, f32 accumulation (matches kernels)
        return jnp.dot(a.astype(_BF16), w, preferred_element_type=jnp.float32)

    def ln(y, g, b):
        mu = jnp.mean(y, -1, keepdims=True)
        yc = y - mu
        var = jnp.mean(yc * yc, -1, keepdims=True)
        return yc * lax.rsqrt(var + _LN_EPS) * g + b

    p = x_img.reshape(B, C, n, ph, m, pw).transpose(0, 2, 4, 1, 3, 5)
    p = p.reshape(B, n * m, C * ph * pw)
    x = bdot(p, params["w_patch"]) + params["b_patch"]
    cls = jnp.broadcast_to(params["cls"], (B, 1, d_model))
    x = jnp.concatenate([cls, x], axis=1) + params["pos"]
    S = x.shape[1]

    for lp in params["layers"]:
        h = ln(x, lp["ln1_g"], lp["ln1_b"])
        qkv = bdot(h, lp["w_qkv"]) + lp["b_qkv"]
        q = qkv[..., :d_model].reshape(B, S, nh, dh).transpose(0, 2, 1, 3)
        k = qkv[..., d_model:2 * d_model].reshape(B, S, nh, dh).transpose(0, 2, 1, 3)
        v = qkv[..., 2 * d_model:].reshape(B, S, nh, dh).transpose(0, 2, 1, 3)
        s = jnp.einsum("bhqd,bhkd->bhqk", q.astype(_BF16), k.astype(_BF16),
                       preferred_element_type=jnp.float32) / math.sqrt(dh)
        a = jax.nn.softmax(s, axis=-1)
        o = jnp.einsum("bhqk,bhkd->bhqd", a.astype(_BF16), v.astype(_BF16),
                       preferred_element_type=jnp.float32)
        o = o.transpose(0, 2, 1, 3).reshape(B, S, d_model)
        x = x + bdot(o, lp["w_proj"]) + lp["b_proj"]
        h2 = ln(x, lp["ln2_g"], lp["ln2_b"])
        h2 = bdot(h2, lp["w_ff1"]) + lp["b_ff1"]
        h2 = 0.5 * h2 * (1.0 + lax.erf(h2 * _INV_SQRT2))
        x = x + bdot(h2, lp["w_ff2"]) + lp["b_ff2"]

    x = ln(x, params["ln_g"], params["ln_b"])
    return bdot(x[:, 0], params["w_mlp"]) + params["b_mlp"]


# ----------------------------------------------------------------------------
# parameter init (mimics nn.Linear uniform(+-1/sqrt(fan_in)); LN = ones/zeros)
# ----------------------------------------------------------------------------
def init_params(key, *, image_size, patches, d_model, d_ff, num_heads,
                num_layers, num_classes):
    C, H, W = image_size
    ph, pw = patches
    seq_len = (H // ph) * (W // pw) + 1
    keys = iter(jax.random.split(key, 16 + 16 * num_layers))

    def linear_init(fan_in, shape_w, shape_b):
        lim = 1.0 / math.sqrt(fan_in)
        w = jax.random.uniform(next(keys), shape_w, jnp.float32, -lim, lim)
        b = jax.random.uniform(next(keys), shape_b, jnp.float32, -lim, lim)
        return w, b

    params = {}
    params["w_patch"], params["b_patch"] = linear_init(
        C * ph * pw, (C * ph * pw, d_model), (d_model,))
    params["cls"] = 0.02 * jax.random.normal(next(keys), (1, 1, d_model), jnp.float32)
    params["pos"] = 0.02 * jax.random.normal(next(keys), (1, seq_len, d_model), jnp.float32)

    layers = []
    for _ in range(num_layers):
        lp = {}
        lp["ln1_g"] = jnp.ones((d_model,), jnp.float32)
        lp["ln1_b"] = jnp.zeros((d_model,), jnp.float32)
        lp["wq"], lp["bq"] = linear_init(d_model, (d_model, d_model), (d_model,))
        lp["wk"], lp["bk"] = linear_init(d_model, (d_model, d_model), (d_model,))
        lp["wv"], lp["bv"] = linear_init(d_model, (d_model, d_model), (d_model,))
        lp["w_proj"], lp["b_proj"] = linear_init(d_model, (d_model, d_model), (d_model,))
        lp["ln2_g"] = jnp.ones((d_model,), jnp.float32)
        lp["ln2_b"] = jnp.zeros((d_model,), jnp.float32)
        lp["w_ff1"], lp["b_ff1"] = linear_init(d_model, (d_model, d_ff), (d_ff,))
        lp["w_ff2"], lp["b_ff2"] = linear_init(d_ff, (d_ff, d_model), (d_model,))
        layers.append(lp)
    params["layers"] = layers

    params["ln_g"] = jnp.ones((d_model,), jnp.float32)
    params["ln_b"] = jnp.zeros((d_model,), jnp.float32)
    params["w_mlp"], params["b_mlp"] = linear_init(
        d_model, (d_model, num_classes), (num_classes,))
    return params


def prepare_params(raw):
    """Pack Q|K|V weights into one matrix and cast matmul weights to bf16."""
    def bf(w):
        return w.astype(_BF16)

    out = {
        "w_patch": bf(raw["w_patch"]), "b_patch": raw["b_patch"],
        "cls": raw["cls"], "pos": raw["pos"],
        "ln_g": raw["ln_g"], "ln_b": raw["ln_b"],
        "w_mlp": bf(raw["w_mlp"]), "b_mlp": raw["b_mlp"],
        "layers": [],
    }
    for lp in raw["layers"]:
        out["layers"].append({
            "ln1_g": lp["ln1_g"], "ln1_b": lp["ln1_b"],
            "w_qkv": bf(jnp.concatenate([lp["wq"], lp["wk"], lp["wv"]], axis=1)),
            "b_qkv": jnp.concatenate([lp["bq"], lp["bk"], lp["bv"]]),
            "w_proj": bf(lp["w_proj"]), "b_proj": lp["b_proj"],
            "ln2_g": lp["ln2_g"], "ln2_b": lp["ln2_b"],
            "w_ff1": bf(lp["w_ff1"]), "b_ff1": lp["b_ff1"],
            "w_ff2": bf(lp["w_ff2"]), "b_ff2": lp["b_ff2"],
        })
    return out


if __name__ == "__main__":
    # Small, lane-friendly config consistent with the TDiscriminator module.
    B = 2
    image_size = (3, 16, 16)
    patches = (2, 2)
    d_model = 128          # multiple of 128 -> lane-dense stores
    d_ff = 256
    num_heads = 4
    num_layers = 2
    num_classes = 2

    key = jax.random.PRNGKey(0)
    kp, kx = jax.random.split(key)
    raw_params = init_params(kp, image_size=image_size, patches=patches,
                             d_model=d_model, d_ff=d_ff, num_heads=num_heads,
                             num_layers=num_layers, num_classes=num_classes)
    params = prepare_params(raw_params)
    x_img = jax.random.normal(kx, (B,) + image_size, dtype=jnp.float32)

    fwd = jax.jit(lambda p, x: tdiscriminator_forward(
        p, x, patches=patches, num_heads=num_heads))
    logits = jax.block_until_ready(fwd(params, x_img))

    ref = _reference_forward(params, x_img, patches=patches, num_heads=num_heads)

    assert logits.shape == (B, num_classes), logits.shape
    assert bool(jnp.all(jnp.isfinite(logits)))
    max_err = float(jnp.max(jnp.abs(logits - ref)))
    assert jnp.allclose(logits, ref, atol=2e-2, rtol=2e-2), (
        "mismatch vs reference", max_err, logits, ref)

    print("KERNEL_OK")
</pallas_src>

<mosaic_0001>
module attributes {stable_mosaic.version = 11 : i64} {
  func.func @_linear_kernel(%arg0: i32, %arg1: memref<64x12xf32, #tpu.memory_space<vmem>>, %arg2: memref<12x128xbf16, #tpu.memory_space<vmem>>, %arg3: memref<1x128xf32, #tpu.memory_space<vmem>>, %arg4: memref<64x128xf32, #tpu.memory_space<vmem>>) attributes {dimension_semantics = [#tpu.dimension_semantics<parallel>], iteration_bounds = array<i64: 2>, scalar_prefetch = 0 : i64, scratch_operands = 0 : i64, tpu.core_type = #tpu.core_type<tc>, window_params = [{transform_indices = @transform_0, window_bounds = array<i64: 64, 12>}, {pipeline_mode = #tpu.pipeline_mode<synchronous>, transform_indices = @transform_1, window_bounds = array<i64: 12, 128>}, {pipeline_mode = #tpu.pipeline_mode<synchronous>, transform_indices = @transform_2, window_bounds = array<i64: 1, 128>}, {transform_indices = @transform_3, window_bounds = array<i64: 64, 128>}]} {
    %c0 = arith.constant 0 : index
    %c0_0 = arith.constant 0 : index
    %0 = vector.load %arg1[%c0, %c0_0] : memref<64x12xf32, #tpu.memory_space<vmem>>, vector<64x12xf32>
    %1 = arith.truncf %0 : vector<64x12xf32> to vector<64x12xbf16>
    %c0_1 = arith.constant 0 : index
    %c0_2 = arith.constant 0 : index
    %2 = vector.load %arg2[%c0_1, %c0_2] : memref<12x128xbf16, #tpu.memory_space<vmem>>, vector<12x128xbf16>
    %cst = arith.constant dense<0.000000e+00> : vector<64x128xf32>
    %3 = tpu.matmul %1, %2, %cst {dimension_numbers = #tpu.dot_dimension_numbers<[1], [0], [0], [1], [0, 0, 1, 1], [], []>} : vector<64x12xbf16>, vector<12x128xbf16>, vector<64x128xf32> -> vector<64x128xf32>
    %c0_3 = arith.constant 0 : index
    %c0_4 = arith.constant 0 : index
    %4 = vector.load %arg3[%c0_3, %c0_4] : memref<1x128xf32, #tpu.memory_space<vmem>>, vector<1x128xf32>
    %5 = vector.broadcast %4 : vector<1x128xf32> to vector<64x128xf32>
    %6 = arith.addf %3, %5 : vector<64x128xf32>
    %c0_5 = arith.constant 0 : index
    %c0_6 = arith.constant 0 : index
    %7 = vector.load %arg4[%c0_5, %c0_6] : memref<64x128xf32, #tpu.memory_space<vmem>>, vector<64x128xf32>
    tpu.vector_store %arg4[%c0_5, %c0_6], %6 {strides = array<i32>} : memref<64x128xf32, #tpu.memory_space<vmem>>, vector<64x128xf32>,
    return
  }
  func.func @transform_0(%arg0: i32) -> (i32, i32) {
    %c0_i32 = arith.constant 0 : i32
    %c0_i32_0 = arith.constant 0 : i32
    return %arg0, %c0_i32 : i32, i32
  }
  func.func @transform_1(%arg0: i32) -> (i32, i32) {
    %c0_i32 = arith.constant 0 : i32
    %c0_i32_0 = arith.constant 0 : i32
    %c0_i32_1 = arith.constant 0 : i32
    return %c0_i32, %c0_i32_0 : i32, i32
  }
  func.func @transform_2(%arg0: i32) -> (i32, i32) {
    %c0_i32 = arith.constant 0 : i32
    %c0_i32_0 = arith.constant 0 : i32
    %c0_i32_1 = arith.constant 0 : i32
    return %c0_i32, %c0_i32_0 : i32, i32
  }
  func.func @transform_3(%arg0: i32) -> (i32, i32) {
    %c0_i32 = arith.constant 0 : i32
    %c0_i32_0 = arith.constant 0 : i32
    return %arg0, %c0_i32 : i32, i32
  }
}

module attributes {stable_mosaic.version = 11 : i64} {
  func.func @_ln_linear_kernel(%arg0: i32, %arg1: memref<72x128xf32, #tpu.memory_space<vmem>>, %arg2: memref<1x128xf32, #tpu.memory_space<vmem>>, %arg3: memref<1x128xf32, #tpu.memory_space<vmem>>, %arg4: memref<128x384xbf16, #tpu.memory_space<vmem>>, %arg5: memref<1x384xf32, #tpu.memory_space<vmem>>, %arg6: memref<72x384xf32, #tpu.memory_space<vmem>>) attributes {dimension_semantics = [#tpu.dimension_semantics<parallel>], iteration_bounds = array<i64: 2>, scalar_prefetch = 0 : i64, scratch_operands = 0 : i64, tpu.core_type = #tpu.core_type<tc>, window_params = [{transform_indices = @transform_0, window_bounds = array<i64: 72, 128>}, {pipeline_mode = #tpu.pipeline_mode<synchronous>, transform_indices = @transform_1, window_bounds = array<i64: 1, 128>}, {pipeline_mode = #tpu.pipeline_mode<synchronous>, transform_indices = @transform_2, window_bounds = array<i64: 1, 128>}, {pipeline_mode = #tpu.pipeline_mode<synchronous>, transform_indices = @transform_3, window_bounds = array<i64: 128, 384>}, {pipeline_mode = #tpu.pipeline_mode<synchronous>, transform_indices = @transform_4, window_bounds = array<i64: 1, 384>}, {transform_indices = @transform_5, window_bounds = array<i64: 72, 384>}]} {
    %c0 = arith.constant 0 : index
    %c0_0 = arith.constant 0 : index
    %0 = vector.load %arg1[%c0, %c0_0] : memref<72x128xf32, #tpu.memory_space<vmem>>, vector<72x128xf32>
    %c0_1 = arith.constant 0 : index
    %c0_2 = arith.constant 0 : index
    %1 = vector.load %arg2[%c0_1, %c0_2] : memref<1x128xf32, #tpu.memory_space<vmem>>, vector<1x128xf32>
    %c0_3 = arith.constant 0 : index
    %c0_4 = arith.constant 0 : index
    %2 = vector.load %arg3[%c0_3, %c0_4] : memref<1x128xf32, #tpu.memory_space<vmem>>, vector<1x128xf32>
    %cst = arith.constant dense<0.000000e+00> : vector<72xf32>
    %3 = vector.multi_reduction <add>, %0, %cst [1] : vector<72x128xf32> to vector<72xf32>
    %4 = vector.shape_cast %3 : vector<72xf32> to vector<72x1xf32>
    %cst_5 = arith.constant 1.280000e+02 : f32
    %5 = vector.broadcast %cst_5 : f32 to vector<72x1xf32>
    %6 = arith.divf %4, %5 : vector<72x1xf32>
    %7 = vector.broadcast %6 : vector<72x1xf32> to vector<72x128xf32>
    %8 = arith.subf %0, %7 : vector<72x128xf32>
    %9 = arith.mulf %8, %8 : vector<72x128xf32>
    %cst_6 = arith.constant dense<0.000000e+00> : vector<72xf32>
    %10 = vector.multi_reduction <add>, %9, %cst_6 [1] : vector<72x128xf32> to vector<72xf32>
    %11 = vector.shape_cast %10 : vector<72xf32> to vector<72x1xf32>
    %cst_7 = arith.constant 1.280000e+02 : f32
    %12 = vector.broadcast %cst_7 : f32 to vector<72x1xf32>
    %13 = arith.divf %11, %12 : vector<72x1xf32>
    %cst_8 = arith.constant 9.99999997E-7 : f32
    %14 = vector.broadcast %cst_8 : f32 to vector<72x1xf32>
    %15 = arith.addf %13, %14 : vector<72x1xf32>
    %16 = math.rsqrt %15 : vector<72x1xf32>
    %17 = vector.broadcast %16 : vector<72x1xf32> to vector<72x128xf32>
    %18 = arith.mulf %8, %17 : vector<72x128xf32>
    %19 = vector.broadcast %1 : vector<1x128xf32> to vector<72x128xf32>
    %20 = arith.mulf %18, %19 : vector<72x128xf32>
    %21 = vector.broadcast %2 : vector<1x128xf32> to vector<72x128xf32>
    %22 = arith.addf %20, %21 : vector<72x128xf32>
    %23 = arith.truncf %22 : vector<72x128xf32> to vector<72x128xbf16>
    %c0_9 = arith.constant 0 : index
    %c0_10 = arith.constant 0 : index
    %24 = vector.load %arg4[%c0_9, %c0_10] : memref<128x384xbf16, #tpu.memory_space<vmem>>, vector<128x384xbf16>
    %cst_11 = arith.constant dense<0.000000e+00> : vector<72x384xf32>
    %25 = tpu.matmul %23, %24, %cst_11 {dimension_numbers = #tpu.dot_dimension_numbers<[1], [0], [0], [1], [0, 0, 1, 1], [], []>} : vector<72x128xbf16>, vector<128x384xbf16>, vector<72x384xf32> -> vector<72x384xf32>
    %c0_12 = arith.constant 0 : index
    %c0_13 = arith.constant 0 : index
    %26 = vector.load %arg5[%c0_12, %c0_13] : memref<1x384xf32, #tpu.memory_space<vmem>>, vector<1x384xf32>
    %27 = vector.broadcast %26 : vector<1x384xf32> to vector<72x384xf32>
    %28 = arith.addf %25, %27 : vector<72x384xf32>
    %c0_14 = arith.constant 0 : index
    %c0_15 = arith.constant 0 : index
    %29 = vector.load %arg6[%c0_14, %c0_15] : memref<72x384xf32, #tpu.memory_space<vmem>>, vector<72x384xf32>
    tpu.vector_store %arg6[%c0_14, %c0_15], %28 {strides = array<i32>} : memref<72x384xf32, #tpu.memory_space<vmem>>, vector<72x384xf32>,
    return
  }
  func.func @transform_0(%arg0: i32) -> (i32, i32) {
    %c0_i32 = arith.constant 0 : i32
    %c0_i32_0 = arith.constant 0 : i32
    return %arg0, %c0_i32 : i32, i32
  }
  func.func @transform_1(%arg0: i32) -> (i32, i32) {
    %c0_i32 = arith.constant 0 : i32
    %c0_i32_0 = arith.constant 0 : i32
    %c0_i32_1 = arith.constant 0 : i32
    return %c0_i32, %c0_i32_0 : i32, i32
  }
  func.func @transform_2(%arg0: i32) -> (i32, i32) {
    %c0_i32 = arith.constant 0 : i32
    %c0_i32_0 = arith.constant 0 : i32
    %c0_i32_1 = arith.constant 0 : i32
    return %c0_i32, %c0_i32_0 : i32, i32
  }
  func.func @transform_3(%arg0: i32) -> (i32, i32) {
    %c0_i32 = arith.constant 0 : i32
    %c0_i32_0 = arith.constant 0 : i32
    %c0_i32_1 = arith.constant 0 : i32
    return %c0_i32, %c0_i32_0 : i32, i32
  }
  func.func @transform_4(%arg0: i32) -> (i32, i32) {
    %c0_i32 = arith.constant 0 : i32
    %c0_i32_0 = arith.constant 0 : i32
    %c0_i32_1 = arith.constant 0 : i32
    return %c0_i32, %c0_i32_0 : i32, i32
  }
  func.func @transform_5(%arg0: i32) -> (i32, i32) {
    %c0_i32 = arith.constant 0 : i32
    %c0_i32_0 = arith.constant 0 : i32
    return %arg0, %c0_i32 : i32, i32
  }
}

module attributes {stable_mosaic.version = 11 : i64} {
  func.func @kernel(%arg0: i32, %arg1: memref<1x72x384xf32, #tpu.memory_space<vmem>>, %arg2: memref<1x72x128xf32, #tpu.memory_space<vmem>>) attributes {dimension_semantics = [#tpu.dimension_semantics<parallel>], iteration_bounds = array<i64: 2>, scalar_prefetch = 0 : i64, scratch_operands = 0 : i64, tpu.core_type = #tpu.core_type<tc>, window_params = [{transform_indices = @transform_0, window_bounds = array<i64: 1, 72, 384>}, {transform_indices = @transform_1, window_bounds = array<i64: 1, 72, 128>}]} {
    %c0 = arith.constant 0 : index
    %c0_0 = arith.constant 0 : index
    %c0_1 = arith.constant 0 : index
    %0 = vector.load %arg1[%c0, %c0_0, %c0_1] : memref<1x72x384xf32, #tpu.memory_space<vmem>>, vector<1x72x384xf32>
    %1 = vector.shape_cast %0 : vector<1x72x384xf32> to vector<72x384xf32>
    %2 = tpu.iota {dimensions = array<i32: 1>} : vector<72x72xi32>
    %c65_i32 = arith.constant 65 : i32
    %3 = vector.broadcast %c65_i32 : i32 to vector<72x72xi32>
    %4 = arith.cmpi slt, %2, %3 : vector<72x72xi32>
    %cst = arith.constant 0.000000e+00 : f32
    %cst_2 = arith.constant -1.000000e+30 : f32
    %5 = vector.broadcast %cst : f32 to vector<72x72xf32>
    %6 = vector.broadcast %cst_2 : f32 to vector<72x72xf32>
    %7 = arith.select %4, %5, %6 : vector<72x72xi1>, vector<72x72xf32>
    %8 = vector.extract_strided_slice %1 {offsets = [0, 0], sizes = [72, 32], strides = [1, 1]} : vector<72x384xf32> to vector<72x32xf32>
    %9 = arith.truncf %8 : vector<72x32xf32> to vector<72x32xbf16>
    %10 = vector.extract_strided_slice %1 {offsets = [0, 128], sizes = [72, 32], strides = [1, 1]} : vector<72x384xf32> to vector<72x32xf32>
    %11 = arith.truncf %10 : vector<72x32xf32> to vector<72x32xbf16>
    %12 = vector.extract_strided_slice %1 {offsets = [0, 256], sizes = [72, 32], strides = [1, 1]} : vector<72x384xf32> to vector<72x32xf32>
    %13 = arith.truncf %12 : vector<72x32xf32> to vector<72x32xbf16>
    "tpu.trace_start"() <{level = 10 : i32, message = "qd,kd->qk"}> : () -> ()
    %cst_3 = arith.constant dense<0.000000e+00> : vector<72x72xf32>
    %14 = tpu.matmul %9, %11, %cst_3 {dimension_numbers = #tpu.dot_dimension_numbers<[1], [1], [0], [0], [0, 0, 1, 0], [], []>} : vector<72x32xbf16>, vector<72x32xbf16>, vector<72x72xf32> -> vector<72x72xf32>
    "tpu.trace_stop"() : () -> ()
    %cst_4 = arith.constant 0.176776692 : f32
    %15 = vector.broadcast %cst_4 : f32 to vector<72x72xf32>
    %16 = arith.mulf %14, %15 : vector<72x72xf32>
    %17 = arith.addf %16, %7 : vector<72x72xf32>
    %cst_5 = arith.constant dense<0xFF800000> : vector<72xf32>
    %18 = vector.multi_reduction <maximumf>, %17, %cst_5 [1] : vector<72x72xf32> to vector<72xf32>
    %19 = vector.shape_cast %18 : vector<72xf32> to vector<72x1xf32>
    %20 = vector.broadcast %19 : vector<72x1xf32> to vector<72x72xf32>
    %21 = arith.subf %17, %20 : vector<72x72xf32>
    %22 = math.exp %21 : vector<72x72xf32>
    %cst_6 = arith.constant dense<0.000000e+00> : vector<72xf32>
    %23 = vector.multi_reduction <add>, %22, %cst_6 [1] : vector<72x72xf32> to vector<72xf32>
    %24 = vector.shape_cast %23 : vector<72xf32> to vector<72x1xf32>
    %25 = tpu.reciprocal %24 {approx = true} : vector<72x1xf32> -> vector<72x1xf32>
    %26 = vector.broadcast %25 : vector<72x1xf32> to vector<72x72xf32>
    %27 = arith.mulf %22, %26 : vector<72x72xf32>
    %28 = arith.truncf %27 : vector<72x72xf32> to vector<72x72xbf16>
    %cst_7 = arith.constant dense<0.000000e+00> : vector<72x32xf32>
    %29 = tpu.matmul %28, %13, %cst_7 {dimension_numbers = #tpu.dot_dimension_numbers<[1], [0], [0], [1], [0, 0, 1, 1], [], []>} : vector<72x72xbf16>, vector<72x32xbf16>, vector<72x32xf32> -> vector<72x32xf32>
    %30 = vector.extract_strided_slice %1 {offsets = [0, 32], sizes = [72, 32], strides = [1, 1]} : vector<72x384xf32> to vector<72x32xf32>
    %31 = arith.truncf %30 : vector<72x32xf32> to vector<72x32xbf16>
    %32 = vector.extract_strided_slice %1 {offsets = [0, 160], sizes = [72, 32], strides = [1, 1]} : vector<72x384xf32> to vector<72x32xf32>
    %33 = arith.truncf %32 : vector<72x32xf32> to vector<72x32xbf16>
    %34 = vector.extract_strided_slice %1 {offsets = [0, 288], sizes = [72, 32], strides = [1, 1]} : vector<72x384xf32> to vector<72x32xf32>
    %35 = arith.truncf %34 : vector<72x32xf32> to vector<72x32xbf16>
    "tpu.trace_start"() <{level = 10 : i32, message = "qd,kd->qk"}> : () -> ()
    %cst_8 = arith.constant dense<0.000000e+00> : vector<72x72xf32>
    %36 = tpu.matmul %31, %33, %cst_8 {dimension_numbers = #tpu.dot_dimension_numbers<[1], [1], [0], [0], [0, 0, 1, 0], [], []>} : vector<72x32xbf16>, vector<72x32xbf16>, vector<72x72xf32> -> vector<72x72xf32>
    "tpu.trace_stop"() : () -> ()
    %cst_9 = arith.constant 0.176776692 : f32
    %37 = vector.broadcast %cst_9 : f32 to vector<72x72xf32>
    %38 = arith.mulf %36, %37 : vector<72x72xf32>
    %39 = arith.addf %38, %7 : vector<72x72xf32>
    %cst_10 = arith.constant dense<0xFF800000> : vector<72xf32>
    %40 = vector.multi_reduction <maximumf>, %39, %cst_10 [1] : vector<72x72xf32> to vector<72xf32>
    %41 = vector.shape_cast %40 : vector<72xf32> to vector<72x1xf32>
    %42 = vector.broadcast %41 : vector<72x1xf32> to vector<72x72xf32>
    %43 = arith.subf %39, %42 : vector<72x72xf32>
    %44 = math.exp %43 : vector<72x72xf32>
    %cst_11 = arith.constant dense<0.000000e+00> : vector<72xf32>
    %45 = vector.multi_reduction <add>, %44, %cst_11 [1] : vector<72x72xf32> to vector<72xf32>
    %46 = vector.shape_cast %45 : vector<72xf32> to vector<72x1xf32>
    %47 = tpu.reciprocal %46 {approx = true} : vector<72x1xf32> -> vector<72x1xf32>
    %48 = vector.broadcast %47 : vector<72x1xf32> to vector<72x72xf32>
    %49 = arith.mulf %44, %48 : vector<72x72xf32>
    %50 = arith.truncf %49 : vector<72x72xf32> to vector<72x72xbf16>
    %cst_12 = arith.constant dense<0.000000e+00> : vector<72x32xf32>
    %51 = tpu.matmul %50, %35, %cst_12 {dimension_numbers = #tpu.dot_dimension_numbers<[1], [0], [0], [1], [0, 0, 1, 1], [], []>} : vector<72x72xbf16>, vector<72x32xbf16>, vector<72x32xf32> -> vector<72x32xf32>
    %52 = vector.extract_strided_slice %1 {offsets = [0, 64], sizes = [72, 32], strides = [1, 1]} : vector<72x384xf32> to vector<72x32xf32>
    %53 = arith.truncf %52 : vector<72x32xf32> to vector<72x32xbf16>
    %54 = vector.extract_strided_slice %1 {offsets = [0, 192], sizes = [72, 32], strides = [1, 1]} : vector<72x384xf32> to vector<72x32xf32>
    %55 = arith.truncf %54 : vector<72x32xf32> to vector<72x32xbf16>
    %56 = vector.extract_strided_slice %1 {offsets = [0, 320], sizes = [72, 32], strides = [1, 1]} : vector<72x384xf32> to vector<72x32xf32>
    %57 = arith.truncf %56 : vector<72x32xf32> to vector<72x32xbf16>
    "tpu.trace_start"() <{level = 10 : i32, message = "qd,kd->qk"}> : () -> ()
    %cst_13 = arith.constant dense<0.000000e+00> : vector<72x72xf32>
    %58 = tpu.matmul %53, %55, %cst_13 {dimension_numbers = #tpu.dot_dimension_numbers<[1], [1], [0], [0], [0, 0, 1, 0], [], []>} : vector<72x32xbf16>, vector<72x32xbf16>, vector<72x72xf32> -> vector<72x72xf32>
    "tpu.trace_stop"() : () -> ()
    %cst_14 = arith.constant 0.176776692 : f32
    %59 = vector.broadcast %cst_14 : f32 to vector<72x72xf32>
    %60 = arith.mulf %58, %59 : vector<72x72xf32>
    %61 = arith.addf %60, %7 : vector<72x72xf32>
    %cst_15 = arith.constant dense<0xFF800000> : vector<72xf32>
    %62 = vector.multi_reduction <maximumf>, %61, %cst_15 [1] : vector<72x72xf32> to vector<72xf32>
    %63 = vector.shape_cast %62 : vector<72xf32> to vector<72x1xf32>
    %64 = vector.broadcast %63 : vector<72x1xf32> to vector<72x72xf32>
    %65 = arith.subf %61, %64 : vector<72x72xf32>
    %66 = math.exp %65 : vector<72x72xf32>
    %cst_16 = arith.constant dense<0.000000e+00> : vector<72xf32>
    %67 = vector.multi_reduction <add>, %66, %cst_16 [1] : vector<72x72xf32> to vector<72xf32>
    %68 = vector.shape_cast %67 : vector<72xf32> to vector<72x1xf32>
    %69 = tpu.reciprocal %68 {approx = true} : vector<72x1xf32> -> vector<72x1xf32>
    %70 = vector.broadcast %69 : vector<72x1xf32> to vector<72x72xf32>
    %71 = arith.mulf %66, %70 : vector<72x72xf32>
    %72 = arith.truncf %71 : vector<72x72xf32> to vector<72x72xbf16>
    %cst_17 = arith.constant dense<0.000000e+00> : vector<72x32xf32>
    %73 = tpu.matmul %72, %57, %cst_17 {dimension_numbers = #tpu.dot_dimension_numbers<[1], [0], [0], [1], [0, 0, 1, 1], [], []>} : vector<72x72xbf16>, vector<72x32xbf16>, vector<72x32xf32> -> vector<72x32xf32>
    %74 = vector.extract_strided_slice %1 {offsets = [0, 96], sizes = [72, 32], strides = [1, 1]} : vector<72x384xf32> to vector<72x32xf32>
    %75 = arith.truncf %74 : vector<72x32xf32> to vector<72x32xbf16>
    %76 = vector.extract_strided_slice %1 {offsets = [0, 224], sizes = [72, 32], strides = [1, 1]} : vector<72x384xf32> to vector<72x32xf32>
    %77 = arith.truncf %76 : vector<72x32xf32> to vector<72x32xbf16>
    %78 = vector.extract_strided_slice %1 {offsets = [0, 352], sizes = [72, 32], strides = [1, 1]} : vector<72x384xf32> to vector<72x32xf32>
    %79 = arith.truncf %78 : vector<72x32xf32> to vector<72x32xbf16>
    "tpu.trace_start"() <{level = 10 : i32, message = "qd,kd->qk"}> : () -> ()
    %cst_18 = arith.constant dense<0.000000e+00> : vector<72x72xf32>
    %80 = tpu.matmul %75, %77, %cst_18 {dimension_numbers = #tpu.dot_dimension_numbers<[1], [1], [0], [0], [0, 0, 1, 0], [], []>} : vector<72x32xbf16>, vector<72x32xbf16>, vector<72x72xf32> -> vector<72x72xf32>
    "tpu.trace_stop"() : () -> ()
    %cst_19 = arith.constant 0.176776692 : f32
    %81 = vector.broadcast %cst_19 : f32 to vector<72x72xf32>
    %82 = arith.mulf %80, %81 : vector<72x72xf32>
    %83 = arith.addf %82, %7 : vector<72x72xf32>
    %cst_20 = arith.constant dense<0xFF800000> : vector<72xf32>
    %84 = vector.multi_reduction <maximumf>, %83, %cst_20 [1] : vector<72x72xf32> to vector<72xf32>
    %85 = vector.shape_cast %84 : vector<72xf32> to vector<72x1xf32>
    %86 = vector.broadcast %85 : vector<72x1xf32> to vector<72x72xf32>
    %87 = arith.subf %83, %86 : vector<72x72xf32>
    %88 = math.exp %87 : vector<72x72xf32>
    %cst_21 = arith.constant dense<0.000000e+00> : vector<72xf32>
    %89 = vector.multi_reduction <add>, %88, %cst_21 [1] : vector<72x72xf32> to vector<72xf32>
    %90 = vector.shape_cast %89 : vector<72xf32> to vector<72x1xf32>
    %91 = tpu.reciprocal %90 {approx = true} : vector<72x1xf32> -> vector<72x1xf32>
    %92 = vector.broadcast %91 : vector<72x1xf32> to vector<72x72xf32>
    %93 = arith.mulf %88, %92 : vector<72x72xf32>
    %94 = arith.truncf %93 : vector<72x72xf32> to vector<72x72xbf16>
    %cst_22 = arith.constant dense<0.000000e+00> : vector<72x32xf32>
    %95 = tpu.matmul %94, %79, %cst_22 {dimension_numbers = #tpu.dot_dimension_numbers<[1], [0], [0], [1], [0, 0, 1, 1], [], []>} : vector<72x72xbf16>, vector<72x32xbf16>, vector<72x32xf32> -> vector<72x32xf32>
    %96 = tpu.concatenate %29, %51, %73, %95 in 1 : vector<72x32xf32>, vector<72x32xf32>, vector<72x32xf32>, vector<72x32xf32> -> vector<72x128xf32>
    %c0_23 = arith.constant 0 : index
    %c0_24 = arith.constant 0 : index
    %c0_25 = arith.constant 0 : index
    %97 = vector.load %arg2[%c0_23, %c0_24, %c0_25] : memref<1x72x128xf32, #tpu.memory_space<vmem>>, vector<1x72x128xf32>
    %98 = vector.shape_cast %97 : vector<1x72x128xf32> to vector<72x128xf32>
    %99 = vector.shape_cast %96 : vector<72x128xf32> to vector<1x72x128xf32>
    tpu.vector_store %arg2[%c0_23, %c0_24, %c0_25], %99 {strides = array<i32>} : memref<1x72x128xf32, #tpu.memory_space<vmem>>, vector<1x72x128xf32>,
    return
  }
  func.func @transform_0(%arg0: i32) -> (i32, i32, i32) {
    %c0_i32 = arith.constant 0 : i32
    %c0_i32_0 = arith.constant 0 : i32
    %c0_i32_1 = arith.constant 0 : i32
    return %arg0, %c0_i32, %c0_i32_0 : i32, i32, i32
  }
  func.func @transform_1(%arg0: i32) -> (i32, i32, i32) {
    %c0_i32 = arith.constant 0 : i32
    %c0_i32_0 = arith.constant 0 : i32
    %c0_i32_1 = arith.constant 0 : i32
    return %arg0, %c0_i32, %c0_i32_0 : i32, i32, i32
  }
}

module attributes {stable_mosaic.version = 11 : i64} {
  func.func @_linear_residual_kernel(%arg0: i32, %arg1: memref<72x128xf32, #tpu.memory_space<vmem>>, %arg2: memref<72x128xf32, #tpu.memory_space<vmem>>, %arg3: memref<128x128xbf16, #tpu.memory_space<vmem>>, %arg4: memref<1x128xf32, #tpu.memory_space<vmem>>, %arg5: memref<72x128xf32, #tpu.memory_space<vmem>>) attributes {dimension_semantics = [#tpu.dimension_semantics<parallel>], iteration_bounds = array<i64: 2>, scalar_prefetch = 0 : i64, scratch_operands = 0 : i64, tpu.core_type = #tpu.core_type<tc>, window_params = [{transform_indices = @transform_0, window_bounds = array<i64: 72, 128>}, {transform_indices = @transform_1, window_bounds = array<i64: 72, 128>}, {pipeline_mode = #tpu.pipeline_mode<synchronous>, transform_indices = @transform_2, window_bounds = array<i64: 128, 128>}, {pipeline_mode = #tpu.pipeline_mode<synchronous>, transform_indices = @transform_3, window_bounds = array<i64: 1, 128>}, {transform_indices = @transform_4, window_bounds = array<i64: 72, 128>}]} {
    %c0 = arith.constant 0 : index
    %c0_0 = arith.constant 0 : index
    %0 = vector.load %arg1[%c0, %c0_0] : memref<72x128xf32, #tpu.memory_space<vmem>>, vector<72x128xf32>
    %1 = arith.truncf %0 : vector<72x128xf32> to vector<72x128xbf16>
    %c0_1 = arith.constant 0 : index
    %c0_2 = arith.constant 0 : index
    %2 = vector.load %arg3[%c0_1, %c0_2] : memref<128x128xbf16, #tpu.memory_space<vmem>>, vector<128x128xbf16>
    %cst = arith.constant dense<0.000000e+00> : vector<72x128xf32>
    %3 = tpu.matmul %1, %2, %cst {dimension_numbers = #tpu.dot_dimension_numbers<[1], [0], [0], [1], [0, 0, 1, 1], [], []>} : vector<72x128xbf16>, vector<128x128xbf16>, vector<72x128xf32> -> vector<72x128xf32>
    %c0_3 = arith.constant 0 : index
    %c0_4 = arith.constant 0 : index
    %4 = vector.load %arg2[%c0_3, %c0_4] : memref<72x128xf32, #tpu.memory_space<vmem>>, vector<72x128xf32>
    %5 = arith.addf %4, %3 : vector<72x128xf32>
    %c0_5 = arith.constant 0 : index
    %c0_6 = arith.constant 0 : index
    %6 = vector.load %arg4[%c0_5, %c0_6] : memref<1x128xf32, #tpu.memory_space<vmem>>, vector<1x128xf32>
    %7 = vector.broadcast %6 : vector<1x128xf32> to vector<72x128xf32>
    %8 = arith.addf %5, %7 : vector<72x128xf32>
    %c0_7 = arith.constant 0 : index
    %c0_8 = arith.constant 0 : index
    %9 = vector.load %arg5[%c0_7, %c0_8] : memref<72x128xf32, #tpu.memory_space<vmem>>, vector<72x128xf32>
    tpu.vector_store %arg5[%c0_7, %c0_8], %8 {strides = array<i32>} : memref<72x128xf32, #tpu.memory_space<vmem>>, vector<72x128xf32>,
    return
  }
  func.func @transform_0(%arg0: i32) -> (i32, i32) {
    %c0_i32 = arith.constant 0 : i32
    %c0_i32_0 = arith.constant 0 : i32
    return %arg0, %c0_i32 : i32, i32
  }
  func.func @transform_1(%arg0: i32) -> (i32, i32) {
    %c0_i32 = arith.constant 0 : i32
    %c0_i32_0 = arith.constant 0 : i32
    return %arg0, %c0_i32 : i32, i32
  }
  func.func @transform_2(%arg0: i32) -> (i32, i32) {
    %c0_i32 = arith.constant 0 : i32
    %c0_i32_0 = arith.constant 0 : i32
    %c0_i32_1 = arith.constant 0 : i32
    return %c0_i32, %c0_i32_0 : i32, i32
  }
  func.func @transform_3(%arg0: i32) -> (i32, i32) {
    %c0_i32 = arith.constant 0 : i32
    %c0_i32_0 = arith.constant 0 : i32
    %c0_i32_1 = arith.constant 0 : i32
    return %c0_i32, %c0_i32_0 : i32, i32
  }
  func.func @transform_4(%arg0: i32) -> (i32, i32) {
    %c0_i32 = arith.constant 0 : i32
    %c0_i32_0 = arith.constant 0 : i32
    return %arg0, %c0_i32 : i32, i32
  }
}

module attributes {stable_mosaic.version = 11 : i64} {
  func.func @_ln_ffn_residual_kernel(%arg0: i32, %arg1: memref<72x128xf32, #tpu.memory_space<vmem>>, %arg2: memref<1x128xf32, #tpu.memory_space<vmem>>, %arg3: memref<1x128xf32, #tpu.memory_space<vmem>>, %arg4: memref<128x256xbf16, #tpu.memory_space<vmem>>, %arg5: memref<1x256xf32, #tpu.memory_space<vmem>>, %arg6: memref<256x128xbf16, #tpu.memory_space<vmem>>, %arg7: memref<1x128xf32, #tpu.memory_space<vmem>>, %arg8: memref<72x128xf32, #tpu.memory_space<vmem>>) attributes {dimension_semantics = [#tpu.dimension_semantics<parallel>], iteration_bounds = array<i64: 2>, scalar_prefetch = 0 : i64, scratch_operands = 0 : i64, tpu.core_type = #tpu.core_type<tc>, window_params = [{transform_indices = @transform_0, window_bounds = array<i64: 72, 128>}, {pipeline_mode = #tpu.pipeline_mode<synchronous>, transform_indices = @transform_1, window_bounds = array<i64: 1, 128>}, {pipeline_mode = #tpu.pipeline_mode<synchronous>, transform_indices = @transform_2, window_bounds = array<i64: 1, 128>}, {pipeline_mode = #tpu.pipeline_mode<synchronous>, transform_indices = @transform_3, window_bounds = array<i64: 128, 256>}, {pipeline_mode = #tpu.pipeline_mode<synchronous>, transform_indices = @transform_4, window_bounds = array<i64: 1, 256>}, {pipeline_mode = #tpu.pipeline_mode<synchronous>, transform_indices = @transform_5, window_bounds = array<i64: 256, 128>}, {pipeline_mode = #tpu.pipeline_mode<synchronous>, transform_indices = @transform_6, window_bounds = array<i64: 1, 128>}, {transform_indices = @transform_7, window_bounds = array<i64: 72, 128>}]} {
    %c0 = arith.constant 0 : index
    %c0_0 = arith.constant 0 : index
    %0 = vector.load %arg1[%c0, %c0_0] : memref<72x128xf32, #tpu.memory_space<vmem>>, vector<72x128xf32>
    %c0_1 = arith.constant 0 : index
    %c0_2 = arith.constant 0 : index
    %1 = vector.load %arg2[%c0_1, %c0_2] : memref<1x128xf32, #tpu.memory_space<vmem>>, vector<1x128xf32>
    %c0_3 = arith.constant 0 : index
    %c0_4 = arith.constant 0 : index
    %2 = vector.load %arg3[%c0_3, %c0_4] : memref<1x128xf32, #tpu.memory_space<vmem>>, vector<1x128xf32>
    %cst = arith.constant dense<0.000000e+00> : vector<72xf32>
    %3 = vector.multi_reduction <add>, %0, %cst [1] : vector<72x128xf32> to vector<72xf32>
    %4 = vector.shape_cast %3 : vector<72xf32> to vector<72x1xf32>
    %cst_5 = arith.constant 1.280000e+02 : f32
    %5 = vector.broadcast %cst_5 : f32 to vector<72x1xf32>
    %6 = arith.divf %4, %5 : vector<72x1xf32>
    %7 = vector.broadcast %6 : vector<72x1xf32> to vector<72x128xf32>
    %8 = arith.subf %0, %7 : vector<72x128xf32>
    %9 = arith.mulf %8, %8 : vector<72x128xf32>
    %cst_6 = arith.constant dense<0.000000e+00> : vector<72xf32>
    %10 = vector.multi_reduction <add>, %9, %cst_6 [1] : vector<72x128xf32> to vector<72xf32>
    %11 = vector.shape_cast %10 : vector<72xf32> to vector<72x1xf32>
    %cst_7 = arith.constant 1.280000e+02 : f32
    %12 = vector.broadcast %cst_7 : f32 to vector<72x1xf32>
    %13 = arith.divf %11, %12 : vector<72x1xf32>
    %cst_8 = arith.constant 9.99999997E-7 : f32
    %14 = vector.broadcast %cst_8 : f32 to vector<72x1xf32>
    %15 = arith.addf %13, %14 : vector<72x1xf32>
    %16 = math.rsqrt %15 : vector<72x1xf32>
    %17 = vector.broadcast %16 : vector<72x1xf32> to vector<72x128xf32>
    %18 = arith.mulf %8, %17 : vector<72x128xf32>
    %19 = vector.broadcast %1 : vector<1x128xf32> to vector<72x128xf32>
    %20 = arith.mulf %18, %19 : vector<72x128xf32>
    %21 = vector.broadcast %2 : vector<1x128xf32> to vector<72x128xf32>
    %22 = arith.addf %20, %21 : vector<72x128xf32>
    %23 = arith.truncf %22 : vector<72x128xf32> to vector<72x128xbf16>
    %c0_9 = arith.constant 0 : index
    %c0_10 = arith.constant 0 : index
    %24 = vector.load %arg4[%c0_9, %c0_10] : memref<128x256xbf16, #tpu.memory_space<vmem>>, vector<128x256xbf16>
    %cst_11 = arith.constant dense<0.000000e+00> : vector<72x256xf32>
    %25 = tpu.matmul %23, %24, %cst_11 {dimension_numbers = #tpu.dot_dimension_numbers<[1], [0], [0], [1], [0, 0, 1, 1], [], []>} : vector<72x128xbf16>, vector<128x256xbf16>, vector<72x256xf32> -> vector<72x256xf32>
    %c0_12 = arith.constant 0 : index
    %c0_13 = arith.constant 0 : index
    %26 = vector.load %arg5[%c0_12, %c0_13] : memref<1x256xf32, #tpu.memory_space<vmem>>, vector<1x256xf32>
    %27 = vector.broadcast %26 : vector<1x256xf32> to vector<72x256xf32>
    %28 = arith.addf %25, %27 : vector<72x256xf32>
    %cst_14 = arith.constant 5.000000e-01 : f32
    %29 = vector.broadcast %cst_14 : f32 to vector<72x256xf32>
    %30 = arith.mulf %29, %28 : vector<72x256xf32>
    %cst_15 = arith.constant 0.707106769 : f32
    %31 = vector.broadcast %cst_15 : f32 to vector<72x256xf32>
    %32 = arith.mulf %28, %31 : vector<72x256xf32>
    %33 = math.erf %32 : vector<72x256xf32>
    %cst_16 = arith.constant 1.000000e+00 : f32
    %34 = vector.broadcast %cst_16 : f32 to vector<72x256xf32>
    %35 = arith.addf %34, %33 : vector<72x256xf32>
    %36 = arith.mulf %30, %35 : vector<72x256xf32>
    %37 = arith.truncf %36 : vector<72x256xf32> to vector<72x256xbf16>
    %c0_17 = arith.constant 0 : index
    %c0_18 = arith.constant 0 : index
    %38 = vector.load %arg6[%c0_17, %c0_18] : memref<256x128xbf16, #tpu.memory_space<vmem>>, vector<256x128xbf16>
    %cst_19 = arith.constant dense<0.000000e+00> : vector<72x128xf32>
    %39 = tpu.matmul %37, %38, %cst_19 {dimension_numbers = #tpu.dot_dimension_numbers<[1], [0], [0], [1], [0, 0, 1, 1], [], []>} : vector<72x256xbf16>, vector<256x128xbf16>, vector<72x128xf32> -> vector<72x128xf32>
    %40 = arith.addf %0, %39 : vector<72x128xf32>
    %c0_20 = arith.constant 0 : index
    %c0_21 = arith.constant 0 : index
    %41 = vector.load %arg7[%c0_20, %c0_21] : memref<1x128xf32, #tpu.memory_space<vmem>>, vector<1x128xf32>
    %42 = vector.broadcast %41 : vector<1x128xf32> to vector<72x128xf32>
    %43 = arith.addf %40, %42 : vector<72x128xf32>
    %c0_22 = arith.constant 0 : index
    %c0_23 = arith.constant 0 : index
    %44 = vector.load %arg8[%c0_22, %c0_23] : memref<72x128xf32, #tpu.memory_space<vmem>>, vector<72x128xf32>
    tpu.vector_store %arg8[%c0_22, %c0_23], %43 {strides = array<i32>} : memref<72x128xf32, #tpu.memory_space<vmem>>, vector<72x128xf32>,
    return
  }
  func.func @transform_0(%arg0: i32) -> (i32, i32) {
    %c0_i32 = arith.constant 0 : i32
    %c0_i32_0 = arith.constant 0 : i32
    return %arg0, %c0_i32 : i32, i32
  }
  func.func @transform_1(%arg0: i32) -> (i32, i32) {
    %c0_i32 = arith.constant 0 : i32
    %c0_i32_0 = arith.constant 0 : i32
    %c0_i32_1 = arith.constant 0 : i32
    return %c0_i32, %c0_i32_0 : i32, i32
  }
  func.func @transform_2(%arg0: i32) -> (i32, i32) {
    %c0_i32 = arith.constant 0 : i32
    %c0_i32_0 = arith.constant 0 : i32
    %c0_i32_1 = arith.constant 0 : i32
    return %c0_i32, %c0_i32_0 : i32, i32
  }
  func.func @transform_3(%arg0: i32) -> (i32, i32) {
    %c0_i32 = arith.constant 0 : i32
    %c0_i32_0 = arith.constant 0 : i32
    %c0_i32_1 = arith.constant 0 : i32
    return %c0_i32, %c0_i32_0 : i32, i32
  }
  func.func @transform_4(%arg0: i32) -> (i32, i32) {
    %c0_i32 = arith.constant 0 : i32
    %c0_i32_0 = arith.constant 0 : i32
    %c0_i32_1 = arith.constant 0 : i32
    return %c0_i32, %c0_i32_0 : i32, i32
  }
  func.func @transform_5(%arg0: i32) -> (i32, i32) {
    %c0_i32 = arith.constant 0 : i32
    %c0_i32_0 = arith.constant 0 : i32
    %c0_i32_1 = arith.constant 0 : i32
    return %c0_i32, %c0_i32_0 : i32, i32
  }
  func.func @transform_6(%arg0: i32) -> (i32, i32) {
    %c0_i32 = arith.constant 0 : i32
    %c0_i32_0 = arith.constant 0 : i32
    %c0_i32_1 = arith.constant 0 : i32
    return %c0_i32, %c0_i32_0 : i32, i32
  }
  func.func @transform_7(%arg0: i32) -> (i32, i32) {
    %c0_i32 = arith.constant 0 : i32
    %c0_i32_0 = arith.constant 0 : i32
    return %arg0, %c0_i32 : i32, i32
  }
}

module attributes {stable_mosaic.version = 11 : i64} {
  func.func @_ln_linear_kernel(%arg0: i32, %arg1: memref<8x128xf32, #tpu.memory_space<vmem>>, %arg2: memref<1x128xf32, #tpu.memory_space<vmem>>, %arg3: memref<1x128xf32, #tpu.memory_space<vmem>>, %arg4: memref<128x2xbf16, #tpu.memory_space<vmem>>, %arg5: memref<1x2xf32, #tpu.memory_space<vmem>>, %arg6: memref<8x2xf32, #tpu.memory_space<vmem>>) attributes {dimension_semantics = [#tpu.dimension_semantics<parallel>], iteration_bounds = array<i64: 1>, scalar_prefetch = 0 : i64, scratch_operands = 0 : i64, tpu.core_type = #tpu.core_type<tc>, window_params = [{transform_indices = @transform_0, window_bounds = array<i64: 8, 128>}, {pipeline_mode = #tpu.pipeline_mode<synchronous>, transform_indices = @transform_1, window_bounds = array<i64: 1, 128>}, {pipeline_mode = #tpu.pipeline_mode<synchronous>, transform_indices = @transform_2, window_bounds = array<i64: 1, 128>}, {pipeline_mode = #tpu.pipeline_mode<synchronous>, transform_indices = @transform_3, window_bounds = array<i64: 128, 2>}, {pipeline_mode = #tpu.pipeline_mode<synchronous>, transform_indices = @transform_4, window_bounds = array<i64: 1, 2>}, {transform_indices = @transform_5, window_bounds = array<i64: 8, 2>}]} {
    %c0 = arith.constant 0 : index
    %c0_0 = arith.constant 0 : index
    %0 = vector.load %arg1[%c0, %c0_0] : memref<8x128xf32, #tpu.memory_space<vmem>>, vector<8x128xf32>
    %c0_1 = arith.constant 0 : index
    %c0_2 = arith.constant 0 : index
    %1 = vector.load %arg2[%c0_1, %c0_2] : memref<1x128xf32, #tpu.memory_space<vmem>>, vector<1x128xf32>
    %c0_3 = arith.constant 0 : index
    %c0_4 = arith.constant 0 : index
    %2 = vector.load %arg3[%c0_3, %c0_4] : memref<1x128xf32, #tpu.memory_space<vmem>>, vector<1x128xf32>
    %cst = arith.constant dense<0.000000e+00> : vector<8xf32>
    %3 = vector.multi_reduction <add>, %0, %cst [1] : vector<8x128xf32> to vector<8xf32>
    %4 = vector.shape_cast %3 : vector<8xf32> to vector<8x1xf32>
    %cst_5 = arith.constant 1.280000e+02 : f32
    %5 = vector.broadcast %cst_5 : f32 to vector<8x1xf32>
    %6 = arith.divf %4, %5 : vector<8x1xf32>
    %7 = vector.broadcast %6 : vector<8x1xf32> to vector<8x128xf32>
    %8 = arith.subf %0, %7 : vector<8x128xf32>
    %9 = arith.mulf %8, %8 : vector<8x128xf32>
    %cst_6 = arith.constant dense<0.000000e+00> : vector<8xf32>
    %10 = vector.multi_reduction <add>, %9, %cst_6 [1] : vector<8x128xf32> to vector<8xf32>
    %11 = vector.shape_cast %10 : vector<8xf32> to vector<8x1xf32>
    %cst_7 = arith.constant 1.280000e+02 : f32
    %12 = vector.broadcast %cst_7 : f32 to vector<8x1xf32>
    %13 = arith.divf %11, %12 : vector<8x1xf32>
    %cst_8 = arith.constant 9.99999997E-7 : f32
    %14 = vector.broadcast %cst_8 : f32 to vector<8x1xf32>
    %15 = arith.addf %13, %14 : vector<8x1xf32>
    %16 = math.rsqrt %15 : vector<8x1xf32>
    %17 = vector.broadcast %16 : vector<8x1xf32> to vector<8x128xf32>
    %18 = arith.mulf %8, %17 : vector<8x128xf32>
    %19 = vector.broadcast %1 : vector<1x128xf32> to vector<8x128xf32>
    %20 = arith.mulf %18, %19 : vector<8x128xf32>
    %21 = vector.broadcast %2 : vector<1x128xf32> to vector<8x128xf32>
    %22 = arith.addf %20, %21 : vector<8x128xf32>
    %23 = arith.truncf %22 : vector<8x128xf32> to vector<8x128xbf16>
    %c0_9 = arith.constant 0 : index
    %c0_10 = arith.constant 0 : index
    %24 = vector.load %arg4[%c0_9, %c0_10] : memref<128x2xbf16, #tpu.memory_space<vmem>>, vector<128x2xbf16>
    %cst_11 = arith.constant dense<0.000000e+00> : vector<8x2xf32>
    %25 = tpu.matmul %23, %24, %cst_11 {dimension_numbers = #tpu.dot_dimension_numbers<[1], [0], [0], [1], [0, 0, 1, 1], [], []>} : vector<8x128xbf16>, vector<128x2xbf16>, vector<8x2xf32> -> vector<8x2xf32>
    %c0_12 = arith.constant 0 : index
    %c0_13 = arith.constant 0 : index
    %26 = vector.load %arg5[%c0_12, %c0_13] : memref<1x2xf32, #tpu.memory_space<vmem>>, vector<1x2xf32>
    %27 = vector.broadcast %26 : vector<1x2xf32> to vector<8x2xf32>
    %28 = arith.addf %25, %27 : vector<8x2xf32>
    %c0_14 = arith.constant 0 : index
    %c0_15 = arith.constant 0 : index
    %29 = vector.load %arg6[%c0_14, %c0_15] : memref<8x2xf32, #tpu.memory_space<vmem>>, vector<8x2xf32>
    tpu.vector_store %arg6[%c0_14, %c0_15], %28 {strides = array<i32>} : memref<8x2xf32, #tpu.memory_space<vmem>>, vector<8x2xf32>,
    return
  }
  func.func @transform_0(%arg0: i32) -> (i32, i32) {
    %c0_i32 = arith.constant 0 : i32
    %c0_i32_0 = arith.constant 0 : i32
    return %arg0, %c0_i32 : i32, i32
  }
  func.func @transform_1(%arg0: i32) -> (i32, i32) {
    %c0_i32 = arith.constant 0 : i32
    %c0_i32_0 = arith.constant 0 : i32
    %c0_i32_1 = arith.constant 0 : i32
    return %c0_i32, %c0_i32_0 : i32, i32
  }
  func.func @transform_2(%arg0: i32) -> (i32, i32) {
    %c0_i32 = arith.constant 0 : i32
    %c0_i32_0 = arith.constant 0 : i32
    %c0_i32_1 = arith.constant 0 : i32
    return %c0_i32, %c0_i32_0 : i32, i32
  }
  func.func @transform_3(%arg0: i32) -> (i32, i32) {
    %c0_i32 = arith.constant 0 : i32
    %c0_i32_0 = arith.constant 0 : i32
    %c0_i32_1 = arith.constant 0 : i32
    return %c0_i32, %c0_i32_0 : i32, i32
  }
  func.func @transform_4(%arg0: i32) -> (i32, i32) {
    %c0_i32 = arith.constant 0 : i32
    %c0_i32_0 = arith.constant 0 : i32
    %c0_i32_1 = arith.constant 0 : i32
    return %c0_i32, %c0_i32_0 : i32, i32
  }
  func.func @transform_5(%arg0: i32) -> (i32, i32) {
    %c0_i32 = arith.constant 0 : i32
    %c0_i32_0 = arith.constant 0 : i32
    return %arg0, %c0_i32 : i32, i32
  }
}

</mosaic_0001>

<llo_original>
// kernel: _lambda_.10
$region0: #{_lambda_.10}
  #allocation0 [shape = 'u32[]', space=smem, size = 0x4, offset = 0x4, fixed_abs, tag = 'smem constant byte address 0x4 - core index']
  #allocation1 [shape = 'u32[144,128]{1,0:T(1,128)}', space=vmem, size = 0x12000, scoped, tag = 'internal scratch']
  %s0 = inlined_call_operand.vmem [shape: f32[128,12], index: 0, kind: input, shape index: {}]
  %s1 = inlined_call_operand.vmem [shape: bf16[12,128], index: 1, kind: input, shape index: {}]
  %s2 = inlined_call_operand.vmem [shape: f32[1,128], index: 2, kind: input, shape index: {}]
  %s3 = inlined_call_operand.vmem [shape: f32[128,128], index: 3, kind: output, shape index: {}]
  %s4 = sld [smem:[#allocation0]]
  $region45: #{_lambda_.10} parent=0
    _
  %s6 = ssub.s32 1, %s4
  %s7 = scalar_select 0, %s6, %s4
  loop: start=0, step=1, limit=4
  $region2: #{_lambda_.10} parent=0 // loop_pre_header
    _
  $region3: #{_lambda_.10} parent=0 // loop_header
    %s9 = sphi 0, %s13
    %p10 = scmp.ge.s32.totalorder %s9, 4
    %s19 = sphi 0, %s21
    %s22 = sphi 0, %s19
    %s23 = sphi 0, %s22
    %s39 = sphi 0, %s23
    %s43 = sphi 0, %s43
    %s45 = sphi 0, %s43
    %s46 = sphi 0, %s45
    %s60 = sphi 0, %s46
    %s64 = sphi 0, %s64
    %s66 = sphi 0, %s64
    %s67 = sphi 0, %s66
    %s81 = sphi 0, %s67
    %s87 = sphi 0, %s89
    %s90 = sphi 0, %s87
    %s91 = sphi 0, %s90
    %s107 = sphi 0, %s91
  $region4: #{_lambda_.10} parent=0 // loop_header_branch
    %12 = sbr.rel (%p10) target = $region8
  $region5: #{_lambda_.10} parent=0 // loop_body
    %s14 = ssub.s32 %s9, 1
    %s15 = ssub.s32 %s9, 2
    %s16 = sadd.s32 %s9, 1
    %s17 = ssub.s32 %s9, %s16
    %p18 = scmp.eq.s32.totalorder %s17, 0
    %s20 = sadd.s32 %s19, 1
    %s21 = scalar_select %p18, %s19, %s20
    %p24 = pneg %p18
    %p25 = scmp.eq.s32.totalorder %s9, 1
    %p26 = por %p24, %p25
    %p27 = scmp.ne.s32.totalorder %s19, %s22
    %p28 = scmp.eq.s32.totalorder %s9, 0
    %p29 = por %p27, %p28
    %p30 = scmp.ne.s32.totalorder %s19, %s22
    %p31 = scmp.eq.s32.totalorder %s14, 1
    %p32 = por %p30, %p31
    %p33 = scmp.ne.s32.totalorder %s22, %s23
    %p34 = scmp.eq.s32.totalorder %s14, 0
    %p35 = por %p33, %p34
    %p36 = scmp.ne.s32.totalorder %s22, %s23
    %p37 = scmp.eq.s32.totalorder %s15, 1
    %p38 = por %p36, %p37
    %p40 = scmp.ne.s32.totalorder %s23, %s39
    %p41 = scmp.eq.s32.totalorder %s15, 0
    %p42 = por %p40, %p41
    %s44 = sadd.s32 %s43, 1
    %p47 = scmp.eq.s32.totalorder %s9, 1
    %p48 = scmp.ne.s32.totalorder %s43, %s45
    %p49 = scmp.eq.s32.totalorder %s9, 0
    %p50 = por %p48, %p49
    %p51 = scmp.ne.s32.totalorder %s43, %s45
    %p52 = scmp.eq.s32.totalorder %s14, 1
    %p53 = por %p51, %p52
    %p54 = scmp.ne.s32.totalorder %s45, %s46
    %p55 = scmp.eq.s32.totalorder %s14, 0
    %p56 = por %p54, %p55
    %p57 = scmp.ne.s32.totalorder %s45, %s46
    %p58 = scmp.eq.s32.totalorder %s15, 1
    %p59 = por %p57, %p58
    %p61 = scmp.ne.s32.totalorder %s46, %s60
    %p62 = scmp.eq.s32.totalorder %s15, 0
    %p63 = por %p61, %p62
    %s65 = sadd.s32 %s64, 1
    %p68 = scmp.eq.s32.totalorder %s9, 1
    %p69 = scmp.ne.s32.totalorder %s64, %s66
    %p70 = scmp.eq.s32.totalorder %s9, 0
    %p71 = por %p69, %p70
    %p72 = scmp.ne.s32.totalorder %s64, %s66
    %p73 = scmp.eq.s32.totalorder %s14, 1
    %p74 = por %p72, %p73
    %p75 = scmp.ne.s32.totalorder %s66, %s67
    %p76 = scmp.eq.s32.totalorder %s14, 0
    %p77 = por %p75, %p76
    %p78 = scmp.ne.s32.totalorder %s66, %s67
    %p79 = scmp.eq.s32.totalorder %s15, 1
    %p80 = por %p78, %p79
    %p82 = scmp.ne.s32.totalorder %s67, %s81
    %p83 = scmp.eq.s32.totalorder %s15, 0
    %p84 = por %p82, %p83
    %s85 = ssub.s32 %s9, %s16
    %p86 = scmp.eq.s32.totalorder %s85, 0
    %s88 = sadd.s32 %s87, 1
    %s89 = scalar_select %p86, %s87, %s88
    %p92 = pneg %p86
    %p93 = scmp.eq.s32.totalorder %s9, 1
    %p94 = por %p92, %p93
    %p95 = scmp.ne.s32.totalorder %s87, %s90
    %p96 = scmp.eq.s32.totalorder %s9, 0
    %p97 = por %p95, %p96
    %p98 = scmp.ne.s32.totalorder %s87, %s90
    %p99 = scmp.eq.s32.totalorder %s14, 1
    %p100 = por %p98, %p99
    %p101 = scmp.ne.s32.totalorder %s90, %s91
    %p102 = scmp.eq.s32.totalorder %s14, 0
    %p103 = por %p101, %p102
    %p104 = scmp.ne.s32.totalorder %s90, %s91
    %p105 = scmp.eq.s32.totalorder %s15, 1
    %p106 = por %p104, %p105
    %p108 = scmp.ne.s32.totalorder %s91, %s107
    %p109 = scmp.eq.s32.totalorder %s15, 0
    %p110 = por %p108, %p109
    %p111 = scmp.le.s32.totalorder 1, %s9
    %p112 = scmp.lt.s32.totalorder %s9, 3
    %p113 = pnand %p111, %p112
    %p114 = pneg %p113
    // Predicated region
    $region9: #{_lambda_.10} parent=5 // pred_check
      _
    $region10: #{_lambda_.10} parent=5 // pred_check_branch
      %116 = sbr.rel (%p113) target = $region12
    $region11: #{_lambda_.10} parent=5 // pred_region
      %s117 = ssub.s32 %s9, 1
      // Predicated region
      $region13: #{_lambda_.10} parent=11 // pred_check
        %p118 = pneg %p56
      $region14: #{_lambda_.10} parent=11 // pred_check_branch
        %120 = sbr.rel (%p118) target = $region16
      $region15: #{_lambda_.10} parent=11 // pred_region
        _
      $region16: #{_lambda_.10} parent=11 // pred_fallthru
        _
      // Predicated region
      $region17: #{_lambda_.10} parent=11 // pred_check
        %p121 = pneg %p77
      $region18: #{_lambda_.10} parent=11 // pred_check_branch
        %123 = sbr.rel (%p121) target = $region20
      $region19: #{_lambda_.10} parent=11 // pred_region
        _
      $region20: #{_lambda_.10} parent=11 // pred_fallthru
        _
    $region12: #{_lambda_.10} parent=5 // pred_fallthru
      _
    %p124 = scmp.lt.s32.totalorder %s9, 2
    // Predicated region
    $region21: #{_lambda_.10} parent=5 // pred_check
      %p125 = pneg %p124
    $region22: #{_lambda_.10} parent=5 // pred_check_branch
      %127 = sbr.rel (%p125) target = $region24
    $region23: #{_lambda_.10} parent=5 // pred_region
      // Predicated region
      $region25: #{_lambda_.10} parent=23 // pred_check
        %p128 = pneg %p29
      $region26: #{_lambda_.10} parent=23 // pred_check_branch
        %130 = sbr.rel (%p128) target = $region28
      $region27: #{_lambda_.10} parent=23 // pred_region
        %s131 = smul.u32 8, %s9
        %p132 = scmp.lt.s32.totalorder %s131, 15
        %s133 = scalar_select %p132, %s131, 15
        %s134 = smul.addr %s133, 8
        %s135 = scalar_lea.vmem %s0, %s134
        %s136 = smul.u32 8, %s9
      $region28: #{_lambda_.10} parent=23 // pred_fallthru
        _
    $region24: #{_lambda_.10} parent=5 // pred_fallthru
      _
    %p137 = scmp.le.s32.totalorder 1, %s9
    %p138 = scmp.lt.s32.totalorder %s9, 3
    %p139 = pnand %p137, %p138
    %p140 = pneg %p139
    // Predicated region
    $region29: #{_lambda_.10} parent=5 // pred_check
      _
    $region30: #{_lambda_.10} parent=5 // pred_check_branch
      %142 = sbr.rel (%p139) target = $region32
    $region31: #{_lambda_.10} parent=5 // pred_region
      %s143 = ssub.s32 %s9, 1
      %s144 = smul.u32 8, %s14
      %p145 = scmp.lt.s32.totalorder %s144, 15
      %s146 = scalar_select %p145, %s144, 15
      %s147 = smul.addr %s146, 8
      %s148 = scalar_lea.vmem %s0, %s147
      %p149 = pneg %p35
      %p150 = pneg %p32
      %p151 = pneg %p56
      %p152 = pneg %p53
      %p153 = pneg %p77
      %p154 = pneg %p74
      %p155 = pneg %p103
      %p156 = pneg %p100
      %s157 = smul.u32 8, %s14
      %p158 = scmp.lt.s32.totalorder %s157, 15
      %s159 = scalar_select %p158, %s157, 15
      %s160 = smul.addr %s159, 8
      %s161 = scalar_lea.vmem %s3, %s160
      %s162 = smul.u32 8, %s14
      %p163 = scmp.lt.s32.totalorder %s162, 15
      %s164 = scalar_select %p163, %s162, 15
      %s165 = smul.addr %s164, 8
      %s166 = scalar_lea.vmem %s0, %s165
      %s167 = smul.u32 8, %s14
      %s168 = smul.u32 8, %s14
      %p169 = scmp.lt.s32.totalorder %s168, 15
      %s170 = scalar_select %p169, %s168, 15
      %s171 = smul.addr %s170, 8
      %s172 = scalar_lea.vmem %s3, %s171
      %s173 = smul.u32 8, %s14
      %v175 = vld [vmem:[%s166] sm:$0xff]
      %v176 = vld [vmem:[%s166 + $0x8] sm:$0xff]
      %v177 = vld [vmem:[%s166 + $0x10] sm:$0xff]
      %v178 = vld [vmem:[%s166 + $0x18] sm:$0xff]
      %v179 = vld [vmem:[%s166 + $0x20] sm:$0xff]
      %v180 = vld [vmem:[%s166 + $0x28] sm:$0xff]
      %v181 = vld [vmem:[%s166 + $0x30] sm:$0xff]
      %v182 = vld [vmem:[%s166 + $0x38] sm:$0xff]
      %v183 = vpack.c.bf16 %v176, %v175
      %v184 = vpack.c.bf16 %v178, %v177
      %v185 = vpack.c.bf16 %v180, %v179
      %v186 = vpack.c.bf16 %v182, %v181
      %v187 = vld [vmem:[%s1] sm:$0xf]
      %v188 = vld [vmem:[%s1 + $0x4] sm:$0x3]
      %v189 = vld [vmem:[%s2] sm:$0x1]
      %v191 = vlaneseq
      %v192 = vshrl.u32 %v191, 7
      %v193 = vsub.s32 0, %v192
      %v194 = vrot.slane %v189, %v193
      %v198 = vunpack.c.l.b16 %v187
      %v199 = vunpack.c.l.b16 %v188
      %v200 = vpack.c.b16 %v199, %v198
      %vm201 = vcmask 97280
      %v203 = vsel %vm201, %v183, 0
      %v206 = vsel %vm201, %v184, 0
      %v209 = vsel %vm201, %v185, 0
      %v212 = vsel %vm201, %v186, 0
      %vm214 = vcmask 1045504
      %v216 = vsel %vm214, %v200, 0
      %218 = vmatprep.subr.bf16.mxu0 0
      %219 = vmatpush1.bf16.msra.mxu0 0
      %220 = vmatprep.subr.bf16.mxu0 0
      %221 = vmatpush1.bf16.msra.mxu0 0
      %222 = vmatprep.subr.bf16.mxu0 0
      %223 = vmatpush1.bf16.msra.mxu0 0
      %224 = vmatprep.subr.bf16.mxu0 0
      %225 = vmatpush1.bf16.msra.mxu0 0
      %226 = vmatprep.subr.bf16.mxu0 0
      %227 = vmatpush1.bf16.msra.mxu0 0
      %228 = vmatprep.subr.bf16.mxu0 0
      %229 = vmatpush1.bf16.msra.mxu0 0
      %230 = vmatprep.subr.bf16.mxu0 0
      %231 = vmatpush1.bf16.msra.mxu0 0
      %232 = vmatprep.subr.bf16.mxu0 0
      %233 = vmatpush1.bf16.msra.mxu0 %v216
      %234 = vmatprep.subr.bf16.mxu0 0
      %235 = vmatpush2.bf16.msra.mxu0 0
      %236 = vmatprep.subr.bf16.mxu0 0
      %237 = vmatpush2.bf16.msra.mxu0 0
      %238 = vmatprep.subr.bf16.mxu0 0
      %239 = vmatpush2.bf16.msra.mxu0 0
      %240 = vmatprep.subr.bf16.mxu0 0
      %241 = vmatpush2.bf16.msra.mxu0 0
      %242 = vmatprep.subr.bf16.mxu0 0
      %243 = vmatpush2.bf16.msra.mxu0 0
      %244 = vmatprep.subr.bf16.mxu0 0
      %245 = vmatpush2.bf16.msra.mxu0 0
      %246 = vmatprep.subr.bf16.mxu0 0
      %247 = vmatpush2.bf16.msra.mxu0 0
      %248 = vmatprep.subr.bf16.mxu0 0
      %249 = vmatpush2.bf16.msra.mxu0 0
      %250 = vmatprep.mubr.bf16.mxu0 0
      %251 = vmatmul.mubr.bf16.gmra.mxu0 %v203
      %v252 = vpop.f32.mrf.mxu0
      %v253 = vadd.f32 %v194, %v252
      %v254 = vpop.f32.mrf.mxu0
      %v255 = vpop.f32.mrf.mxu0
      %v256 = vadd.f32 %v194, %v255
      %v257 = vpop.f32.mrf.mxu0
      %258 = vmatprep.mubr.bf16.mxu0 0
      %259 = vmatmul.mubr.bf16.gmra.mxu0 %v206
      %v260 = vpop.f32.mrf.mxu0
      %v261 = vadd.f32 %v194, %v260
      %v262 = vpop.f32.mrf.mxu0
      %v263 = vpop.f32.mrf.mxu0
      %v264 = vadd.f32 %v194, %v263
      %v265 = vpop.f32.mrf.mxu0
      %266 = vmatprep.mubr.bf16.mxu0 0
      %267 = vmatmul.mubr.bf16.gmra.mxu0 %v209
      %v268 = vpop.f32.mrf.mxu0
      %v269 = vadd.f32 %v194, %v268
      %v270 = vpop.f32.mrf.mxu0
      %v271 = vpop.f32.mrf.mxu0
      %v272 = vadd.f32 %v194, %v271
      %v273 = vpop.f32.mrf.mxu0
      %274 = vmatprep.mubr.bf16.mxu0 0
      %275 = vmatmul.mubr.bf16.gmra.mxu0 %v212
      %v276 = vpop.f32.mrf.mxu0
      %v277 = vadd.f32 %v194, %v276
      %v278 = vpop.f32.mrf.mxu0
      %v279 = vpop.f32.mrf.mxu0
      %v280 = vadd.f32 %v194, %v279
      %v281 = vpop.f32.mrf.mxu0
      %282 = vdwg.mxu0
      %283 = vst [vmem:[%s172] sm:$0xff] %v253
      %284 = vst [vmem:[%s172 + $0x8] sm:$0xff] %v256
      %285 = vst [vmem:[%s172 + $0x10] sm:$0xff] %v261
      %286 = vst [vmem:[%s172 + $0x18] sm:$0xff] %v264
      %287 = vst [vmem:[%s172 + $0x20] sm:$0xff] %v269
      %288 = vst [vmem:[%s172 + $0x28] sm:$0xff] %v272
      %289 = vst [vmem:[%s172 + $0x30] sm:$0xff] %v277
      %290 = vst [vmem:[%s172 + $0x38] sm:$0xff] %v280
      %s291 = smul.u32 8, %s14
      %p292 = scmp.lt.s32.totalorder %s291, 15
      %s293 = scalar_select %p292, %s291, 15
      %s294 = smul.addr %s293, 8
      %s295 = scalar_lea.vmem %s3, %s294
      // Predicated region
      $region33: #{_lambda_.10} parent=31 // pred_check
        %p296 = pneg %p100
      $region34: #{_lambda_.10} parent=31 // pred_check_branch
        %298 = sbr.rel (%p296) target = $region36
      $region35: #{_lambda_.10} parent=31 // pred_region
        %s299 = smul.u32 8, %s14
      $region36: #{_lambda_.10} parent=31 // pred_fallthru
        _
    $region32: #{_lambda_.10} parent=5 // pred_fallthru
      _
    %p300 = scmp.le.s32.totalorder 2, %s9
    // Predicated region
    $region37: #{_lambda_.10} parent=5 // pred_check
      %p301 = pneg %p300
    $region38: #{_lambda_.10} parent=5 // pred_check_branch
      %303 = sbr.rel (%p301) target = $region40
    $region39: #{_lambda_.10} parent=5 // pred_region
      %s304 = ssub.s32 %s9, 2
      // Predicated region
      $region41: #{_lambda_.10} parent=39 // pred_check
        %p305 = pneg %p106
      $region42: #{_lambda_.10} parent=39 // pred_check_branch
        %307 = sbr.rel (%p305) target = $region44
      $region43: #{_lambda_.10} parent=39 // pred_region
        %s308 = smul.u32 8, %s15
        %p309 = scmp.lt.s32.totalorder %s308, 15
        %s310 = scalar_select %p309, %s308, 15
        %s311 = smul.addr %s310, 8
        %s312 = scalar_lea.vmem %s3, %s311
      $region44: #{_lambda_.10} parent=39 // pred_fallthru
        _
    $region40: #{_lambda_.10} parent=5 // pred_fallthru
      _
  $region6: #{_lambda_.10} parent=0 // loop_footer
    %s13 = sadd.s32 1, %s9
  $region7: #{_lambda_.10} parent=0 // loop_footer_branch
    %8 = sbr.rel target = $region3
  $region8: #{_lambda_.10} parent=0 // loop_exit
    _

// kernel: _lambda_.13
$region0: #{_lambda_.13}
  #allocation0 [shape = 'u32[]', space=smem, size = 0x4, offset = 0x4, fixed_abs, tag = 'smem constant byte address 0x4 - core index']
  #allocation1 [shape = 'u32[144,128]{1,0:T(1,128)}', space=vmem, size = 0x12000, scoped, tag = 'internal scratch']
  %s0 = inlined_call_operand.vmem [shape: f32[144,128], index: 0, kind: input, shape index: {}]
  %s1 = inlined_call_operand.vmem [shape: f32[144,128], index: 1, kind: input, shape index: {}]
  %s2 = inlined_call_operand.vmem [shape: bf16[128,128], index: 2, kind: input, shape index: {}]
  %s3 = inlined_call_operand.vmem [shape: f32[1,128], index: 3, kind: input, shape index: {}]
  %s4 = inlined_call_operand.vmem [shape: f32[144,128], index: 4, kind: output, shape index: {}]
  %s5 = sld [smem:[#allocation0]]
  $region49: #{_lambda_.13} parent=0
    _
  %s7 = ssub.s32 1, %s5
  %s8 = scalar_select 0, %s7, %s5
  loop: start=0, step=1, limit=4
  $region2: #{_lambda_.13} parent=0 // loop_pre_header
    _
  $region3: #{_lambda_.13} parent=0 // loop_header
    %s10 = sphi 0, %s14
    %p11 = scmp.ge.s32.totalorder %s10, 4
    %s20 = sphi 0, %s22
    %s23 = sphi 0, %s20
    %s24 = sphi 0, %s23
    %s40 = sphi 0, %s24
    %s46 = sphi 0, %s48
    %s49 = sphi 0, %s46
    %s50 = sphi 0, %s49
    %s66 = sphi 0, %s50
    %s70 = sphi 0, %s70
    %s72 = sphi 0, %s70
    %s73 = sphi 0, %s72
    %s87 = sphi 0, %s73
    %s91 = sphi 0, %s91
    %s93 = sphi 0, %s91
    %s94 = sphi 0, %s93
    %s108 = sphi 0, %s94
    %s114 = sphi 0, %s116
    %s117 = sphi 0, %s114
    %s118 = sphi 0, %s117
    %s134 = sphi 0, %s118
  $region4: #{_lambda_.13} parent=0 // loop_header_branch
    %13 = sbr.rel (%p11) target = $region8
  $region5: #{_lambda_.13} parent=0 // loop_body
    %s15 = ssub.s32 %s10, 1
    %s16 = ssub.s32 %s10, 2
    %s17 = sadd.s32 %s10, 1
    %s18 = ssub.s32 %s10, %s17
    %p19 = scmp.eq.s32.totalorder %s18, 0
    %s21 = sadd.s32 %s20, 1
    %s22 = scalar_select %p19, %s20, %s21
    %p25 = pneg %p19
    %p26 = scmp.eq.s32.totalorder %s10, 1
    %p27 = por %p25, %p26
    %p28 = scmp.ne.s32.totalorder %s20, %s23
    %p29 = scmp.eq.s32.totalorder %s10, 0
    %p30 = por %p28, %p29
    %p31 = scmp.ne.s32.totalorder %s20, %s23
    %p32 = scmp.eq.s32.totalorder %s15, 1
    %p33 = por %p31, %p32
    %p34 = scmp.ne.s32.totalorder %s23, %s24
    %p35 = scmp.eq.s32.totalorder %s15, 0
    %p36 = por %p34, %p35
    %p37 = scmp.ne.s32.totalorder %s23, %s24
    %p38 = scmp.eq.s32.totalorder %s16, 1
    %p39 = por %p37, %p38
    %p41 = scmp.ne.s32.totalorder %s24, %s40
    %p42 = scmp.eq.s32.totalorder %s16, 0
    %p43 = por %p41, %p42
    %s44 = ssub.s32 %s10, %s17
    %p45 = scmp.eq.s32.totalorder %s44, 0
    %s47 = sadd.s32 %s46, 1
    %s48 = scalar_select %p45, %s46, %s47
    %p51 = pneg %p45
    %p52 = scmp.eq.s32.totalorder %s10, 1
    %p53 = por %p51, %p52
    %p54 = scmp.ne.s32.totalorder %s46, %s49
    %p55 = scmp.eq.s32.totalorder %s10, 0
    %p56 = por %p54, %p55
    %p57 = scmp.ne.s32.totalorder %s46, %s49
    %p58 = scmp.eq.s32.totalorder %s15, 1
    %p59 = por %p57, %p58
    %p60 = scmp.ne.s32.totalorder %s49, %s50
    %p61 = scmp.eq.s32.totalorder %s15, 0
    %p62 = por %p60, %p61
    %p63 = scmp.ne.s32.totalorder %s49, %s50
    %p64 = scmp.eq.s32.totalorder %s16, 1
    %p65 = por %p63, %p64
    %p67 = scmp.ne.s32.totalorder %s50, %s66
    %p68 = scmp.eq.s32.totalorder %s16, 0
    %p69 = por %p67, %p68
    %s71 = sadd.s32 %s70, 1
    %p74 = scmp.eq.s32.totalorder %s10, 1
    %p75 = scmp.ne.s32.totalorder %s70, %s72
    %p76 = scmp.eq.s32.totalorder %s10, 0
    %p77 = por %p75, %p76
    %p78 = scmp.ne.s32.totalorder %s70, %s72
    %p79 = scmp.eq.s32.totalorder %s15, 1
    %p80 = por %p78, %p79
    %p81 = scmp.ne.s32.totalorder %s72, %s73
    %p82 = scmp.eq.s32.totalorder %s15, 0
    %p83 = por %p81, %p82
    %p84 = scmp.ne.s32.totalorder %s72, %s73
    %p85 = scmp.eq.s32.totalorder %s16, 1
    %p86 = por %p84, %p85
    %p88 = scmp.ne.s32.totalorder %s73, %s87
    %p89 = scmp.eq.s32.totalorder %s16, 0
    %p90 = por %p88, %p89
    %s92 = sadd.s32 %s91, 1
    %p95 = scmp.eq.s32.totalorder %s10, 1
    %p96 = scmp.ne.s32.totalorder %s91, %s93
    %p97 = scmp.eq.s32.totalorder %s10, 0
    %p98 = por %p96, %p97
    %p99 = scmp.ne.s32.totalorder %s91, %s93
    %p100 = scmp.eq.s32.totalorder %s15, 1
    %p101 = por %p99, %p100
    %p102 = scmp.ne.s32.totalorder %s93, %s94
    %p103 = scmp.eq.s32.totalorder %s15, 0
    %p104 = por %p102, %p103
    %p105 = scmp.ne.s32.totalorder %s93, %s94
    %p106 = scmp.eq.s32.totalorder %s16, 1
    %p107 = por %p105, %p106
    %p109 = scmp.ne.s32.totalorder %s94, %s108
    %p110 = scmp.eq.s32.totalorder %s16, 0
    %p111 = por %p109, %p110
    %s112 = ssub.s32 %s10, %s17
    %p113 = scmp.eq.s32.totalorder %s112, 0
    %s115 = sadd.s32 %s114, 1
    %s116 = scalar_select %p113, %s114, %s115
    %p119 = pneg %p113
    %p120 = scmp.eq.s32.totalorder %s10, 1
    %p121 = por %p119, %p120
    %p122 = scmp.ne.s32.totalorder %s114, %s117
    %p123 = scmp.eq.s32.totalorder %s10, 0
    %p124 = por %p122, %p123
    %p125 = scmp.ne.s32.totalorder %s114, %s117
    %p126 = scmp.eq.s32.totalorder %s15, 1
    %p127 = por %p125, %p126
    %p128 = scmp.ne.s32.totalorder %s117, %s118
    %p129 = scmp.eq.s32.totalorder %s15, 0
    %p130 = por %p128, %p129
    %p131 = scmp.ne.s32.totalorder %s117, %s118
    %p132 = scmp.eq.s32.totalorder %s16, 1
    %p133 = por %p131, %p132
    %p135 = scmp.ne.s32.totalorder %s118, %s134
    %p136 = scmp.eq.s32.totalorder %s16, 0
    %p137 = por %p135, %p136
    %p138 = scmp.le.s32.totalorder 1, %s10
    %p139 = scmp.lt.s32.totalorder %s10, 3
    %p140 = pnand %p138, %p139
    %p141 = pneg %p140
    // Predicated region
    $region9: #{_lambda_.13} parent=5 // pred_check
      _
    $region10: #{_lambda_.13} parent=5 // pred_check_branch
      %143 = sbr.rel (%p140) target = $region12
    $region11: #{_lambda_.13} parent=5 // pred_region
      %s144 = ssub.s32 %s10, 1
      // Predicated region
      $region13: #{_lambda_.13} parent=11 // pred_check
        %p145 = pneg %p83
      $region14: #{_lambda_.13} parent=11 // pred_check_branch
        %147 = sbr.rel (%p145) target = $region16
      $region15: #{_lambda_.13} parent=11 // pred_region
        _
      $region16: #{_lambda_.13} parent=11 // pred_fallthru
        _
      // Predicated region
      $region17: #{_lambda_.13} parent=11 // pred_check
        %p148 = pneg %p104
      $region18: #{_lambda_.13} parent=11 // pred_check_branch
        %150 = sbr.rel (%p148) target = $region20
      $region19: #{_lambda_.13} parent=11 // pred_region
        _
      $region20: #{_lambda_.13} parent=11 // pred_fallthru
        _
    $region12: #{_lambda_.13} parent=5 // pred_fallthru
      _
    %p151 = scmp.lt.s32.totalorder %s10, 2
    // Predicated region
    $region21: #{_lambda_.13} parent=5 // pred_check
      %p152 = pneg %p151
    $region22: #{_lambda_.13} parent=5 // pred_check_branch
      %154 = sbr.rel (%p152) target = $region24
    $region23: #{_lambda_.13} parent=5 // pred_region
      // Predicated region
      $region25: #{_lambda_.13} parent=23 // pred_check
        %p155 = pneg %p30
      $region26: #{_lambda_.13} parent=23 // pred_check_branch
        %157 = sbr.rel (%p155) target = $region28
      $region27: #{_lambda_.13} parent=23 // pred_region
        %s158 = smul.u32 9, %s10
        %p159 = scmp.lt.s32.totalorder %s158, 17
        %s160 = scalar_select %p159, %s158, 17
        %s161 = smul.addr %s160, 8
        %s162 = scalar_lea.vmem %s0, %s161
        %s163 = smul.u32 9, %s10
      $region28: #{_lambda_.13} parent=23 // pred_fallthru
        _
      // Predicated region
      $region29: #{_lambda_.13} parent=23 // pred_check
        %p164 = pneg %p56
      $region30: #{_lambda_.13} parent=23 // pred_check_branch
        %166 = sbr.rel (%p164) target = $region32
      $region31: #{_lambda_.13} parent=23 // pred_region
        %s167 = smul.u32 9, %s10
        %p168 = scmp.lt.s32.totalorder %s167, 17
        %s169 = scalar_select %p168, %s167, 17
        %s170 = smul.addr %s169, 8
        %s171 = scalar_lea.vmem %s1, %s170
        %s172 = smul.u32 9, %s10
      $region32: #{_lambda_.13} parent=23 // pred_fallthru
        _
    $region24: #{_lambda_.13} parent=5 // pred_fallthru
      _
    %p173 = scmp.le.s32.totalorder 1, %s10
    %p174 = scmp.lt.s32.totalorder %s10, 3
    %p175 = pnand %p173, %p174
    %p176 = pneg %p175
    // Predicated region
    $region33: #{_lambda_.13} parent=5 // pred_check
      _
    $region34: #{_lambda_.13} parent=5 // pred_check_branch
      %178 = sbr.rel (%p175) target = $region36
    $region35: #{_lambda_.13} parent=5 // pred_region
      %s179 = ssub.s32 %s10, 1
      %s180 = smul.u32 9, %s15
      %p181 = scmp.lt.s32.totalorder %s180, 17
      %s182 = scalar_select %p181, %s180, 17
      %s183 = smul.addr %s182, 8
      %s184 = scalar_lea.vmem %s0, %s183
      %p185 = pneg %p36
      %p186 = pneg %p33
      %s187 = smul.u32 9, %s15
      %p188 = scmp.lt.s32.totalorder %s187, 17
      %s189 = scalar_select %p188, %s187, 17
      %s190 = smul.addr %s189, 8
      %s191 = scalar_lea.vmem %s1, %s190
      %p192 = pneg %p62
      %p193 = pneg %p59
      %p194 = pneg %p83
      %p195 = pneg %p80
      %p196 = pneg %p104
      %p197 = pneg %p101
      %p198 = pneg %p130
      %p199 = pneg %p127
      %s200 = smul.u32 9, %s15
      %p201 = scmp.lt.s32.totalorder %s200, 17
      %s202 = scalar_select %p201, %s200, 17
      %s203 = smul.addr %s202, 8
      %s204 = scalar_lea.vmem %s4, %s203
      %s205 = smul.u32 9, %s15
      %p206 = scmp.lt.s32.totalorder %s205, 17
      %s207 = scalar_select %p206, %s205, 17
      %s208 = smul.addr %s207, 8
      %s209 = scalar_lea.vmem %s0, %s208
      %s210 = smul.u32 9, %s15
      %s211 = smul.u32 9, %s15
      %p212 = scmp.lt.s32.totalorder %s211, 17
      %s213 = scalar_select %p212, %s211, 17
      %s214 = smul.addr %s213, 8
      %s215 = scalar_lea.vmem %s1, %s214
      %s216 = smul.u32 9, %s15
      %s217 = smul.u32 9, %s15
      %p218 = scmp.lt.s32.totalorder %s217, 17
      %s219 = scalar_select %p218, %s217, 17
      %s220 = smul.addr %s219, 8
      %s221 = scalar_lea.vmem %s4, %s220
      %s222 = smul.u32 9, %s15
      %v224 = vld [vmem:[%s209] sm:$0xff]
      %v225 = vld [vmem:[%s209 + $0x8] sm:$0xff]
      %v226 = vld [vmem:[%s209 + $0x10] sm:$0xff]
      %v227 = vld [vmem:[%s209 + $0x18] sm:$0xff]
      %v228 = vld [vmem:[%s209 + $0x20] sm:$0xff]
      %v229 = vld [vmem:[%s209 + $0x28] sm:$0xff]
      %v230 = vld [vmem:[%s209 + $0x30] sm:$0xff]
      %v231 = vld [vmem:[%s209 + $0x38] sm:$0xff]
      %v232 = vld [vmem:[%s209 + $0x40] sm:$0xff]
      %v233 = vpack.c.bf16 %v225, %v224
      %v234 = vpack.c.bf16 %v227, %v226
      %v235 = vpack.c.bf16 %v229, %v228
      %v236 = vpack.c.bf16 %v231, %v230
      %v237 = vpack.c.bf16 %v232, %v232
      %v238 = vld [vmem:[%s2] sm:$0xf]
      %v239 = vld [vmem:[%s2 + $0x4] sm:$0xf]
      %v240 = vld [vmem:[%s2 + $0x8] sm:$0xf]
      %v241 = vld [vmem:[%s2 + $0xc] sm:$0xf]
      %v242 = vld [vmem:[%s2 + $0x10] sm:$0xf]
      %v243 = vld [vmem:[%s2 + $0x14] sm:$0xf]
      %v244 = vld [vmem:[%s2 + $0x18] sm:$0xf]
      %v245 = vld [vmem:[%s2 + $0x1c] sm:$0xf]
      %v246 = vld [vmem:[%s2 + $0x20] sm:$0xf]
      %v247 = vld [vmem:[%s2 + $0x24] sm:$0xf]
      %v248 = vld [vmem:[%s2 + $0x28] sm:$0xf]
      %v249 = vld [vmem:[%s2 + $0x2c] sm:$0xf]
      %v250 = vld [vmem:[%s2 + $0x30] sm:$0xf]
      %v251 = vld [vmem:[%s2 + $0x34] sm:$0xf]
      %v252 = vld [vmem:[%s2 + $0x38] sm:$0xf]
      %v253 = vld [vmem:[%s2 + $0x3c] sm:$0xf]
      %v270 = vunpack.c.l.b16 %v238
      %v271 = vunpack.c.l.b16 %v239
      %v272 = vunpack.c.l.b16 %v240
      %v273 = vunpack.c.l.b16 %v241
      %v274 = vunpack.c.l.b16 %v242
      %v275 = vunpack.c.l.b16 %v243
      %v276 = vunpack.c.l.b16 %v244
      %v277 = vunpack.c.l.b16 %v245
      %v278 = vunpack.c.l.b16 %v246
      %v279 = vunpack.c.l.b16 %v247
      %v280 = vunpack.c.l.b16 %v248
      %v281 = vunpack.c.l.b16 %v249
      %v282 = vunpack.c.l.b16 %v250
      %v283 = vunpack.c.l.b16 %v251
      %v284 = vunpack.c.l.b16 %v252
      %v285 = vunpack.c.l.b16 %v253
      %v286 = vpack.c.b16 %v271, %v270
      %v287 = vpack.c.b16 %v273, %v272
      %v288 = vpack.c.b16 %v275, %v274
      %v289 = vpack.c.b16 %v277, %v276
      %v290 = vpack.c.b16 %v279, %v278
      %v291 = vpack.c.b16 %v281, %v280
      %v292 = vpack.c.b16 %v283, %v282
      %v293 = vpack.c.b16 %v285, %v284
      %302 = vmatprep.subr.bf16.mxu0 0
      %303 = vmatpush1.bf16.msra.mxu0 %v293
      %304 = vmatprep.subr.bf16.mxu0 0
      %305 = vmatpush1.bf16.msra.mxu0 %v292
      %306 = vmatprep.subr.bf16.mxu0 0
      %307 = vmatpush1.bf16.msra.mxu0 %v291
      %308 = vmatprep.subr.bf16.mxu0 0
      %309 = vmatpush1.bf16.msra.mxu0 %v290
      %310 = vmatprep.subr.bf16.mxu0 0
      %311 = vmatpush1.bf16.msra.mxu0 %v289
      %312 = vmatprep.subr.bf16.mxu0 0
      %313 = vmatpush1.bf16.msra.mxu0 %v288
      %314 = vmatprep.subr.bf16.mxu0 0
      %315 = vmatpush1.bf16.msra.mxu0 %v287
      %316 = vmatprep.subr.bf16.mxu0 0
      %317 = vmatpush1.bf16.msra.mxu0 %v286
      %318 = vmatprep.subr.bf16.mxu0 0
      %319 = vmatpush2.bf16.msra.mxu0 0
      %320 = vmatprep.subr.bf16.mxu0 0
      %321 = vmatpush2.bf16.msra.mxu0 0
      %322 = vmatprep.subr.bf16.mxu0 0
      %323 = vmatpush2.bf16.msra.mxu0 0
      %324 = vmatprep.subr.bf16.mxu0 0
      %325 = vmatpush2.bf16.msra.mxu0 0
      %326 = vmatprep.subr.bf16.mxu0 0
      %327 = vmatpush2.bf16.msra.mxu0 0
      %328 = vmatprep.subr.bf16.mxu0 0
      %329 = vmatpush2.bf16.msra.mxu0 0
      %330 = vmatprep.subr.bf16.mxu0 0
      %331 = vmatpush2.bf16.msra.mxu0 0
      %332 = vmatprep.subr.bf16.mxu0 0
      %333 = vmatpush2.bf16.msra.mxu0 0
      %334 = vmatprep.mubr.bf16.mxu0 0
      %335 = vmatmul.mubr.bf16.gmra.mxu0 %v233
      %v336 = vpop.f32.mrf.mxu0
      %v337 = vadd.f32 0.0, %v336
      %v338 = vpop.f32.mrf.mxu0
      %v339 = vpop.f32.mrf.mxu0
      %v340 = vadd.f32 0.0, %v339
      %v341 = vpop.f32.mrf.mxu0
      %342 = vmatprep.mubr.bf16.mxu0 0
      %343 = vmatmul.mubr.bf16.gmra.mxu0 %v234
      %v344 = vpop.f32.mrf.mxu0
      %v345 = vadd.f32 0.0, %v344
      %v346 = vpop.f32.mrf.mxu0
      %v347 = vpop.f32.mrf.mxu0
      %v348 = vadd.f32 0.0, %v347
      %v349 = vpop.f32.mrf.mxu0
      %350 = vmatprep.mubr.bf16.mxu0 0
      %351 = vmatmul.mubr.bf16.gmra.mxu0 %v235
      %v352 = vpop.f32.mrf.mxu0
      %v353 = vadd.f32 0.0, %v352
      %v354 = vpop.f32.mrf.mxu0
      %v355 = vpop.f32.mrf.mxu0
      %v356 = vadd.f32 0.0, %v355
      %v357 = vpop.f32.mrf.mxu0
      %358 = vmatprep.mubr.bf16.mxu0 0
      %359 = vmatmul.mubr.bf16.gmra.mxu0 %v236
      %v360 = vpop.f32.mrf.mxu0
      %v361 = vadd.f32 0.0, %v360
      %v362 = vpop.f32.mrf.mxu0
      %v363 = vpop.f32.mrf.mxu0
      %v364 = vadd.f32 0.0, %v363
      %v365 = vpop.f32.mrf.mxu0
      %366 = vmatprep.mubr.bf16.mxu0 0
      %367 = vmatmul.mubr.bf16.gmra.mxu0 %v237
      %v368 = vpop.f32.mrf.mxu0
      %v369 = vadd.f32 0.0, %v368
      %v370 = vpop.f32.mrf.mxu0
      %v371 = vpop.f32.mrf.mxu0
      %v372 = vpop.f32.mrf.mxu0
      %373 = vdwg.mxu0
      %v374 = vld [vmem:[%s215] sm:$0xff]
      %v375 = vld [vmem:[%s215 + $0x8] sm:$0xff]
      %v376 = vld [vmem:[%s215 + $0x10] sm:$0xff]
      %v377 = vld [vmem:[%s215 + $0x18] sm:$0xff]
      %v378 = vld [vmem:[%s215 + $0x20] sm:$0xff]
      %v379 = vld [vmem:[%s215 + $0x28] sm:$0xff]
      %v380 = vld [vmem:[%s215 + $0x30] sm:$0xff]
      %v381 = vld [vmem:[%s215 + $0x38] sm:$0xff]
      %v382 = vld [vmem:[%s215 + $0x40] sm:$0xff]
      %v383 = vadd.f32 %v374, %v337
      %v384 = vadd.f32 %v375, %v340
      %v385 = vadd.f32 %v376, %v345
      %v386 = vadd.f32 %v377, %v348
      %v387 = vadd.f32 %v378, %v353
      %v388 = vadd.f32 %v379, %v356
      %v389 = vadd.f32 %v380, %v361
      %v390 = vadd.f32 %v381, %v364
      %v391 = vadd.f32 %v382, %v369
      %v392 = vld [vmem:[%s3] sm:$0x1]
      %v394 = vlaneseq
      %v395 = vshrl.u32 %v394, 7
      %v396 = vsub.s32 0, %v395
      %v397 = vrot.slane %v392, %v396
      %v399 = vadd.f32 %v383, %v397
      %v400 = vadd.f32 %v384, %v397
      %v401 = vadd.f32 %v385, %v397
      %v402 = vadd.f32 %v386, %v397
      %v403 = vadd.f32 %v387, %v397
      %v404 = vadd.f32 %v388, %v397
      %v405 = vadd.f32 %v389, %v397
      %v406 = vadd.f32 %v390, %v397
      %v407 = vadd.f32 %v391, %v397
      %408 = vst [vmem:[%s221] sm:$0xff] %v399
      %409 = vst [vmem:[%s221 + $0x8] sm:$0xff] %v400
      %410 = vst [vmem:[%s221 + $0x10] sm:$0xff] %v401
      %411 = vst [vmem:[%s221 + $0x18] sm:$0xff] %v402
      %412 = vst [vmem:[%s221 + $0x20] sm:$0xff] %v403
      %413 = vst [vmem:[%s221 + $0x28] sm:$0xff] %v404
      %414 = vst [vmem:[%s221 + $0x30] sm:$0xff] %v405
      %415 = vst [vmem:[%s221 + $0x38] sm:$0xff] %v406
      %416 = vst [vmem:[%s221 + $0x40] sm:$0xff] %v407
      %s417 = smul.u32 9, %s15
      %p418 = scmp.lt.s32.totalorder %s417, 17
      %s419 = scalar_select %p418, %s417, 17
      %s420 = smul.addr %s419, 8
      %s421 = scalar_lea.vmem %s4, %s420
      // Predicated region
      $region37: #{_lambda_.13} parent=35 // pred_check
        %p422 = pneg %p127
      $region38: #{_lambda_.13} parent=35 // pred_check_branch
        %424 = sbr.rel (%p422) target = $region40
      $region39: #{_lambda_.13} parent=35 // pred_region
        %s425 = smul.u32 9, %s15
      $region40: #{_lambda_.13} parent=35 // pred_fallthru
        _
    $region36: #{_lambda_.13} parent=5 // pred_fallthru
      _
    %p426 = scmp.le.s32.totalorder 2, %s10
    // Predicated region
    $region41: #{_lambda_.13} parent=5 // pred_check
      %p427 = pneg %p426
    $region42: #{_lambda_.13} parent=5 // pred_check_branch
      %429 = sbr.rel (%p427) target = $region44
    $region43: #{_lambda_.13} parent=5 // pred_region
      %s430 = ssub.s32 %s10, 2
      // Predicated region
      $region45: #{_lambda_.13} parent=43 // pred_check
        %p431 = pneg %p133
      $region46: #{_lambda_.13} parent=43 // pred_check_branch
        %433 = sbr.rel (%p431) target = $region48
      $region47: #{_lambda_.13} parent=43 // pred_region
        %s434 = smul.u32 9, %s16
        %p435 = scmp.lt.s32.totalorder %s434, 17
        %s436 = scalar_select %p435, %s434, 17
        %s437 = smul.addr %s436, 8
        %s438 = scalar_lea.vmem %s4, %s437
      $region48: #{_lambda_.13} parent=43 // pred_fallthru
        _
    $region44: #{_lambda_.13} parent=5 // pred_fallthru
      _
  $region6: #{_lambda_.13} parent=0 // loop_footer
    %s14 = sadd.s32 1, %s10
  $region7: #{_lambda_.13} parent=0 // loop_footer_branch
    %9 = sbr.rel target = $region3
  $region8: #{_lambda_.13} parent=0 // loop_exit
    _

// kernel: _lambda_.11
$region0: #{_lambda_.11}
  #allocation0 [shape = 'u32[]', space=smem, size = 0x4, offset = 0x4, fixed_abs, tag = 'smem constant byte address 0x4 - core index']
  #allocation1 [shape = 'u32[144,128]{1,0:T(1,128)}', space=vmem, size = 0x12000, scoped, tag = 'internal scratch']
  %s0 = inlined_call_operand.vmem [shape: f32[144,128], index: 0, kind: input, shape index: {}]
  %s1 = inlined_call_operand.vmem [shape: f32[1,128], index: 1, kind: input, shape index: {}]
  %s2 = inlined_call_operand.vmem [shape: f32[1,128], index: 2, kind: input, shape index: {}]
  %s3 = inlined_call_operand.vmem [shape: bf16[128,384], index: 3, kind: input, shape index: {}]
  %s4 = inlined_call_operand.vmem [shape: f32[1,384], index: 4, kind: input, shape index: {}]
  %s5 = inlined_call_operand.vmem [shape: f32[144,384], index: 5, kind: output, shape index: {}]
  %s6 = sld [smem:[#allocation0]]
  $region53: #{_lambda_.11} parent=0
    _
  %s8 = ssub.s32 1, %s6
  %s9 = scalar_select 0, %s8, %s6
  loop: start=0, step=1, limit=4
  $region2: #{_lambda_.11} parent=0 // loop_pre_header
    _
  $region3: #{_lambda_.11} parent=0 // loop_header
    %s11 = sphi 0, %s15
    %p12 = scmp.ge.s32.totalorder %s11, 4
    %s21 = sphi 0, %s23
    %s24 = sphi 0, %s21
    %s25 = sphi 0, %s24
    %s41 = sphi 0, %s25
    %s45 = sphi 0, %s45
    %s47 = sphi 0, %s45
    %s48 = sphi 0, %s47
    %s62 = sphi 0, %s48
    %s66 = sphi 0, %s66
    %s68 = sphi 0, %s66
    %s69 = sphi 0, %s68
    %s83 = sphi 0, %s69
    %s87 = sphi 0, %s87
    %s89 = sphi 0, %s87
    %s90 = sphi 0, %s89
    %s104 = sphi 0, %s90
    %s108 = sphi 0, %s108
    %s110 = sphi 0, %s108
    %s111 = sphi 0, %s110
    %s125 = sphi 0, %s111
    %s131 = sphi 0, %s133
    %s134 = sphi 0, %s131
    %s135 = sphi 0, %s134
    %s151 = sphi 0, %s135
  $region4: #{_lambda_.11} parent=0 // loop_header_branch
    %14 = sbr.rel (%p12) target = $region8
  $region5: #{_lambda_.11} parent=0 // loop_body
    %s16 = ssub.s32 %s11, 1
    %s17 = ssub.s32 %s11, 2
    %s18 = sadd.s32 %s11, 1
    %s19 = ssub.s32 %s11, %s18
    %p20 = scmp.eq.s32.totalorder %s19, 0
    %s22 = sadd.s32 %s21, 1
    %s23 = scalar_select %p20, %s21, %s22
    %p26 = pneg %p20
    %p27 = scmp.eq.s32.totalorder %s11, 1
    %p28 = por %p26, %p27
    %p29 = scmp.ne.s32.totalorder %s21, %s24
    %p30 = scmp.eq.s32.totalorder %s11, 0
    %p31 = por %p29, %p30
    %p32 = scmp.ne.s32.totalorder %s21, %s24
    %p33 = scmp.eq.s32.totalorder %s16, 1
    %p34 = por %p32, %p33
    %p35 = scmp.ne.s32.totalorder %s24, %s25
    %p36 = scmp.eq.s32.totalorder %s16, 0
    %p37 = por %p35, %p36
    %p38 = scmp.ne.s32.totalorder %s24, %s25
    %p39 = scmp.eq.s32.totalorder %s17, 1
    %p40 = por %p38, %p39
    %p42 = scmp.ne.s32.totalorder %s25, %s41
    %p43 = scmp.eq.s32.totalorder %s17, 0
    %p44 = por %p42, %p43
    %s46 = sadd.s32 %s45, 1
    %p49 = scmp.eq.s32.totalorder %s11, 1
    %p50 = scmp.ne.s32.totalorder %s45, %s47
    %p51 = scmp.eq.s32.totalorder %s11, 0
    %p52 = por %p50, %p51
    %p53 = scmp.ne.s32.totalorder %s45, %s47
    %p54 = scmp.eq.s32.totalorder %s16, 1
    %p55 = por %p53, %p54
    %p56 = scmp.ne.s32.totalorder %s47, %s48
    %p57 = scmp.eq.s32.totalorder %s16, 0
    %p58 = por %p56, %p57
    %p59 = scmp.ne.s32.totalorder %s47, %s48
    %p60 = scmp.eq.s32.totalorder %s17, 1
    %p61 = por %p59, %p60
    %p63 = scmp.ne.s32.totalorder %s48, %s62
    %p64 = scmp.eq.s32.totalorder %s17, 0
    %p65 = por %p63, %p64
    %s67 = sadd.s32 %s66, 1
    %p70 = scmp.eq.s32.totalorder %s11, 1
    %p71 = scmp.ne.s32.totalorder %s66, %s68
    %p72 = scmp.eq.s32.totalorder %s11, 0
    %p73 = por %p71, %p72
    %p74 = scmp.ne.s32.totalorder %s66, %s68
    %p75 = scmp.eq.s32.totalorder %s16, 1
    %p76 = por %p74, %p75
    %p77 = scmp.ne.s32.totalorder %s68, %s69
    %p78 = scmp.eq.s32.totalorder %s16, 0
    %p79 = por %p77, %p78
    %p80 = scmp.ne.s32.totalorder %s68, %s69
    %p81 = scmp.eq.s32.totalorder %s17, 1
    %p82 = por %p80, %p81
    %p84 = scmp.ne.s32.totalorder %s69, %s83
    %p85 = scmp.eq.s32.totalorder %s17, 0
    %p86 = por %p84, %p85
    %s88 = sadd.s32 %s87, 1
    %p91 = scmp.eq.s32.totalorder %s11, 1
    %p92 = scmp.ne.s32.totalorder %s87, %s89
    %p93 = scmp.eq.s32.totalorder %s11, 0
    %p94 = por %p92, %p93
    %p95 = scmp.ne.s32.totalorder %s87, %s89
    %p96 = scmp.eq.s32.totalorder %s16, 1
    %p97 = por %p95, %p96
    %p98 = scmp.ne.s32.totalorder %s89, %s90
    %p99 = scmp.eq.s32.totalorder %s16, 0
    %p100 = por %p98, %p99
    %p101 = scmp.ne.s32.totalorder %s89, %s90
    %p102 = scmp.eq.s32.totalorder %s17, 1
    %p103 = por %p101, %p102
    %p105 = scmp.ne.s32.totalorder %s90, %s104
    %p106 = scmp.eq.s32.totalorder %s17, 0
    %p107 = por %p105, %p106
    %s109 = sadd.s32 %s108, 1
    %p112 = scmp.eq.s32.totalorder %s11, 1
    %p113 = scmp.ne.s32.totalorder %s108, %s110
    %p114 = scmp.eq.s32.totalorder %s11, 0
    %p115 = por %p113, %p114
    %p116 = scmp.ne.s32.totalorder %s108, %s110
    %p117 = scmp.eq.s32.totalorder %s16, 1
    %p118 = por %p116, %p117
    %p119 = scmp.ne.s32.totalorder %s110, %s111
    %p120 = scmp.eq.s32.totalorder %s16, 0
    %p121 = por %p119, %p120
    %p122 = scmp.ne.s32.totalorder %s110, %s111
    %p123 = scmp.eq.s32.totalorder %s17, 1
    %p124 = por %p122, %p123
    %p126 = scmp.ne.s32.totalorder %s111, %s125
    %p127 = scmp.eq.s32.totalorder %s17, 0
    %p128 = por %p126, %p127
    %s129 = ssub.s32 %s11, %s18
    %p130 = scmp.eq.s32.totalorder %s129, 0
    %s132 = sadd.s32 %s131, 1
    %s133 = scalar_select %p130, %s131, %s132
    %p136 = pneg %p130
    %p137 = scmp.eq.s32.totalorder %s11, 1
    %p138 = por %p136, %p137
    %p139 = scmp.ne.s32.totalorder %s131, %s134
    %p140 = scmp.eq.s32.totalorder %s11, 0
    %p141 = por %p139, %p140
    %p142 = scmp.ne.s32.totalorder %s131, %s134
    %p143 = scmp.eq.s32.totalorder %s16, 1
    %p144 = por %p142, %p143
    %p145 = scmp.ne.s32.totalorder %s134, %s135
    %p146 = scmp.eq.s32.totalorder %s16, 0
    %p147 = por %p145, %p146
    %p148 = scmp.ne.s32.totalorder %s134, %s135
    %p149 = scmp.eq.s32.totalorder %s17, 1
    %p150 = por %p148, %p149
    %p152 = scmp.ne.s32.totalorder %s135, %s151
    %p153 = scmp.eq.s32.totalorder %s17, 0
    %p154 = por %p152, %p153
    %p155 = scmp.le.s32.totalorder 1, %s11
    %p156 = scmp.lt.s32.totalorder %s11, 3
    %p157 = pnand %p155, %p156
    %p158 = pneg %p157
    // Predicated region
    $region9: #{_lambda_.11} parent=5 // pred_check
      _
    $region10: #{_lambda_.11} parent=5 // pred_check_branch
      %160 = sbr.rel (%p157) target = $region12
    $region11: #{_lambda_.11} parent=5 // pred_region
      %s161 = ssub.s32 %s11, 1
      // Predicated region
      $region13: #{_lambda_.11} parent=11 // pred_check
        %p162 = pneg %p58
      $region14: #{_lambda_.11} parent=11 // pred_check_branch
        %164 = sbr.rel (%p162) target = $region16
      $region15: #{_lambda_.11} parent=11 // pred_region
        _
      $region16: #{_lambda_.11} parent=11 // pred_fallthru
        _
      // Predicated region
      $region17: #{_lambda_.11} parent=11 // pred_check
        %p165 = pneg %p79
      $region18: #{_lambda_.11} parent=11 // pred_check_branch
        %167 = sbr.rel (%p165) target = $region20
      $region19: #{_lambda_.11} parent=11 // pred_region
        _
      $region20: #{_lambda_.11} parent=11 // pred_fallthru
        _
      // Predicated region
      $region21: #{_lambda_.11} parent=11 // pred_check
        %p168 = pneg %p100
      $region22: #{_lambda_.11} parent=11 // pred_check_branch
        %170 = sbr.rel (%p168) target = $region24
      $region23: #{_lambda_.11} parent=11 // pred_region
        _
      $region24: #{_lambda_.11} parent=11 // pred_fallthru
        _
      // Predicated region
      $region25: #{_lambda_.11} parent=11 // pred_check
        %p171 = pneg %p121
      $region26: #{_lambda_.11} parent=11 // pred_check_branch
        %173 = sbr.rel (%p171) target = $region28
      $region27: #{_lambda_.11} parent=11 // pred_region
        _
      $region28: #{_lambda_.11} parent=11 // pred_fallthru
        _
    $region12: #{_lambda_.11} parent=5 // pred_fallthru
      _
    %p174 = scmp.lt.s32.totalorder %s11, 2
    // Predicated region
    $region29: #{_lambda_.11} parent=5 // pred_check
      %p175 = pneg %p174
    $region30: #{_lambda_.11} parent=5 // pred_check_branch
      %177 = sbr.rel (%p175) target = $region32
    $region31: #{_lambda_.11} parent=5 // pred_region
      // Predicated region
      $region33: #{_lambda_.11} parent=31 // pred_check
        %p178 = pneg %p31
      $region34: #{_lambda_.11} parent=31 // pred_check_branch
        %180 = sbr.rel (%p178) target = $region36
      $region35: #{_lambda_.11} parent=31 // pred_region
        %s181 = smul.u32 9, %s11
        %p182 = scmp.lt.s32.totalorder %s181, 17
        %s183 = scalar_select %p182, %s181, 17
        %s184 = smul.addr %s183, 8
        %s185 = scalar_lea.vmem %s0, %s184
        %s186 = smul.u32 9, %s11
      $region36: #{_lambda_.11} parent=31 // pred_fallthru
        _
    $region32: #{_lambda_.11} parent=5 // pred_fallthru
      _
    %p187 = scmp.le.s32.totalorder 1, %s11
    %p188 = scmp.lt.s32.totalorder %s11, 3
    %p189 = pnand %p187, %p188
    %p190 = pneg %p189
    // Predicated region
    $region37: #{_lambda_.11} parent=5 // pred_check
      _
    $region38: #{_lambda_.11} parent=5 // pred_check_branch
      %192 = sbr.rel (%p189) target = $region40
    $region39: #{_lambda_.11} parent=5 // pred_region
      %s193 = ssub.s32 %s11, 1
      %s194 = smul.u32 9, %s16
      %p195 = scmp.lt.s32.totalorder %s194, 17
      %s196 = scalar_select %p195, %s194, 17
      %s197 = smul.addr %s196, 8
      %s198 = scalar_lea.vmem %s0, %s197
      %p199 = pneg %p37
      %p200 = pneg %p34
      %p201 = pneg %p58
      %p202 = pneg %p55
      %p203 = pneg %p79
      %p204 = pneg %p76
      %p205 = pneg %p100
      %p206 = pneg %p97
      %p207 = pneg %p121
      %p208 = pneg %p118
      %p209 = pneg %p147
      %p210 = pneg %p144
      %s211 = smul.u32 9, %s16
      %p212 = scmp.lt.s32.totalorder %s211, 17
      %s213 = scalar_select %p212, %s211, 17
      %s214 = smul.addr %s213, 3
      %s215 = smul.addr %s214, 8
      %s216 = scalar_lea.vmem %s5, %s215
      %s217 = smul.u32 9, %s16
      %p218 = scmp.lt.s32.totalorder %s217, 17
      %s219 = scalar_select %p218, %s217, 17
      %s220 = smul.addr %s219, 8
      %s221 = scalar_lea.vmem %s0, %s220
      %s222 = smul.u32 9, %s16
      %s223 = smul.u32 9, %s16
      %p224 = scmp.lt.s32.totalorder %s223, 17
      %s225 = scalar_select %p224, %s223, 17
      %s226 = smul.addr %s225, 3
      %s227 = smul.addr %s226, 8
      %s228 = scalar_lea.vmem %s5, %s227
      %s229 = smul.u32 9, %s16
      %v231 = vld [vmem:[%s221] sm:$0xff]
      %v232 = vld [vmem:[%s221 + $0x8] sm:$0xff]
      %v233 = vld [vmem:[%s221 + $0x10] sm:$0xff]
      %v234 = vld [vmem:[%s221 + $0x18] sm:$0xff]
      %v235 = vld [vmem:[%s221 + $0x20] sm:$0xff]
      %v236 = vld [vmem:[%s221 + $0x28] sm:$0xff]
      %v237 = vld [vmem:[%s221 + $0x30] sm:$0xff]
      %v238 = vld [vmem:[%s221 + $0x38] sm:$0xff]
      %v239 = vld [vmem:[%s221 + $0x40] sm:$0xff]
      %v240 = vld [vmem:[%s1] sm:$0x1]
      %v241 = vld [vmem:[%s2] sm:$0x1]
      %242 = vadd.xlane.f32.xlu0 %v231
      %v243 = vpop.xlane.xlu0 %242
      %244 = vadd.xlane.f32.xlu0 %v232
      %v245 = vpop.xlane.xlu0 %244
      %246 = vadd.xlane.f32.xlu0 %v233
      %v247 = vpop.xlane.xlu0 %246
      %248 = vadd.xlane.f32.xlu0 %v234
      %v249 = vpop.xlane.xlu0 %248
      %250 = vadd.xlane.f32.xlu0 %v235
      %v251 = vpop.xlane.xlu0 %250
      %252 = vadd.xlane.f32.xlu0 %v236
      %v253 = vpop.xlane.xlu0 %252
      %254 = vadd.xlane.f32.xlu0 %v237
      %v255 = vpop.xlane.xlu0 %254
      %256 = vadd.xlane.f32.xlu0 %v238
      %v257 = vpop.xlane.xlu0 %256
      %258 = vadd.xlane.f32.xlu0 %v239
      %v259 = vpop.xlane.xlu0 %258
      %v260 = vrcp.pop 128.0
      %v261 = vmul.f32 %v243, %v260
      %v262 = vmul.f32 %v245, %v260
      %v263 = vmul.f32 %v247, %v260
      %v264 = vmul.f32 %v249, %v260
      %v265 = vmul.f32 %v251, %v260
      %v266 = vmul.f32 %v253, %v260
      %v267 = vmul.f32 %v255, %v260
      %v268 = vmul.f32 %v257, %v260
      %v269 = vmul.f32 %v259, %v260
      %v270 = vsub.f32 %v231, %v261
      %v271 = vsub.f32 %v232, %v262
      %v272 = vsub.f32 %v233, %v263
      %v273 = vsub.f32 %v234, %v264
      %v274 = vsub.f32 %v235, %v265
      %v275 = vsub.f32 %v236, %v266
      %v276 = vsub.f32 %v237, %v267
      %v277 = vsub.f32 %v238, %v268
      %v278 = vsub.f32 %v239, %v269
      %v279 = vmul.f32 %v270, %v270
      %v280 = vmul.f32 %v271, %v271
      %v281 = vmul.f32 %v272, %v272
      %v282 = vmul.f32 %v273, %v273
      %v283 = vmul.f32 %v274, %v274
      %v284 = vmul.f32 %v275, %v275
      %v285 = vmul.f32 %v276, %v276
      %v286 = vmul.f32 %v277, %v277
      %v287 = vmul.f32 %v278, %v278
      %288 = vadd.xlane.f32.xlu0 %v279
      %v289 = vpop.xlane.xlu0 %288
      %290 = vadd.xlane.f32.xlu0 %v280
      %v291 = vpop.xlane.xlu0 %290
      %292 = vadd.xlane.f32.xlu0 %v281
      %v293 = vpop.xlane.xlu0 %292
      %294 = vadd.xlane.f32.xlu0 %v282
      %v295 = vpop.xlane.xlu0 %294
      %296 = vadd.xlane.f32.xlu0 %v283
      %v297 = vpop.xlane.xlu0 %296
      %298 = vadd.xlane.f32.xlu0 %v284
      %v299 = vpop.xlane.xlu0 %298
      %300 = vadd.xlane.f32.xlu0 %v285
      %v301 = vpop.xlane.xlu0 %300
      %302 = vadd.xlane.f32.xlu0 %v286
      %v303 = vpop.xlane.xlu0 %302
      %304 = vadd.xlane.f32.xlu0 %v287
      %v305 = vpop.xlane.xlu0 %304
      %v306 = vmul.f32 %v289, %v260
      %v307 = vmul.f32 %v291, %v260
      %v308 = vmul.f32 %v293, %v260
      %v309 = vmul.f32 %v295, %v260
      %v310 = vmul.f32 %v297, %v260
      %v311 = vmul.f32 %v299, %v260
      %v312 = vmul.f32 %v301, %v260
      %v313 = vmul.f32 %v303, %v260
      %v314 = vmul.f32 %v305, %v260
      %v315 = vadd.f32 %v306, 1e-06
      %v316 = vadd.f32 %v307, 1e-06
      %v317 = vadd.f32 %v308, 1e-06
      %v318 = vadd.f32 %v309, 1e-06
      %v319 = vadd.f32 %v310, 1e-06
      %v320 = vadd.f32 %v311, 1e-06
      %v321 = vadd.f32 %v312, 1e-06
      %v322 = vadd.f32 %v313, 1e-06
      %v323 = vadd.f32 %v314, 1e-06
      %v324 = vrsqrt.pop %v315
      %v325 = vrsqrt.pop %v316
      %v326 = vrsqrt.pop %v317
      %v327 = vrsqrt.pop %v318
      %v328 = vrsqrt.pop %v319
      %v329 = vrsqrt.pop %v320
      %v330 = vrsqrt.pop %v321
      %v331 = vrsqrt.pop %v322
      %v332 = vrsqrt.pop %v323
      %v333 = vmul.f32 %v270, %v324
      %v334 = vmul.f32 %v271, %v325
      %v335 = vmul.f32 %v272, %v326
      %v336 = vmul.f32 %v273, %v327
      %v337 = vmul.f32 %v274, %v328
      %v338 = vmul.f32 %v275, %v329
      %v339 = vmul.f32 %v276, %v330
      %v340 = vmul.f32 %v277, %v331
      %v341 = vmul.f32 %v278, %v332
      %v343 = vlaneseq
      %v344 = vshrl.u32 %v343, 7
      %v345 = vsub.s32 0, %v344
      %v346 = vrot.slane %v240, %v345
      %v348 = vmul.f32 %v333, %v346
      %v349 = vmul.f32 %v334, %v346
      %v350 = vmul.f32 %v335, %v346
      %v351 = vmul.f32 %v336, %v346
      %v352 = vmul.f32 %v337, %v346
      %v353 = vmul.f32 %v338, %v346
      %v354 = vmul.f32 %v339, %v346
      %v355 = vmul.f32 %v340, %v346
      %v356 = vmul.f32 %v341, %v346
      %v358 = vlaneseq
      %v359 = vshrl.u32 %v358, 7
      %v360 = vsub.s32 0, %v359
      %v361 = vrot.slane %v241, %v360
      %v363 = vadd.f32 %v348, %v361
      %v364 = vadd.f32 %v349, %v361
      %v365 = vadd.f32 %v350, %v361
      %v366 = vadd.f32 %v351, %v361
      %v367 = vadd.f32 %v352, %v361
      %v368 = vadd.f32 %v353, %v361
      %v369 = vadd.f32 %v354, %v361
      %v370 = vadd.f32 %v355, %v361
      %v371 = vadd.f32 %v356, %v361
      %v372 = vpack.c.bf16 %v364, %v363
      %v373 = vpack.c.bf16 %v366, %v365
      %v374 = vpack.c.bf16 %v368, %v367
      %v375 = vpack.c.bf16 %v370, %v369
      %v376 = vpack.c.bf16 %v371, %v371
      %v377 = vld [vmem:[%s3] sm:$0xff]
      %v378 = vld [vmem:[%s3 + $0x8] sm:$0xf]
      %v379 = vld [vmem:[%s3 + $0xc] sm:$0xff]
      %v380 = vld [vmem:[%s3 + $0x14] sm:$0xf]
      %v381 = vld [vmem:[%s3 + $0x18] sm:$0xff]
      %v382 = vld [vmem:[%s3 + $0x20] sm:$0xf]
      %v383 = vld [vmem:[%s3 + $0x24] sm:$0xff]
      %v384 = vld [vmem:[%s3 + $0x2c] sm:$0xf]
      %v385 = vld [vmem:[%s3 + $0x30] sm:$0xff]
      %v386 = vld [vmem:[%s3 + $0x38] sm:$0xf]
      %v387 = vld [vmem:[%s3 + $0x3c] sm:$0xff]
      %v388 = vld [vmem:[%s3 + $0x44] sm:$0xf]
      %v389 = vld [vmem:[%s3 + $0x48] sm:$0xff]
      %v390 = vld [vmem:[%s3 + $0x50] sm:$0xf]
      %v391 = vld [vmem:[%s3 + $0x54] sm:$0xff]
      %v392 = vld [vmem:[%s3 + $0x5c] sm:$0xf]
      %v393 = vld [vmem:[%s3 + $0x60] sm:$0xff]
      %v394 = vld [vmem:[%s3 + $0x68] sm:$0xf]
      %v395 = vld [vmem:[%s3 + $0x6c] sm:$0xff]
      %v396 = vld [vmem:[%s3 + $0x74] sm:$0xf]
      %v397 = vld [vmem:[%s3 + $0x78] sm:$0xff]
      %v398 = vld [vmem:[%s3 + $0x80] sm:$0xf]
      %v399 = vld [vmem:[%s3 + $0x84] sm:$0xff]
      %v400 = vld [vmem:[%s3 + $0x8c] sm:$0xf]
      %v401 = vld [vmem:[%s3 + $0x90] sm:$0xff]
      %v402 = vld [vmem:[%s3 + $0x98] sm:$0xf]
      %v403 = vld [vmem:[%s3 + $0x9c] sm:$0xff]
      %v404 = vld [vmem:[%s3 + $0xa4] sm:$0xf]
      %v405 = vld [vmem:[%s3 + $0xa8] sm:$0xff]
      %v406 = vld [vmem:[%s3 + $0xb0] sm:$0xf]
      %v407 = vld [vmem:[%s3 + $0xb4] sm:$0xff]
      %v408 = vld [vmem:[%s3 + $0xbc] sm:$0xf]
      %v409 = vld [vmem:[%s4] sm:$0x7]
      %v411 = vlaneseq
      %v412 = vshrl.u32 %v411, 7
      %v413 = vsub.s32 0, %v412
      %v414 = vrot.slane %v409, %v413
      %v415 = vlaneseq
      %v416 = vshrl.u32 %v415, 7
      %v417 = vsub.s32 1, %v416
      %v418 = vrot.slane %v409, %v417
      %v419 = vlaneseq
      %v420 = vshrl.u32 %v419, 7
      %v421 = vsub.s32 2, %v420
      %v422 = vrot.slane %v409, %v421
      %v458 = vunpack.c.l.b16 %v377
      %v459 = vunpack.c.h.b16 %v377
      %v460 = vunpack.c.l.b16 %v378
      %v461 = vunpack.c.l.b16 %v379
      %v462 = vunpack.c.h.b16 %v379
      %v463 = vunpack.c.l.b16 %v380
      %v464 = vunpack.c.l.b16 %v381
      %v465 = vunpack.c.h.b16 %v381
      %v466 = vunpack.c.l.b16 %v382
      %v467 = vunpack.c.l.b16 %v383
      %v468 = vunpack.c.h.b16 %v383
      %v469 = vunpack.c.l.b16 %v384
      %v470 = vunpack.c.l.b16 %v385
      %v471 = vunpack.c.h.b16 %v385
      %v472 = vunpack.c.l.b16 %v386
      %v473 = vunpack.c.l.b16 %v387
      %v474 = vunpack.c.h.b16 %v387
      %v475 = vunpack.c.l.b16 %v388
      %v476 = vunpack.c.l.b16 %v389
      %v477 = vunpack.c.h.b16 %v389
      %v478 = vunpack.c.l.b16 %v390
      %v479 = vunpack.c.l.b16 %v391
      %v480 = vunpack.c.h.b16 %v391
      %v481 = vunpack.c.l.b16 %v392
      %v482 = vunpack.c.l.b16 %v393
      %v483 = vunpack.c.h.b16 %v393
      %v484 = vunpack.c.l.b16 %v394
      %v485 = vunpack.c.l.b16 %v395
      %v486 = vunpack.c.h.b16 %v395
      %v487 = vunpack.c.l.b16 %v396
      %v488 = vunpack.c.l.b16 %v397
      %v489 = vunpack.c.h.b16 %v397
      %v490 = vunpack.c.l.b16 %v398
      %v491 = vunpack.c.l.b16 %v399
      %v492 = vunpack.c.h.b16 %v399
      %v493 = vunpack.c.l.b16 %v400
      %v494 = vunpack.c.l.b16 %v401
      %v495 = vunpack.c.h.b16 %v401
      %v496 = vunpack.c.l.b16 %v402
      %v497 = vunpack.c.l.b16 %v403
      %v498 = vunpack.c.h.b16 %v403
      %v499 = vunpack.c.l.b16 %v404
      %v500 = vunpack.c.l.b16 %v405
      %v501 = vunpack.c.h.b16 %v405
      %v502 = vunpack.c.l.b16 %v406
      %v503 = vunpack.c.l.b16 %v407
      %v504 = vunpack.c.h.b16 %v407
      %v505 = vunpack.c.l.b16 %v408
      %v506 = vpack.c.b16 %v461, %v458
      %v507 = vpack.c.b16 %v462, %v459
      %v508 = vpack.c.b16 %v463, %v460
      %v509 = vpack.c.b16 %v467, %v464
      %v510 = vpack.c.b16 %v468, %v465
      %v511 = vpack.c.b16 %v469, %v466
      %v512 = vpack.c.b16 %v473, %v470
      %v513 = vpack.c.b16 %v474, %v471
      %v514 = vpack.c.b16 %v475, %v472
      %v515 = vpack.c.b16 %v479, %v476
      %v516 = vpack.c.b16 %v480, %v477
      %v517 = vpack.c.b16 %v481, %v478
      %v518 = vpack.c.b16 %v485, %v482
      %v519 = vpack.c.b16 %v486, %v483
      %v520 = vpack.c.b16 %v487, %v484
      %v521 = vpack.c.b16 %v491, %v488
      %v522 = vpack.c.b16 %v492, %v489
      %v523 = vpack.c.b16 %v493, %v490
      %v524 = vpack.c.b16 %v497, %v494
      %v525 = vpack.c.b16 %v498, %v495
      %v526 = vpack.c.b16 %v499, %v496
      %v527 = vpack.c.b16 %v503, %v500
      %v528 = vpack.c.b16 %v504, %v501
      %v529 = vpack.c.b16 %v505, %v502
      %554 = vmatprep.subr.bf16.mxu0 %v528
      %555 = vmatpush1.bf16.msra.mxu0 %v527
      %556 = vmatprep.subr.bf16.mxu0 %v525
      %557 = vmatpush1.bf16.msra.mxu0 %v524
      %558 = vmatprep.subr.bf16.mxu0 %v522
      %559 = vmatpush1.bf16.msra.mxu0 %v521
      %560 = vmatprep.subr.bf16.mxu0 %v519
      %561 = vmatpush1.bf16.msra.mxu0 %v518
      %562 = vmatprep.subr.bf16.mxu0 %v516
      %563 = vmatpush1.bf16.msra.mxu0 %v515
      %564 = vmatprep.subr.bf16.mxu0 %v513
      %565 = vmatpush1.bf16.msra.mxu0 %v512
      %566 = vmatprep.subr.bf16.mxu0 %v510
      %567 = vmatpush1.bf16.msra.mxu0 %v509
      %568 = vmatprep.subr.bf16.mxu0 %v507
      %569 = vmatpush1.bf16.msra.mxu0 %v506
      %570 = vmatprep.subr.bf16.mxu0 0
      %571 = vmatpush2.bf16.msra.mxu0 0
      %572 = vmatprep.subr.bf16.mxu0 0
      %573 = vmatpush2.bf16.msra.mxu0 0
      %574 = vmatprep.subr.bf16.mxu0 0
      %575 = vmatpush2.bf16.msra.mxu0 0
      %576 = vmatprep.subr.bf16.mxu0 0
      %577 = vmatpush2.bf16.msra.mxu0 0
      %578 = vmatprep.subr.bf16.mxu0 0
      %579 = vmatpush2.bf16.msra.mxu0 0
      %580 = vmatprep.subr.bf16.mxu0 0
      %581 = vmatpush2.bf16.msra.mxu0 0
      %582 = vmatprep.subr.bf16.mxu0 0
      %583 = vmatpush2.bf16.msra.mxu0 0
      %584 = vmatprep.subr.bf16.mxu0 0
      %585 = vmatpush2.bf16.msra.mxu0 0
      %586 = vmatprep.mubr.bf16.mxu0 0
      %587 = vmatmul.mubr.bf16.gmra.mxu0 %v372
      %v588 = vpop.f32.mrf.mxu0
      %v589 = vadd.f32 %v414, %v588
      %v590 = vpop.f32.mrf.mxu0
      %v591 = vadd.f32 %v418, %v590
      %v592 = vpop.f32.mrf.mxu0
      %v593 = vadd.f32 %v414, %v592
      %v594 = vpop.f32.mrf.mxu0
      %v595 = vadd.f32 %v418, %v594
      %596 = vmatprep.mubr.bf16.mxu0 0
      %597 = vmatmul.mubr.bf16.gmra.mxu0 %v373
      %v598 = vpop.f32.mrf.mxu0
      %v599 = vadd.f32 %v414, %v598
      %v600 = vpop.f32.mrf.mxu0
      %v601 = vadd.f32 %v418, %v600
      %v602 = vpop.f32.mrf.mxu0
      %v603 = vadd.f32 %v414, %v602
      %v604 = vpop.f32.mrf.mxu0
      %v605 = vadd.f32 %v418, %v604
      %606 = vmatprep.mubr.bf16.mxu0 0
      %607 = vmatmul.mubr.bf16.gmra.mxu0 %v374
      %v608 = vpop.f32.mrf.mxu0
      %v609 = vadd.f32 %v414, %v608
      %v610 = vpop.f32.mrf.mxu0
      %v611 = vadd.f32 %v418, %v610
      %v612 = vpop.f32.mrf.mxu0
      %v613 = vadd.f32 %v414, %v612
      %v614 = vpop.f32.mrf.mxu0
      %v615 = vadd.f32 %v418, %v614
      %616 = vmatprep.mubr.bf16.mxu0 0
      %617 = vmatmul.mubr.bf16.gmra.mxu0 %v375
      %v618 = vpop.f32.mrf.mxu0
      %v619 = vadd.f32 %v414, %v618
      %v620 = vpop.f32.mrf.mxu0
      %v621 = vadd.f32 %v418, %v620
      %v622 = vpop.f32.mrf.mxu0
      %v623 = vadd.f32 %v414, %v622
      %v624 = vpop.f32.mrf.mxu0
      %v625 = vadd.f32 %v418, %v624
      %626 = vmatprep.mubr.bf16.mxu0 0
      %627 = vmatmul.mubr.bf16.gmra.mxu0 %v376
      %v628 = vpop.f32.mrf.mxu0
      %v629 = vadd.f32 %v414, %v628
      %v630 = vpop.f32.mrf.mxu0
      %v631 = vadd.f32 %v418, %v630
      %v632 = vpop.f32.mrf.mxu0
      %v633 = vpop.f32.mrf.mxu0
      %634 = vdwg.mxu0
      %635 = vmatprep.subr.bf16.mxu0 0
      %636 = vmatpush1.bf16.msra.mxu0 %v529
      %637 = vmatprep.subr.bf16.mxu0 0
      %638 = vmatpush1.bf16.msra.mxu0 %v526
      %639 = vmatprep.subr.bf16.mxu0 0
      %640 = vmatpush1.bf16.msra.mxu0 %v523
      %641 = vmatprep.subr.bf16.mxu0 0
      %642 = vmatpush1.bf16.msra.mxu0 %v520
      %643 = vmatprep.subr.bf16.mxu0 0
      %644 = vmatpush1.bf16.msra.mxu0 %v517
      %645 = vmatprep.subr.bf16.mxu0 0
      %646 = vmatpush1.bf16.msra.mxu0 %v514
      %647 = vmatprep.subr.bf16.mxu0 0
      %648 = vmatpush1.bf16.msra.mxu0 %v511
      %649 = vmatprep.subr.bf16.mxu0 0
      %650 = vmatpush1.bf16.msra.mxu0 %v508
      %651 = vmatprep.subr.bf16.mxu0 0
      %652 = vmatpush2.bf16.msra.mxu0 0
      %653 = vmatprep.subr.bf16.mxu0 0
      %654 = vmatpush2.bf16.msra.mxu0 0
      %655 = vmatprep.subr.bf16.mxu0 0
      %656 = vmatpush2.bf16.msra.mxu0 0
      %657 = vmatprep.subr.bf16.mxu0 0
      %658 = vmatpush2.bf16.msra.mxu0 0
      %659 = vmatprep.subr.bf16.mxu0 0
      %660 = vmatpush2.bf16.msra.mxu0 0
      %661 = vmatprep.subr.bf16.mxu0 0
      %662 = vmatpush2.bf16.msra.mxu0 0
      %663 = vmatprep.subr.bf16.mxu0 0
      %664 = vmatpush2.bf16.msra.mxu0 0
      %665 = vmatprep.subr.bf16.mxu0 0
      %666 = vmatpush2.bf16.msra.mxu0 0
      %667 = vmatprep.mubr.bf16.mxu0 0
      %668 = vmatmul.mubr.bf16.gmra.mxu0 %v372
      %v669 = vpop.f32.mrf.mxu0
      %v670 = vadd.f32 %v422, %v669
      %v671 = vpop.f32.mrf.mxu0
      %v672 = vpop.f32.mrf.mxu0
      %v673 = vadd.f32 %v422, %v672
      %v674 = vpop.f32.mrf.mxu0
      %675 = vmatprep.mubr.bf16.mxu0 0
      %676 = vmatmul.mubr.bf16.gmra.mxu0 %v373
      %v677 = vpop.f32.mrf.mxu0
      %v678 = vadd.f32 %v422, %v677
      %v679 = vpop.f32.mrf.mxu0
      %v680 = vpop.f32.mrf.mxu0
      %v681 = vadd.f32 %v422, %v680
      %v682 = vpop.f32.mrf.mxu0
      %683 = vmatprep.mubr.bf16.mxu0 0
      %684 = vmatmul.mubr.bf16.gmra.mxu0 %v374
      %v685 = vpop.f32.mrf.mxu0
      %v686 = vadd.f32 %v422, %v685
      %v687 = vpop.f32.mrf.mxu0
      %v688 = vpop.f32.mrf.mxu0
      %v689 = vadd.f32 %v422, %v688
      %v690 = vpop.f32.mrf.mxu0
      %691 = vmatprep.mubr.bf16.mxu0 0
      %692 = vmatmul.mubr.bf16.gmra.mxu0 %v375
      %v693 = vpop.f32.mrf.mxu0
      %v694 = vadd.f32 %v422, %v693
      %v695 = vpop.f32.mrf.mxu0
      %v696 = vpop.f32.mrf.mxu0
      %v697 = vadd.f32 %v422, %v696
      %v698 = vpop.f32.mrf.mxu0
      %699 = vmatprep.mubr.bf16.mxu0 0
      %700 = vmatmul.mubr.bf16.gmra.mxu0 %v376
      %v701 = vpop.f32.mrf.mxu0
      %v702 = vadd.f32 %v422, %v701
      %v703 = vpop.f32.mrf.mxu0
      %v704 = vpop.f32.mrf.mxu0
      %v705 = vpop.f32.mrf.mxu0
      %706 = vdwg.mxu0
      %707 = vst [vmem:[%s228] sm:$0xff] %v589
      %708 = vst [vmem:[%s228 + $0x8] sm:$0xff] %v591
      %709 = vst [vmem:[%s228 + $0x10] sm:$0xff] %v670
      %710 = vst [vmem:[%s228 + $0x18] sm:$0xff] %v593
      %711 = vst [vmem:[%s228 + $0x20] sm:$0xff] %v595
      %712 = vst [vmem:[%s228 + $0x28] sm:$0xff] %v673
      %713 = vst [vmem:[%s228 + $0x30] sm:$0xff] %v599
      %714 = vst [vmem:[%s228 + $0x38] sm:$0xff] %v601
      %715 = vst [vmem:[%s228 + $0x40] sm:$0xff] %v678
      %716 = vst [vmem:[%s228 + $0x48] sm:$0xff] %v603
      %717 = vst [vmem:[%s228 + $0x50] sm:$0xff] %v605
      %718 = vst [vmem:[%s228 + $0x58] sm:$0xff] %v681
      %719 = vst [vmem:[%s228 + $0x60] sm:$0xff] %v609
      %720 = vst [vmem:[%s228 + $0x68] sm:$0xff] %v611
      %721 = vst [vmem:[%s228 + $0x70] sm:$0xff] %v686
      %722 = vst [vmem:[%s228 + $0x78] sm:$0xff] %v613
      %723 = vst [vmem:[%s228 + $0x80] sm:$0xff] %v615
      %724 = vst [vmem:[%s228 + $0x88] sm:$0xff] %v689
      %725 = vst [vmem:[%s228 + $0x90] sm:$0xff] %v619
      %726 = vst [vmem:[%s228 + $0x98] sm:$0xff] %v621
      %727 = vst [vmem:[%s228 + $0xa0] sm:$0xff] %v694
      %728 = vst [vmem:[%s228 + $0xa8] sm:$0xff] %v623
      %729 = vst [vmem:[%s228 + $0xb0] sm:$0xff] %v625
      %730 = vst [vmem:[%s228 + $0xb8] sm:$0xff] %v697
      %731 = vst [vmem:[%s228 + $0xc0] sm:$0xff] %v629
      %732 = vst [vmem:[%s228 + $0xc8] sm:$0xff] %v631
      %733 = vst [vmem:[%s228 + $0xd0] sm:$0xff] %v702
      %s734 = smul.u32 9, %s16
      %p735 = scmp.lt.s32.totalorder %s734, 17
      %s736 = scalar_select %p735, %s734, 17
      %s737 = smul.addr %s736, 3
      %s738 = smul.addr %s737, 8
      %s739 = scalar_lea.vmem %s5, %s738
      // Predicated region
      $region41: #{_lambda_.11} parent=39 // pred_check
        %p740 = pneg %p144
      $region42: #{_lambda_.11} parent=39 // pred_check_branch
        %742 = sbr.rel (%p740) target = $region44
      $region43: #{_lambda_.11} parent=39 // pred_region
        %s743 = smul.u32 9, %s16
      $region44: #{_lambda_.11} parent=39 // pred_fallthru
        _
    $region40: #{_lambda_.11} parent=5 // pred_fallthru
      _
    %p744 = scmp.le.s32.totalorder 2, %s11
    // Predicated region
    $region45: #{_lambda_.11} parent=5 // pred_check
      %p745 = pneg %p744
    $region46: #{_lambda_.11} parent=5 // pred_check_branch
      %747 = sbr.rel (%p745) target = $region48
    $region47: #{_lambda_.11} parent=5 // pred_region
      %s748 = ssub.s32 %s11, 2
      // Predicated region
      $region49: #{_lambda_.11} parent=47 // pred_check
        %p749 = pneg %p150
      $region50: #{_lambda_.11} parent=47 // pred_check_branch
        %751 = sbr.rel (%p749) target = $region52
      $region51: #{_lambda_.11} parent=47 // pred_region
        %s752 = smul.u32 9, %s17
        %p753 = scmp.lt.s32.totalorder %s752, 17
        %s754 = scalar_select %p753, %s752, 17
        %s755 = smul.addr %s754, 3
        %s756 = smul.addr %s755, 8
        %s757 = scalar_lea.vmem %s5, %s756
      $region52: #{_lambda_.11} parent=47 // pred_fallthru
        _
    $region48: #{_lambda_.11} parent=5 // pred_fallthru
      _
  $region6: #{_lambda_.11} parent=0 // loop_footer
    %s15 = sadd.s32 1, %s11
  $region7: #{_lambda_.11} parent=0 // loop_footer_branch
    %10 = sbr.rel target = $region3
  $region8: #{_lambda_.11} parent=0 // loop_exit
    _

// kernel: _lambda_.12
$region0: #{_lambda_.12}
  #allocation0 [shape = 'u32[]', space=smem, size = 0x4, offset = 0x4, fixed_abs, tag = 'smem constant byte address 0x4 - core index']
  #allocation1 [shape = 'u32[144,128]{1,0:T(1,128)}', space=vmem, size = 0x12000, scoped, tag = 'internal scratch']
  %s0 = inlined_call_operand.vmem [shape: f32[2,72,384], index: 0, kind: input, shape index: {}]
  %s1 = inlined_call_operand.vmem [shape: f32[2,72,128], index: 1, kind: output, shape index: {}]
  %s2 = sld [smem:[#allocation0]]
  $region37: #{_lambda_.12} parent=0
    _
  %s4 = ssub.s32 1, %s2
  %s5 = scalar_select 0, %s4, %s2
  loop: start=0, step=1, limit=4
  $region2: #{_lambda_.12} parent=0 // loop_pre_header
    _
  $region3: #{_lambda_.12} parent=0 // loop_header
    %s7 = sphi 0, %s11
    %p8 = scmp.ge.s32.totalorder %s7, 4
    %s17 = sphi 0, %s19
    %s20 = sphi 0, %s17
    %s21 = sphi 0, %s20
    %s37 = sphi 0, %s21
    %s43 = sphi 0, %s45
    %s46 = sphi 0, %s43
    %s47 = sphi 0, %s46
    %s63 = sphi 0, %s47
  $region4: #{_lambda_.12} parent=0 // loop_header_branch
    %10 = sbr.rel (%p8) target = $region8
  $region5: #{_lambda_.12} parent=0 // loop_body
    %s12 = ssub.s32 %s7, 1
    %s13 = ssub.s32 %s7, 2
    %s14 = sadd.s32 %s7, 1
    %s15 = ssub.s32 %s7, %s14
    %p16 = scmp.eq.s32.totalorder %s15, 0
    %s18 = sadd.s32 %s17, 1
    %s19 = scalar_select %p16, %s17, %s18
    %p22 = pneg %p16
    %p23 = scmp.eq.s32.totalorder %s7, 1
    %p24 = por %p22, %p23
    %p25 = scmp.ne.s32.totalorder %s17, %s20
    %p26 = scmp.eq.s32.totalorder %s7, 0
    %p27 = por %p25, %p26
    %p28 = scmp.ne.s32.totalorder %s17, %s20
    %p29 = scmp.eq.s32.totalorder %s12, 1
    %p30 = por %p28, %p29
    %p31 = scmp.ne.s32.totalorder %s20, %s21
    %p32 = scmp.eq.s32.totalorder %s12, 0
    %p33 = por %p31, %p32
    %p34 = scmp.ne.s32.totalorder %s20, %s21
    %p35 = scmp.eq.s32.totalorder %s13, 1
    %p36 = por %p34, %p35
    %p38 = scmp.ne.s32.totalorder %s21, %s37
    %p39 = scmp.eq.s32.totalorder %s13, 0
    %p40 = por %p38, %p39
    %s41 = ssub.s32 %s7, %s14
    %p42 = scmp.eq.s32.totalorder %s41, 0
    %s44 = sadd.s32 %s43, 1
    %s45 = scalar_select %p42, %s43, %s44
    %p48 = pneg %p42
    %p49 = scmp.eq.s32.totalorder %s7, 1
    %p50 = por %p48, %p49
    %p51 = scmp.ne.s32.totalorder %s43, %s46
    %p52 = scmp.eq.s32.totalorder %s7, 0
    %p53 = por %p51, %p52
    %p54 = scmp.ne.s32.totalorder %s43, %s46
    %p55 = scmp.eq.s32.totalorder %s12, 1
    %p56 = por %p54, %p55
    %p57 = scmp.ne.s32.totalorder %s46, %s47
    %p58 = scmp.eq.s32.totalorder %s12, 0
    %p59 = por %p57, %p58
    %p60 = scmp.ne.s32.totalorder %s46, %s47
    %p61 = scmp.eq.s32.totalorder %s13, 1
    %p62 = por %p60, %p61
    %p64 = scmp.ne.s32.totalorder %s47, %s63
    %p65 = scmp.eq.s32.totalorder %s13, 0
    %p66 = por %p64, %p65
    %p67 = scmp.le.s32.totalorder 1, %s7
    %p68 = scmp.lt.s32.totalorder %s7, 3
    %p69 = pnand %p67, %p68
    %p70 = pneg %p69
    // Predicated region
    $region9: #{_lambda_.12} parent=5 // pred_check
      _
    $region10: #{_lambda_.12} parent=5 // pred_check_branch
      %72 = sbr.rel (%p69) target = $region12
    $region11: #{_lambda_.12} parent=5 // pred_region
      %s73 = ssub.s32 %s7, 1
    $region12: #{_lambda_.12} parent=5 // pred_fallthru
      _
    %p74 = scmp.lt.s32.totalorder %s7, 2
    // Predicated region
    $region13: #{_lambda_.12} parent=5 // pred_check
      %p75 = pneg %p74
    $region14: #{_lambda_.12} parent=5 // pred_check_branch
      %77 = sbr.rel (%p75) target = $region16
    $region15: #{_lambda_.12} parent=5 // pred_region
      // Predicated region
      $region17: #{_lambda_.12} parent=15 // pred_check
        %p78 = pneg %p27
      $region18: #{_lambda_.12} parent=15 // pred_check_branch
        %80 = sbr.rel (%p78) target = $region20
      $region19: #{_lambda_.12} parent=15 // pred_region
        %p81 = scmp.lt.s32.totalorder %s7, 1
        %s82 = scalar_select %p81, %s7, 1
        %s83 = smul.addr %s82, 27
        %s84 = smul.addr %s83, 8
        %s85 = scalar_lea.vmem %s0, %s84
      $region20: #{_lambda_.12} parent=15 // pred_fallthru
        _
    $region16: #{_lambda_.12} parent=5 // pred_fallthru
      _
    %p86 = scmp.le.s32.totalorder 1, %s7
    %p87 = scmp.lt.s32.totalorder %s7, 3
    %p88 = pnand %p86, %p87
    %p89 = pneg %p88
    // Predicated region
    $region21: #{_lambda_.12} parent=5 // pred_check
      _
    $region22: #{_lambda_.12} parent=5 // pred_check_branch
      %91 = sbr.rel (%p88) target = $region24
    $region23: #{_lambda_.12} parent=5 // pred_region
      %s92 = ssub.s32 %s7, 1
      %p93 = scmp.lt.s32.totalorder %s12, 1
      %s94 = scalar_select %p93, %s12, 1
      %s95 = smul.addr %s94, 27
      %s96 = smul.addr %s95, 8
      %s97 = scalar_lea.vmem %s0, %s96
      %p98 = pneg %p33
      %p99 = pneg %p30
      %p100 = pneg %p59
      %p101 = pneg %p56
      %p102 = scmp.lt.s32.totalorder %s12, 1
      %s103 = scalar_select %p102, %s12, 1
      %s104 = smul.addr %s103, 9
      %s105 = smul.addr %s104, 8
      %s106 = scalar_lea.vmem %s1, %s105
      %p107 = scmp.lt.s32.totalorder %s12, 1
      %s108 = scalar_select %p107, %s12, 1
      %s109 = smul.addr %s108, 27
      %s110 = smul.addr %s109, 8
      %s111 = scalar_lea.vmem %s0, %s110
      %p112 = scmp.lt.s32.totalorder %s12, 1
      %s113 = scalar_select %p112, %s12, 1
      %s114 = smul.addr %s113, 9
      %s115 = smul.addr %s114, 8
      %s116 = scalar_lea.vmem %s1, %s115
      %v118 = vld [vmem:[%s111] sm:$0xff]
      %v119 = vld [vmem:[%s111 + $0x8] sm:$0xff]
      %v120 = vld [vmem:[%s111 + $0x10] sm:$0xff]
      %v121 = vld [vmem:[%s111 + $0x18] sm:$0xff]
      %v122 = vld [vmem:[%s111 + $0x20] sm:$0xff]
      %v123 = vld [vmem:[%s111 + $0x28] sm:$0xff]
      %v124 = vld [vmem:[%s111 + $0x30] sm:$0xff]
      %v125 = vld [vmem:[%s111 + $0x38] sm:$0xff]
      %v126 = vld [vmem:[%s111 + $0x40] sm:$0xff]
      %v127 = vld [vmem:[%s111 + $0x48] sm:$0xff]
      %v128 = vld [vmem:[%s111 + $0x50] sm:$0xff]
      %v129 = vld [vmem:[%s111 + $0x58] sm:$0xff]
      %v130 = vld [vmem:[%s111 + $0x60] sm:$0xff]
      %v131 = vld [vmem:[%s111 + $0x68] sm:$0xff]
      %v132 = vld [vmem:[%s111 + $0x70] sm:$0xff]
      %v133 = vld [vmem:[%s111 + $0x78] sm:$0xff]
      %v134 = vld [vmem:[%s111 + $0x80] sm:$0xff]
      %v135 = vld [vmem:[%s111 + $0x88] sm:$0xff]
      %v136 = vld [vmem:[%s111 + $0x90] sm:$0xff]
      %v137 = vld [vmem:[%s111 + $0x98] sm:$0xff]
      %v138 = vld [vmem:[%s111 + $0xa0] sm:$0xff]
      %v139 = vld [vmem:[%s111 + $0xa8] sm:$0xff]
      %v140 = vld [vmem:[%s111 + $0xb0] sm:$0xff]
      %v141 = vld [vmem:[%s111 + $0xb8] sm:$0xff]
      %v142 = vld [vmem:[%s111 + $0xc0] sm:$0xff]
      %v143 = vld [vmem:[%s111 + $0xc8] sm:$0xff]
      %v144 = vld [vmem:[%s111 + $0xd0] sm:$0xff]
      %v145 = vlaneseq
      %v146 = vand.u32 %v145, 127
      %vm147 = vcmp.lt.s32.totalorder %v146, 65
      %v148 = vsel %vm147, 0.0, -1e+30
      %v149 = vpack.c.bf16 %v121, %v118
      %v150 = vpack.c.bf16 %v127, %v124
      %v151 = vpack.c.bf16 %v133, %v130
      %v152 = vpack.c.bf16 %v139, %v136
      %v153 = vpack.c.bf16 %v142, %v142
      %v154 = vpack.c.bf16 %v122, %v119
      %v155 = vpack.c.bf16 %v128, %v125
      %v156 = vpack.c.bf16 %v134, %v131
      %v157 = vpack.c.bf16 %v140, %v137
      %v158 = vpack.c.bf16 %v143, %v143
      %v159 = vpack.c.bf16 %v123, %v120
      %v160 = vpack.c.bf16 %v129, %v126
      %v161 = vpack.c.bf16 %v135, %v132
      %v162 = vpack.c.bf16 %v141, %v138
      %v163 = vpack.c.bf16 %v144, %v144
      %vm164 = vcmask 261120
      %v166 = vsel %vm164, %v149, 0
      %v169 = vsel %vm164, %v150, 0
      %v172 = vsel %vm164, %v151, 0
      %v175 = vsel %vm164, %v152, 0
      %v178 = vsel %vm164, %v153, 0
      %v181 = vsel %vm164, %v154, 0
      %v184 = vsel %vm164, %v155, 0
      %v187 = vsel %vm164, %v156, 0
      %v190 = vsel %vm164, %v157, 0
      %v193 = vsel %vm164, %v158, 0
      %195 = vmatprep.subr.bf16.mxu0 0
      %196 = vmatpush1.bf16.xpose.msra.mxu0 0
      %197 = vmatprep.subr.bf16.mxu0 0
      %198 = vmatpush1.bf16.xpose.msra.mxu0 0
      %199 = vmatprep.subr.bf16.mxu0 0
      %200 = vmatpush1.bf16.xpose.msra.mxu0 0
      %201 = vmatprep.subr.bf16.mxu0 0
      %202 = vmatpush1.bf16.xpose.msra.mxu0 %v193
      %203 = vmatprep.subr.bf16.mxu0 0
      %204 = vmatpush1.bf16.xpose.msra.mxu0 %v190
      %205 = vmatprep.subr.bf16.mxu0 0
      %206 = vmatpush1.bf16.xpose.msra.mxu0 %v187
      %207 = vmatprep.subr.bf16.mxu0 0
      %208 = vmatpush1.bf16.xpose.msra.mxu0 %v184
      %209 = vmatprep.subr.bf16.mxu0 0
      %210 = vmatpush1.bf16.xpose.msra.mxu0 %v181
      %211 = vmatprep.subr.bf16.mxu0 0
      %212 = vmatpush2.bf16.xpose.msra.mxu0 0
      %213 = vmatprep.subr.bf16.mxu0 0
      %214 = vmatpush2.bf16.xpose.msra.mxu0 0
      %215 = vmatprep.subr.bf16.mxu0 0
      %216 = vmatpush2.bf16.xpose.msra.mxu0 0
      %217 = vmatprep.subr.bf16.mxu0 0
      %218 = vmatpush2.bf16.xpose.msra.mxu0 0
      %219 = vmatprep.subr.bf16.mxu0 0
      %220 = vmatpush2.bf16.xpose.msra.mxu0 0
      %221 = vmatprep.subr.bf16.mxu0 0
      %222 = vmatpush2.bf16.xpose.msra.mxu0 0
      %223 = vmatprep.subr.bf16.mxu0 0
      %224 = vmatpush2.bf16.xpose.msra.mxu0 0
      %225 = vmatprep.subr.bf16.mxu0 0
      %226 = vmatpush2.bf16.xpose.msra.mxu0 0
      %227 = vmatprep.mubr.bf16.mxu0 0
      %228 = vmatmul.mubr.bf16.gmra.mxu0 %v166
      %v229 = vpop.f32.mrf.mxu0
      %v230 = vadd.f32 0.0, %v229
      %v231 = vpop.f32.mrf.mxu0
      %v232 = vpop.f32.mrf.mxu0
      %v233 = vadd.f32 0.0, %v232
      %v234 = vpop.f32.mrf.mxu0
      %235 = vmatprep.mubr.bf16.mxu0 0
      %236 = vmatmul.mubr.bf16.gmra.mxu0 %v169
      %v237 = vpop.f32.mrf.mxu0
      %v238 = vadd.f32 0.0, %v237
      %v239 = vpop.f32.mrf.mxu0
      %v240 = vpop.f32.mrf.mxu0
      %v241 = vadd.f32 0.0, %v240
      %v242 = vpop.f32.mrf.mxu0
      %243 = vmatprep.mubr.bf16.mxu0 0
      %244 = vmatmul.mubr.bf16.gmra.mxu0 %v172
      %v245 = vpop.f32.mrf.mxu0
      %v246 = vadd.f32 0.0, %v245
      %v247 = vpop.f32.mrf.mxu0
      %v248 = vpop.f32.mrf.mxu0
      %v249 = vadd.f32 0.0, %v248
      %v250 = vpop.f32.mrf.mxu0
      %251 = vmatprep.mubr.bf16.mxu0 0
      %252 = vmatmul.mubr.bf16.gmra.mxu0 %v175
      %v253 = vpop.f32.mrf.mxu0
      %v254 = vadd.f32 0.0, %v253
      %v255 = vpop.f32.mrf.mxu0
      %v256 = vpop.f32.mrf.mxu0
      %v257 = vadd.f32 0.0, %v256
      %v258 = vpop.f32.mrf.mxu0
      %259 = vmatprep.mubr.bf16.mxu0 0
      %260 = vmatmul.mubr.bf16.gmra.mxu0 %v178
      %v261 = vpop.f32.mrf.mxu0
      %v262 = vadd.f32 0.0, %v261
      %v263 = vpop.f32.mrf.mxu0
      %v264 = vpop.f32.mrf.mxu0
      %v265 = vpop.f32.mrf.mxu0
      %266 = vdwg.mxu0
      %v267 = vmul.f32 %v230, 0.17677669
      %v268 = vmul.f32 %v233, 0.17677669
      %v269 = vmul.f32 %v238, 0.17677669
      %v270 = vmul.f32 %v241, 0.17677669
      %v271 = vmul.f32 %v246, 0.17677669
      %v272 = vmul.f32 %v249, 0.17677669
      %v273 = vmul.f32 %v254, 0.17677669
      %v274 = vmul.f32 %v257, 0.17677669
      %v275 = vmul.f32 %v262, 0.17677669
      %v276 = vadd.f32 %v267, %v148
      %v277 = vadd.f32 %v268, %v148
      %v278 = vadd.f32 %v269, %v148
      %v279 = vadd.f32 %v270, %v148
      %v280 = vadd.f32 %v271, %v148
      %v281 = vadd.f32 %v272, %v148
      %v282 = vadd.f32 %v273, %v148
      %v283 = vadd.f32 %v274, %v148
      %v284 = vadd.f32 %v275, %v148
      %vm285 = vcmask 588800
      %v286 = vsel %vm285, %v276, -inf
      %287 = vmax.xlane.f32.xlu0 %v286
      %v288 = vpop.xlane.xlu0 %287
      %v289 = vsel %vm285, %v277, -inf
      %290 = vmax.xlane.f32.xlu0 %v289
      %v291 = vpop.xlane.xlu0 %290
      %v292 = vsel %vm285, %v278, -inf
      %293 = vmax.xlane.f32.xlu0 %v292
      %v294 = vpop.xlane.xlu0 %293
      %v295 = vsel %vm285, %v279, -inf
      %296 = vmax.xlane.f32.xlu0 %v295
      %v297 = vpop.xlane.xlu0 %296
      %v298 = vsel %vm285, %v280, -inf
      %299 = vmax.xlane.f32.xlu0 %v298
      %v300 = vpop.xlane.xlu0 %299
      %v301 = vsel %vm285, %v281, -inf
      %302 = vmax.xlane.f32.xlu0 %v301
      %v303 = vpop.xlane.xlu0 %302
      %v304 = vsel %vm285, %v282, -inf
      %305 = vmax.xlane.f32.xlu0 %v304
      %v306 = vpop.xlane.xlu0 %305
      %v307 = vsel %vm285, %v283, -inf
      %308 = vmax.xlane.f32.xlu0 %v307
      %v309 = vpop.xlane.xlu0 %308
      %v310 = vsel %vm285, %v284, -inf
      %311 = vmax.xlane.f32.xlu0 %v310
      %v312 = vpop.xlane.xlu0 %311
      %v313 = vsub.f32 %v276, %v288
      %v314 = vsub.f32 %v277, %v291
      %v315 = vsub.f32 %v278, %v294
      %v316 = vsub.f32 %v279, %v297
      %v317 = vsub.f32 %v280, %v300
      %v318 = vsub.f32 %v281, %v303
      %v319 = vsub.f32 %v282, %v306
      %v320 = vsub.f32 %v283, %v309
      %v321 = vsub.f32 %v284, %v312
      %v322 = vmul.f32 %v313, 1.442695
      %v323 = vpow.pop %v322
      %v324 = vmul.f32 %v314, 1.442695
      %v325 = vpow.pop %v324
      %v326 = vmul.f32 %v315, 1.442695
      %v327 = vpow.pop %v326
      %v328 = vmul.f32 %v316, 1.442695
      %v329 = vpow.pop %v328
      %v330 = vmul.f32 %v317, 1.442695
      %v331 = vpow.pop %v330
      %v332 = vmul.f32 %v318, 1.442695
      %v333 = vpow.pop %v332
      %v334 = vmul.f32 %v319, 1.442695
      %v335 = vpow.pop %v334
      %v336 = vmul.f32 %v320, 1.442695
      %v337 = vpow.pop %v336
      %v338 = vmul.f32 %v321, 1.442695
      %v339 = vpow.pop %v338
      %v340 = vsel %vm285, %v323, 0.0
      %341 = vadd.xlane.f32.xlu0 %v340
      %v342 = vpop.xlane.xlu0 %341
      %v343 = vsel %vm285, %v325, 0.0
      %344 = vadd.xlane.f32.xlu0 %v343
      %v345 = vpop.xlane.xlu0 %344
      %v346 = vsel %vm285, %v327, 0.0
      %347 = vadd.xlane.f32.xlu0 %v346
      %v348 = vpop.xlane.xlu0 %347
      %v349 = vsel %vm285, %v329, 0.0
      %350 = vadd.xlane.f32.xlu0 %v349
      %v351 = vpop.xlane.xlu0 %350
      %v352 = vsel %vm285, %v331, 0.0
      %353 = vadd.xlane.f32.xlu0 %v352
      %v354 = vpop.xlane.xlu0 %353
      %v355 = vsel %vm285, %v333, 0.0
      %356 = vadd.xlane.f32.xlu0 %v355
      %v357 = vpop.xlane.xlu0 %356
      %v358 = vsel %vm285, %v335, 0.0
      %359 = vadd.xlane.f32.xlu0 %v358
      %v360 = vpop.xlane.xlu0 %359
      %v361 = vsel %vm285, %v337, 0.0
      %362 = vadd.xlane.f32.xlu0 %v361
      %v363 = vpop.xlane.xlu0 %362
      %v364 = vsel %vm285, %v339, 0.0
      %365 = vadd.xlane.f32.xlu0 %v364
      %v366 = vpop.xlane.xlu0 %365
      %v367 = vrcp.pop %v342
      %v368 = vrcp.pop %v345
      %v369 = vrcp.pop %v348
      %v370 = vrcp.pop %v351
      %v371 = vrcp.pop %v354
      %v372 = vrcp.pop %v357
      %v373 = vrcp.pop %v360
      %v374 = vrcp.pop %v363
      %v375 = vrcp.pop %v366
      %v376 = vmul.f32 %v323, %v367
      %v377 = vmul.f32 %v325, %v368
      %v378 = vmul.f32 %v327, %v369
      %v379 = vmul.f32 %v329, %v370
      %v380 = vmul.f32 %v331, %v371
      %v381 = vmul.f32 %v333, %v372
      %v382 = vmul.f32 %v335, %v373
      %v383 = vmul.f32 %v337, %v374
      %v384 = vmul.f32 %v339, %v375
      %v385 = vpack.c.bf16 %v377, %v376
      %v386 = vpack.c.bf16 %v379, %v378
      %v387 = vpack.c.bf16 %v381, %v380
      %v388 = vpack.c.bf16 %v383, %v382
      %v389 = vpack.c.bf16 %v384, %v384
      %v391 = vsel %vm285, %v385, 0
      %v394 = vsel %vm285, %v386, 0
      %v397 = vsel %vm285, %v387, 0
      %v400 = vsel %vm285, %v388, 0
      %v403 = vsel %vm285, %v389, 0
      %vm405 = vcmask 1043456
      %v407 = vsel %vm405, %v163, 0
      %409 = vmatprep.subr.bf16.mxu0 0
      %410 = vmatpush1.bf16.msra.mxu0 0
      %411 = vmatprep.subr.bf16.mxu0 0
      %412 = vmatpush1.bf16.msra.mxu0 0
      %413 = vmatprep.subr.bf16.mxu0 0
      %414 = vmatpush1.bf16.msra.mxu0 0
      %415 = vmatprep.subr.bf16.mxu0 0
      %416 = vmatpush1.bf16.msra.mxu0 %v407
      %417 = vmatprep.subr.bf16.mxu0 0
      %418 = vmatpush1.bf16.msra.mxu0 %v162
      %419 = vmatprep.subr.bf16.mxu0 0
      %420 = vmatpush1.bf16.msra.mxu0 %v161
      %421 = vmatprep.subr.bf16.mxu0 0
      %422 = vmatpush1.bf16.msra.mxu0 %v160
      %423 = vmatprep.subr.bf16.mxu0 0
      %424 = vmatpush1.bf16.msra.mxu0 %v159
      %425 = vmatprep.subr.bf16.mxu0 0
      %426 = vmatpush2.bf16.msra.mxu0 0
      %427 = vmatprep.subr.bf16.mxu0 0
      %428 = vmatpush2.bf16.msra.mxu0 0
      %429 = vmatprep.subr.bf16.mxu0 0
      %430 = vmatpush2.bf16.msra.mxu0 0
      %431 = vmatprep.subr.bf16.mxu0 0
      %432 = vmatpush2.bf16.msra.mxu0 0
      %433 = vmatprep.subr.bf16.mxu0 0
      %434 = vmatpush2.bf16.msra.mxu0 0
      %435 = vmatprep.subr.bf16.mxu0 0
      %436 = vmatpush2.bf16.msra.mxu0 0
      %437 = vmatprep.subr.bf16.mxu0 0
      %438 = vmatpush2.bf16.msra.mxu0 0
      %439 = vmatprep.subr.bf16.mxu0 0
      %440 = vmatpush2.bf16.msra.mxu0 0
      %441 = vmatprep.mubr.bf16.mxu0 0
      %442 = vmatmul.mubr.bf16.gmra.mxu0 %v391
      %v443 = vpop.f32.mrf.mxu0
      %v444 = vadd.f32 0.0, %v443
      %v445 = vpop.f32.mrf.mxu0
      %v446 = vpop.f32.mrf.mxu0
      %v447 = vadd.f32 0.0, %v446
      %v448 = vpop.f32.mrf.mxu0
      %449 = vmatprep.mubr.bf16.mxu0 0
      %450 = vmatmul.mubr.bf16.gmra.mxu0 %v394
      %v451 = vpop.f32.mrf.mxu0
      %v452 = vadd.f32 0.0, %v451
      %v453 = vpop.f32.mrf.mxu0
      %v454 = vpop.f32.mrf.mxu0
      %v455 = vadd.f32 0.0, %v454
      %v456 = vpop.f32.mrf.mxu0
      %457 = vmatprep.mubr.bf16.mxu0 0
      %458 = vmatmul.mubr.bf16.gmra.mxu0 %v397
      %v459 = vpop.f32.mrf.mxu0
      %v460 = vadd.f32 0.0, %v459
      %v461 = vpop.f32.mrf.mxu0
      %v462 = vpop.f32.mrf.mxu0
      %v463 = vadd.f32 0.0, %v462
      %v464 = vpop.f32.mrf.mxu0
      %465 = vmatprep.mubr.bf16.mxu0 0
      %466 = vmatmul.mubr.bf16.gmra.mxu0 %v400
      %v467 = vpop.f32.mrf.mxu0
      %v468 = vadd.f32 0.0, %v467
      %v469 = vpop.f32.mrf.mxu0
      %v470 = vpop.f32.mrf.mxu0
      %v471 = vadd.f32 0.0, %v470
      %v472 = vpop.f32.mrf.mxu0
      %473 = vmatprep.mubr.bf16.mxu0 0
      %474 = vmatmul.mubr.bf16.gmra.mxu0 %v403
      %v475 = vpop.f32.mrf.mxu0
      %v476 = vadd.f32 0.0, %v475
      %v477 = vpop.f32.mrf.mxu0
      %v478 = vpop.f32.mrf.mxu0
      %v479 = vpop.f32.mrf.mxu0
      %480 = vdwg.mxu0
      %486 = vrot.lane.b32.xlu0 %v149, 96
      %v487 = vpop.permute.xlu0 %486
      %488 = vrot.lane.b32.xlu0 %v150, 96
      %v489 = vpop.permute.xlu0 %488
      %490 = vrot.lane.b32.xlu0 %v151, 96
      %v491 = vpop.permute.xlu0 %490
      %492 = vrot.lane.b32.xlu0 %v152, 96
      %v493 = vpop.permute.xlu0 %492
      %494 = vrot.lane.b32.xlu0 %v153, 96
      %v495 = vpop.permute.xlu0 %494
      %501 = vrot.lane.b32.xlu0 %v154, 96
      %v502 = vpop.permute.xlu0 %501
      %503 = vrot.lane.b32.xlu0 %v155, 96
      %v504 = vpop.permute.xlu0 %503
      %505 = vrot.lane.b32.xlu0 %v156, 96
      %v506 = vpop.permute.xlu0 %505
      %507 = vrot.lane.b32.xlu0 %v157, 96
      %v508 = vpop.permute.xlu0 %507
      %509 = vrot.lane.b32.xlu0 %v158, 96
      %v510 = vpop.permute.xlu0 %509
      %v512 = vsel %vm164, %v487, 0
      %v515 = vsel %vm164, %v489, 0
      %v518 = vsel %vm164, %v491, 0
      %v521 = vsel %vm164, %v493, 0
      %v524 = vsel %vm164, %v495, 0
      %v527 = vsel %vm164, %v502, 0
      %v530 = vsel %vm164, %v504, 0
      %v533 = vsel %vm164, %v506, 0
      %v536 = vsel %vm164, %v508, 0
      %v539 = vsel %vm164, %v510, 0
      %541 = vmatprep.subr.bf16.mxu0 0
      %542 = vmatpush1.bf16.xpose.msra.mxu0 0
      %543 = vmatprep.subr.bf16.mxu0 0
      %544 = vmatpush1.bf16.xpose.msra.mxu0 0
      %545 = vmatprep.subr.bf16.mxu0 0
      %546 = vmatpush1.bf16.xpose.msra.mxu0 0
      %547 = vmatprep.subr.bf16.mxu0 0
      %548 = vmatpush1.bf16.xpose.msra.mxu0 %v539
      %549 = vmatprep.subr.bf16.mxu0 0
      %550 = vmatpush1.bf16.xpose.msra.mxu0 %v536
      %551 = vmatprep.subr.bf16.mxu0 0
      %552 = vmatpush1.bf16.xpose.msra.mxu0 %v533
      %553 = vmatprep.subr.bf16.mxu0 0
      %554 = vmatpush1.bf16.xpose.msra.mxu0 %v530
      %555 = vmatprep.subr.bf16.mxu0 0
      %556 = vmatpush1.bf16.xpose.msra.mxu0 %v527
      %557 = vmatprep.subr.bf16.mxu0 0
      %558 = vmatpush2.bf16.xpose.msra.mxu0 0
      %559 = vmatprep.subr.bf16.mxu0 0
      %560 = vmatpush2.bf16.xpose.msra.mxu0 0
      %561 = vmatprep.subr.bf16.mxu0 0
      %562 = vmatpush2.bf16.xpose.msra.mxu0 0
      %563 = vmatprep.subr.bf16.mxu0 0
      %564 = vmatpush2.bf16.xpose.msra.mxu0 0
      %565 = vmatprep.subr.bf16.mxu0 0
      %566 = vmatpush2.bf16.xpose.msra.mxu0 0
      %567 = vmatprep.subr.bf16.mxu0 0
      %568 = vmatpush2.bf16.xpose.msra.mxu0 0
      %569 = vmatprep.subr.bf16.mxu0 0
      %570 = vmatpush2.bf16.xpose.msra.mxu0 0
      %571 = vmatprep.subr.bf16.mxu0 0
      %572 = vmatpush2.bf16.xpose.msra.mxu0 0
      %573 = vmatprep.mubr.bf16.mxu0 0
      %574 = vmatmul.mubr.bf16.gmra.mxu0 %v512
      %v575 = vpop.f32.mrf.mxu0
      %v576 = vadd.f32 0.0, %v575
      %v577 = vpop.f32.mrf.mxu0
      %v578 = vpop.f32.mrf.mxu0
      %v579 = vadd.f32 0.0, %v578
      %v580 = vpop.f32.mrf.mxu0
      %581 = vmatprep.mubr.bf16.mxu0 0
      %582 = vmatmul.mubr.bf16.gmra.mxu0 %v515
      %v583 = vpop.f32.mrf.mxu0
      %v584 = vadd.f32 0.0, %v583
      %v585 = vpop.f32.mrf.mxu0
      %v586 = vpop.f32.mrf.mxu0
      %v587 = vadd.f32 0.0, %v586
      %v588 = vpop.f32.mrf.mxu0
      %589 = vmatprep.mubr.bf16.mxu0 0
      %590 = vmatmul.mubr.bf16.gmra.mxu0 %v518
      %v591 = vpop.f32.mrf.mxu0
      %v592 = vadd.f32 0.0, %v591
      %v593 = vpop.f32.mrf.mxu0
      %v594 = vpop.f32.mrf.mxu0
      %v595 = vadd.f32 0.0, %v594
      %v596 = vpop.f32.mrf.mxu0
      %597 = vmatprep.mubr.bf16.mxu0 0
      %598 = vmatmul.mubr.bf16.gmra.mxu0 %v521
      %v599 = vpop.f32.mrf.mxu0
      %v600 = vadd.f32 0.0, %v599
      %v601 = vpop.f32.mrf.mxu0
      %v602 = vpop.f32.mrf.mxu0
      %v603 = vadd.f32 0.0, %v602
      %v604 = vpop.f32.mrf.mxu0
      %605 = vmatprep.mubr.bf16.mxu0 0
      %606 = vmatmul.mubr.bf16.gmra.mxu0 %v524
      %v607 = vpop.f32.mrf.mxu0
      %v608 = vadd.f32 0.0, %v607
      %v609 = vpop.f32.mrf.mxu0
      %v610 = vpop.f32.mrf.mxu0
      %v611 = vpop.f32.mrf.mxu0
      %612 = vdwg.mxu0
      %v613 = vmul.f32 %v576, 0.17677669
      %v614 = vmul.f32 %v579, 0.17677669
      %v615 = vmul.f32 %v584, 0.17677669
      %v616 = vmul.f32 %v587, 0.17677669
      %v617 = vmul.f32 %v592, 0.17677669
      %v618 = vmul.f32 %v595, 0.17677669
      %v619 = vmul.f32 %v600, 0.17677669
      %v620 = vmul.f32 %v603, 0.17677669
      %v621 = vmul.f32 %v608, 0.17677669
      %v622 = vadd.f32 %v613, %v148
      %v623 = vadd.f32 %v614, %v148
      %v624 = vadd.f32 %v615, %v148
      %v625 = vadd.f32 %v616, %v148
      %v626 = vadd.f32 %v617, %v148
      %v627 = vadd.f32 %v618, %v148
      %v628 = vadd.f32 %v619, %v148
      %v629 = vadd.f32 %v620, %v148
      %v630 = vadd.f32 %v621, %v148
      %v631 = vsel %vm285, %v622, -inf
      %632 = vmax.xlane.f32.xlu0 %v631
      %v633 = vpop.xlane.xlu0 %632
      %v634 = vsel %vm285, %v623, -inf
      %635 = vmax.xlane.f32.xlu0 %v634
      %v636 = vpop.xlane.xlu0 %635
      %v637 = vsel %vm285, %v624, -inf
      %638 = vmax.xlane.f32.xlu0 %v637
      %v639 = vpop.xlane.xlu0 %638
      %v640 = vsel %vm285, %v625, -inf
      %641 = vmax.xlane.f32.xlu0 %v640
      %v642 = vpop.xlane.xlu0 %641
      %v643 = vsel %vm285, %v626, -inf
      %644 = vmax.xlane.f32.xlu0 %v643
      %v645 = vpop.xlane.xlu0 %644
      %v646 = vsel %vm285, %v627, -inf
      %647 = vmax.xlane.f32.xlu0 %v646
      %v648 = vpop.xlane.xlu0 %647
      %v649 = vsel %vm285, %v628, -inf
      %650 = vmax.xlane.f32.xlu0 %v649
      %v651 = vpop.xlane.xlu0 %650
      %v652 = vsel %vm285, %v629, -inf
      %653 = vmax.xlane.f32.xlu0 %v652
      %v654 = vpop.xlane.xlu0 %653
      %v655 = vsel %vm285, %v630, -inf
      %656 = vmax.xlane.f32.xlu0 %v655
      %v657 = vpop.xlane.xlu0 %656
      %v658 = vsub.f32 %v622, %v633
      %v659 = vsub.f32 %v623, %v636
      %v660 = vsub.f32 %v624, %v639
      %v661 = vsub.f32 %v625, %v642
      %v662 = vsub.f32 %v626, %v645
      %v663 = vsub.f32 %v627, %v648
      %v664 = vsub.f32 %v628, %v651
      %v665 = vsub.f32 %v629, %v654
      %v666 = vsub.f32 %v630, %v657
      %v667 = vmul.f32 %v658, 1.442695
      %v668 = vpow.pop %v667
      %v669 = vmul.f32 %v659, 1.442695
      %v670 = vpow.pop %v669
      %v671 = vmul.f32 %v660, 1.442695
      %v672 = vpow.pop %v671
      %v673 = vmul.f32 %v661, 1.442695
      %v674 = vpow.pop %v673
      %v675 = vmul.f32 %v662, 1.442695
      %v676 = vpow.pop %v675
      %v677 = vmul.f32 %v663, 1.442695
      %v678 = vpow.pop %v677
      %v679 = vmul.f32 %v664, 1.442695
      %v680 = vpow.pop %v679
      %v681 = vmul.f32 %v665, 1.442695
      %v682 = vpow.pop %v681
      %v683 = vmul.f32 %v666, 1.442695
      %v684 = vpow.pop %v683
      %v685 = vsel %vm285, %v668, 0.0
      %686 = vadd.xlane.f32.xlu0 %v685
      %v687 = vpop.xlane.xlu0 %686
      %v688 = vsel %vm285, %v670, 0.0
      %689 = vadd.xlane.f32.xlu0 %v688
      %v690 = vpop.xlane.xlu0 %689
      %v691 = vsel %vm285, %v672, 0.0
      %692 = vadd.xlane.f32.xlu0 %v691
      %v693 = vpop.xlane.xlu0 %692
      %v694 = vsel %vm285, %v674, 0.0
      %695 = vadd.xlane.f32.xlu0 %v694
      %v696 = vpop.xlane.xlu0 %695
      %v697 = vsel %vm285, %v676, 0.0
      %698 = vadd.xlane.f32.xlu0 %v697
      %v699 = vpop.xlane.xlu0 %698
      %v700 = vsel %vm285, %v678, 0.0
      %701 = vadd.xlane.f32.xlu0 %v700
      %v702 = vpop.xlane.xlu0 %701
      %v703 = vsel %vm285, %v680, 0.0
      %704 = vadd.xlane.f32.xlu0 %v703
      %v705 = vpop.xlane.xlu0 %704
      %v706 = vsel %vm285, %v682, 0.0
      %707 = vadd.xlane.f32.xlu0 %v706
      %v708 = vpop.xlane.xlu0 %707
      %v709 = vsel %vm285, %v684, 0.0
      %710 = vadd.xlane.f32.xlu0 %v709
      %v711 = vpop.xlane.xlu0 %710
      %v712 = vrcp.pop %v687
      %v713 = vrcp.pop %v690
      %v714 = vrcp.pop %v693
      %v715 = vrcp.pop %v696
      %v716 = vrcp.pop %v699
      %v717 = vrcp.pop %v702
      %v718 = vrcp.pop %v705
      %v719 = vrcp.pop %v708
      %v720 = vrcp.pop %v711
      %v721 = vmul.f32 %v668, %v712
      %v722 = vmul.f32 %v670, %v713
      %v723 = vmul.f32 %v672, %v714
      %v724 = vmul.f32 %v674, %v715
      %v725 = vmul.f32 %v676, %v716
      %v726 = vmul.f32 %v678, %v717
      %v727 = vmul.f32 %v680, %v718
      %v728 = vmul.f32 %v682, %v719
      %v729 = vmul.f32 %v684, %v720
      %v730 = vpack.c.bf16 %v722, %v721
      %v731 = vpack.c.bf16 %v724, %v723
      %v732 = vpack.c.bf16 %v726, %v725
      %v733 = vpack.c.bf16 %v728, %v727
      %v734 = vpack.c.bf16 %v729, %v729
      %740 = vrot.lane.b32.xlu0 %v159, 96
      %v741 = vpop.permute.xlu0 %740
      %742 = vrot.lane.b32.xlu0 %v160, 96
      %v743 = vpop.permute.xlu0 %742
      %744 = vrot.lane.b32.xlu0 %v161, 96
      %v745 = vpop.permute.xlu0 %744
      %746 = vrot.lane.b32.xlu0 %v162, 96
      %v747 = vpop.permute.xlu0 %746
      %748 = vrot.lane.b32.xlu0 %v163, 96
      %v749 = vpop.permute.xlu0 %748
      %v755 = vsel %vm285, %v730, 0
      %v758 = vsel %vm285, %v731, 0
      %v761 = vsel %vm285, %v732, 0
      %v764 = vsel %vm285, %v733, 0
      %v767 = vsel %vm285, %v734, 0
      %v770 = vsel %vm405, %v749, 0
      %772 = vmatprep.subr.bf16.mxu0 0
      %773 = vmatpush1.bf16.msra.mxu0 0
      %774 = vmatprep.subr.bf16.mxu0 0
      %775 = vmatpush1.bf16.msra.mxu0 0
      %776 = vmatprep.subr.bf16.mxu0 0
      %777 = vmatpush1.bf16.msra.mxu0 0
      %778 = vmatprep.subr.bf16.mxu0 0
      %779 = vmatpush1.bf16.msra.mxu0 %v770
      %780 = vmatprep.subr.bf16.mxu0 0
      %781 = vmatpush1.bf16.msra.mxu0 %v747
      %782 = vmatprep.subr.bf16.mxu0 0
      %783 = vmatpush1.bf16.msra.mxu0 %v745
      %784 = vmatprep.subr.bf16.mxu0 0
      %785 = vmatpush1.bf16.msra.mxu0 %v743
      %786 = vmatprep.subr.bf16.mxu0 0
      %787 = vmatpush1.bf16.msra.mxu0 %v741
      %788 = vmatprep.subr.bf16.mxu0 0
      %789 = vmatpush2.bf16.msra.mxu0 0
      %790 = vmatprep.subr.bf16.mxu0 0
      %791 = vmatpush2.bf16.msra.mxu0 0
      %792 = vmatprep.subr.bf16.mxu0 0
      %793 = vmatpush2.bf16.msra.mxu0 0
      %794 = vmatprep.subr.bf16.mxu0 0
      %795 = vmatpush2.bf16.msra.mxu0 0
      %796 = vmatprep.subr.bf16.mxu0 0
      %797 = vmatpush2.bf16.msra.mxu0 0
      %798 = vmatprep.subr.bf16.mxu0 0
      %799 = vmatpush2.bf16.msra.mxu0 0
      %800 = vmatprep.subr.bf16.mxu0 0
      %801 = vmatpush2.bf16.msra.mxu0 0
      %802 = vmatprep.subr.bf16.mxu0 0
      %803 = vmatpush2.bf16.msra.mxu0 0
      %804 = vmatprep.mubr.bf16.mxu0 0
      %805 = vmatmul.mubr.bf16.gmra.mxu0 %v755
      %v806 = vpop.f32.mrf.mxu0
      %v807 = vadd.f32 0.0, %v806
      %v808 = vpop.f32.mrf.mxu0
      %v809 = vpop.f32.mrf.mxu0
      %v810 = vadd.f32 0.0, %v809
      %v811 = vpop.f32.mrf.mxu0
      %812 = vmatprep.mubr.bf16.mxu0 0
      %813 = vmatmul.mubr.bf16.gmra.mxu0 %v758
      %v814 = vpop.f32.mrf.mxu0
      %v815 = vadd.f32 0.0, %v814
      %v816 = vpop.f32.mrf.mxu0
      %v817 = vpop.f32.mrf.mxu0
      %v818 = vadd.f32 0.0, %v817
      %v819 = vpop.f32.mrf.mxu0
      %820 = vmatprep.mubr.bf16.mxu0 0
      %821 = vmatmul.mubr.bf16.gmra.mxu0 %v761
      %v822 = vpop.f32.mrf.mxu0
      %v823 = vadd.f32 0.0, %v822
      %v824 = vpop.f32.mrf.mxu0
      %v825 = vpop.f32.mrf.mxu0
      %v826 = vadd.f32 0.0, %v825
      %v827 = vpop.f32.mrf.mxu0
      %828 = vmatprep.mubr.bf16.mxu0 0
      %829 = vmatmul.mubr.bf16.gmra.mxu0 %v764
      %v830 = vpop.f32.mrf.mxu0
      %v831 = vadd.f32 0.0, %v830
      %v832 = vpop.f32.mrf.mxu0
      %v833 = vpop.f32.mrf.mxu0
      %v834 = vadd.f32 0.0, %v833
      %v835 = vpop.f32.mrf.mxu0
      %836 = vmatprep.mubr.bf16.mxu0 0
      %837 = vmatmul.mubr.bf16.gmra.mxu0 %v767
      %v838 = vpop.f32.mrf.mxu0
      %v839 = vadd.f32 0.0, %v838
      %v840 = vpop.f32.mrf.mxu0
      %v841 = vpop.f32.mrf.mxu0
      %v842 = vpop.f32.mrf.mxu0
      %843 = vdwg.mxu0
      %844 = vrot.lane.b32.xlu0 %v149, 64
      %v845 = vpop.permute.xlu0 %844
      %846 = vrot.lane.b32.xlu0 %v150, 64
      %v847 = vpop.permute.xlu0 %846
      %848 = vrot.lane.b32.xlu0 %v151, 64
      %v849 = vpop.permute.xlu0 %848
      %850 = vrot.lane.b32.xlu0 %v152, 64
      %v851 = vpop.permute.xlu0 %850
      %852 = vrot.lane.b32.xlu0 %v153, 64
      %v853 = vpop.permute.xlu0 %852
      %854 = vrot.lane.b32.xlu0 %v154, 64
      %v855 = vpop.permute.xlu0 %854
      %856 = vrot.lane.b32.xlu0 %v155, 64
      %v857 = vpop.permute.xlu0 %856
      %858 = vrot.lane.b32.xlu0 %v156, 64
      %v859 = vpop.permute.xlu0 %858
      %860 = vrot.lane.b32.xlu0 %v157, 64
      %v861 = vpop.permute.xlu0 %860
      %862 = vrot.lane.b32.xlu0 %v158, 64
      %v863 = vpop.permute.xlu0 %862
      %v865 = vsel %vm164, %v845, 0
      %v868 = vsel %vm164, %v847, 0
      %v871 = vsel %vm164, %v849, 0
      %v874 = vsel %vm164, %v851, 0
      %v877 = vsel %vm164, %v853, 0
      %v880 = vsel %vm164, %v855, 0
      %v883 = vsel %vm164, %v857, 0
      %v886 = vsel %vm164, %v859, 0
      %v889 = vsel %vm164, %v861, 0
      %v892 = vsel %vm164, %v863, 0
      %894 = vmatprep.subr.bf16.mxu0 0
      %895 = vmatpush1.bf16.xpose.msra.mxu0 0
      %896 = vmatprep.subr.bf16.mxu0 0
      %897 = vmatpush1.bf16.xpose.msra.mxu0 0
      %898 = vmatprep.subr.bf16.mxu0 0
      %899 = vmatpush1.bf16.xpose.msra.mxu0 0
      %900 = vmatprep.subr.bf16.mxu0 0
      %901 = vmatpush1.bf16.xpose.msra.mxu0 %v892
      %902 = vmatprep.subr.bf16.mxu0 0
      %903 = vmatpush1.bf16.xpose.msra.mxu0 %v889
      %904 = vmatprep.subr.bf16.mxu0 0
      %905 = vmatpush1.bf16.xpose.msra.mxu0 %v886
      %906 = vmatprep.subr.bf16.mxu0 0
      %907 = vmatpush1.bf16.xpose.msra.mxu0 %v883
      %908 = vmatprep.subr.bf16.mxu0 0
      %909 = vmatpush1.bf16.xpose.msra.mxu0 %v880
      %910 = vmatprep.subr.bf16.mxu0 0
      %911 = vmatpush2.bf16.xpose.msra.mxu0 0
      %912 = vmatprep.subr.bf16.mxu0 0
      %913 = vmatpush2.bf16.xpose.msra.mxu0 0
      %914 = vmatprep.subr.bf16.mxu0 0
      %915 = vmatpush2.bf16.xpose.msra.mxu0 0
      %916 = vmatprep.subr.bf16.mxu0 0
      %917 = vmatpush2.bf16.xpose.msra.mxu0 0
      %918 = vmatprep.subr.bf16.mxu0 0
      %919 = vmatpush2.bf16.xpose.msra.mxu0 0
      %920 = vmatprep.subr.bf16.mxu0 0
      %921 = vmatpush2.bf16.xpose.msra.mxu0 0
      %922 = vmatprep.subr.bf16.mxu0 0
      %923 = vmatpush2.bf16.xpose.msra.mxu0 0
      %924 = vmatprep.subr.bf16.mxu0 0
      %925 = vmatpush2.bf16.xpose.msra.mxu0 0
      %926 = vmatprep.mubr.bf16.mxu0 0
      %927 = vmatmul.mubr.bf16.gmra.mxu0 %v865
      %v928 = vpop.f32.mrf.mxu0
      %v929 = vadd.f32 0.0, %v928
      %v930 = vpop.f32.mrf.mxu0
      %v931 = vpop.f32.mrf.mxu0
      %v932 = vadd.f32 0.0, %v931
      %v933 = vpop.f32.mrf.mxu0
      %934 = vmatprep.mubr.bf16.mxu0 0
      %935 = vmatmul.mubr.bf16.gmra.mxu0 %v868
      %v936 = vpop.f32.mrf.mxu0
      %v937 = vadd.f32 0.0, %v936
      %v938 = vpop.f32.mrf.mxu0
      %v939 = vpop.f32.mrf.mxu0
      %v940 = vadd.f32 0.0, %v939
      %v941 = vpop.f32.mrf.mxu0
      %942 = vmatprep.mubr.bf16.mxu0 0
      %943 = vmatmul.mubr.bf16.gmra.mxu0 %v871
      %v944 = vpop.f32.mrf.mxu0
      %v945 = vadd.f32 0.0, %v944
      %v946 = vpop.f32.mrf.mxu0
      %v947 = vpop.f32.mrf.mxu0
      %v948 = vadd.f32 0.0, %v947
      %v949 = vpop.f32.mrf.mxu0
      %950 = vmatprep.mubr.bf16.mxu0 0
      %951 = vmatmul.mubr.bf16.gmra.mxu0 %v874
      %v952 = vpop.f32.mrf.mxu0
      %v953 = vadd.f32 0.0, %v952
      %v954 = vpop.f32.mrf.mxu0
      %v955 = vpop.f32.mrf.mxu0
      %v956 = vadd.f32 0.0, %v955
      %v957 = vpop.f32.mrf.mxu0
      %958 = vmatprep.mubr.bf16.mxu0 0
      %959 = vmatmul.mubr.bf16.gmra.mxu0 %v877
      %v960 = vpop.f32.mrf.mxu0
      %v961 = vadd.f32 0.0, %v960
      %v962 = vpop.f32.mrf.mxu0
      %v963 = vpop.f32.mrf.mxu0
      %v964 = vpop.f32.mrf.mxu0
      %965 = vdwg.mxu0
      %v966 = vmul.f32 %v929, 0.17677669
      %v967 = vmul.f32 %v932, 0.17677669
      %v968 = vmul.f32 %v937, 0.17677669
      %v969 = vmul.f32 %v940, 0.17677669
      %v970 = vmul.f32 %v945, 0.17677669
      %v971 = vmul.f32 %v948, 0.17677669
      %v972 = vmul.f32 %v953, 0.17677669
      %v973 = vmul.f32 %v956, 0.17677669
      %v974 = vmul.f32 %v961, 0.17677669
      %v975 = vadd.f32 %v966, %v148
      %v976 = vadd.f32 %v967, %v148
      %v977 = vadd.f32 %v968, %v148
      %v978 = vadd.f32 %v969, %v148
      %v979 = vadd.f32 %v970, %v148
      %v980 = vadd.f32 %v971, %v148
      %v981 = vadd.f32 %v972, %v148
      %v982 = vadd.f32 %v973, %v148
      %v983 = vadd.f32 %v974, %v148
      %v984 = vsel %vm285, %v975, -inf
      %985 = vmax.xlane.f32.xlu0 %v984
      %v986 = vpop.xlane.xlu0 %985
      %v987 = vsel %vm285, %v976, -inf
      %988 = vmax.xlane.f32.xlu0 %v987
      %v989 = vpop.xlane.xlu0 %988
      %v990 = vsel %vm285, %v977, -inf
      %991 = vmax.xlane.f32.xlu0 %v990
      %v992 = vpop.xlane.xlu0 %991
      %v993 = vsel %vm285, %v978, -inf
      %994 = vmax.xlane.f32.xlu0 %v993
      %v995 = vpop.xlane.xlu0 %994
      %v996 = vsel %vm285, %v979, -inf
      %997 = vmax.xlane.f32.xlu0 %v996
      %v998 = vpop.xlane.xlu0 %997
      %v999 = vsel %vm285, %v980, -inf
      %1000 = vmax.xlane.f32.xlu0 %v999
      %v1001 = vpop.xlane.xlu0 %1000
      %v1002 = vsel %vm285, %v981, -inf
      %1003 = vmax.xlane.f32.xlu0 %v1002
      %v1004 = vpop.xlane.xlu0 %1003
      %v1005 = vsel %vm285, %v982, -inf
      %1006 = vmax.xlane.f32.xlu0 %v1005
      %v1007 = vpop.xlane.xlu0 %1006
      %v1008 = vsel %vm285, %v983, -inf
      %1009 = vmax.xlane.f32.xlu0 %v1008
      %v1010 = vpop.xlane.xlu0 %1009
      %v1011 = vsub.f32 %v975, %v986
      %v1012 = vsub.f32 %v976, %v989
      %v1013 = vsub.f32 %v977, %v992
      %v1014 = vsub.f32 %v978, %v995
      %v1015 = vsub.f32 %v979, %v998
      %v1016 = vsub.f32 %v980, %v1001
      %v1017 = vsub.f32 %v981, %v1004
      %v1018 = vsub.f32 %v982, %v1007
      %v1019 = vsub.f32 %v983, %v1010
      %v1020 = vmul.f32 %v1011, 1.442695
      %v1021 = vpow.pop %v1020
      %v1022 = vmul.f32 %v1012, 1.442695
      %v1023 = vpow.pop %v1022
      %v1024 = vmul.f32 %v1013, 1.442695
      %v1025 = vpow.pop %v1024
      %v1026 = vmul.f32 %v1014, 1.442695
      %v1027 = vpow.pop %v1026
      %v1028 = vmul.f32 %v1015, 1.442695
      %v1029 = vpow.pop %v1028
      %v1030 = vmul.f32 %v1016, 1.442695
      %v1031 = vpow.pop %v1030
      %v1032 = vmul.f32 %v1017, 1.442695
      %v1033 = vpow.pop %v1032
      %v1034 = vmul.f32 %v1018, 1.442695
      %v1035 = vpow.pop %v1034
      %v1036 = vmul.f32 %v1019, 1.442695
      %v1037 = vpow.pop %v1036
      %v1038 = vsel %vm285, %v1021, 0.0
      %1039 = vadd.xlane.f32.xlu0 %v1038
      %v1040 = vpop.xlane.xlu0 %1039
      %v1041 = vsel %vm285, %v1023, 0.0
      %1042 = vadd.xlane.f32.xlu0 %v1041
      %v1043 = vpop.xlane.xlu0 %1042
      %v1044 = vsel %vm285, %v1025, 0.0
      %1045 = vadd.xlane.f32.xlu0 %v1044
      %v1046 = vpop.xlane.xlu0 %1045
      %v1047 = vsel %vm285, %v1027, 0.0
      %1048 = vadd.xlane.f32.xlu0 %v1047
      %v1049 = vpop.xlane.xlu0 %1048
      %v1050 = vsel %vm285, %v1029, 0.0
      %1051 = vadd.xlane.f32.xlu0 %v1050
      %v1052 = vpop.xlane.xlu0 %1051
      %v1053 = vsel %vm285, %v1031, 0.0
      %1054 = vadd.xlane.f32.xlu0 %v1053
      %v1055 = vpop.xlane.xlu0 %1054
      %v1056 = vsel %vm285, %v1033, 0.0
      %1057 = vadd.xlane.f32.xlu0 %v1056
      %v1058 = vpop.xlane.xlu0 %1057
      %v1059 = vsel %vm285, %v1035, 0.0
      %1060 = vadd.xlane.f32.xlu0 %v1059
      %v1061 = vpop.xlane.xlu0 %1060
      %v1062 = vsel %vm285, %v1037, 0.0
      %1063 = vadd.xlane.f32.xlu0 %v1062
      %v1064 = vpop.xlane.xlu0 %1063
      %v1065 = vrcp.pop %v1040
      %v1066 = vrcp.pop %v1043
      %v1067 = vrcp.pop %v1046
      %v1068 = vrcp.pop %v1049
      %v1069 = vrcp.pop %v1052
      %v1070 = vrcp.pop %v1055
      %v1071 = vrcp.pop %v1058
      %v1072 = vrcp.pop %v1061
      %v1073 = vrcp.pop %v1064
      %v1074 = vmul.f32 %v1021, %v1065
      %v1075 = vmul.f32 %v1023, %v1066
      %v1076 = vmul.f32 %v1025, %v1067
      %v1077 = vmul.f32 %v1027, %v1068
      %v1078 = vmul.f32 %v1029, %v1069
      %v1079 = vmul.f32 %v1031, %v1070
      %v1080 = vmul.f32 %v1033, %v1071
      %v1081 = vmul.f32 %v1035, %v1072
      %v1082 = vmul.f32 %v1037, %v1073
      %v1083 = vpack.c.bf16 %v1075, %v1074
      %v1084 = vpack.c.bf16 %v1077, %v1076
      %v1085 = vpack.c.bf16 %v1079, %v1078
      %v1086 = vpack.c.bf16 %v1081, %v1080
      %v1087 = vpack.c.bf16 %v1082, %v1082
      %1088 = vrot.lane.b32.xlu0 %v159, 64
      %v1089 = vpop.permute.xlu0 %1088
      %1090 = vrot.lane.b32.xlu0 %v160, 64
      %v1091 = vpop.permute.xlu0 %1090
      %1092 = vrot.lane.b32.xlu0 %v161, 64
      %v1093 = vpop.permute.xlu0 %1092
      %1094 = vrot.lane.b32.xlu0 %v162, 64
      %v1095 = vpop.permute.xlu0 %1094
      %1096 = vrot.lane.b32.xlu0 %v163, 64
      %v1097 = vpop.permute.xlu0 %1096
      %v1103 = vsel %vm285, %v1083, 0
      %v1106 = vsel %vm285, %v1084, 0
      %v1109 = vsel %vm285, %v1085, 0
      %v1112 = vsel %vm285, %v1086, 0
      %v1115 = vsel %vm285, %v1087, 0
      %v1118 = vsel %vm405, %v1097, 0
      %1120 = vmatprep.subr.bf16.mxu0 0
      %1121 = vmatpush1.bf16.msra.mxu0 0
      %1122 = vmatprep.subr.bf16.mxu0 0
      %1123 = vmatpush1.bf16.msra.mxu0 0
      %1124 = vmatprep.subr.bf16.mxu0 0
      %1125 = vmatpush1.bf16.msra.mxu0 0
      %1126 = vmatprep.subr.bf16.mxu0 0
      %1127 = vmatpush1.bf16.msra.mxu0 %v1118
      %1128 = vmatprep.subr.bf16.mxu0 0
      %1129 = vmatpush1.bf16.msra.mxu0 %v1095
      %1130 = vmatprep.subr.bf16.mxu0 0
      %1131 = vmatpush1.bf16.msra.mxu0 %v1093
      %1132 = vmatprep.subr.bf16.mxu0 0
      %1133 = vmatpush1.bf16.msra.mxu0 %v1091
      %1134 = vmatprep.subr.bf16.mxu0 0
      %1135 = vmatpush1.bf16.msra.mxu0 %v1089
      %1136 = vmatprep.subr.bf16.mxu0 0
      %1137 = vmatpush2.bf16.msra.mxu0 0
      %1138 = vmatprep.subr.bf16.mxu0 0
      %1139 = vmatpush2.bf16.msra.mxu0 0
      %1140 = vmatprep.subr.bf16.mxu0 0
      %1141 = vmatpush2.bf16.msra.mxu0 0
      %1142 = vmatprep.subr.bf16.mxu0 0
      %1143 = vmatpush2.bf16.msra.mxu0 0
      %1144 = vmatprep.subr.bf16.mxu0 0
      %1145 = vmatpush2.bf16.msra.mxu0 0
      %1146 = vmatprep.subr.bf16.mxu0 0
      %1147 = vmatpush2.bf16.msra.mxu0 0
      %1148 = vmatprep.subr.bf16.mxu0 0
      %1149 = vmatpush2.bf16.msra.mxu0 0
      %1150 = vmatprep.subr.bf16.mxu0 0
      %1151 = vmatpush2.bf16.msra.mxu0 0
      %1152 = vmatprep.mubr.bf16.mxu0 0
      %1153 = vmatmul.mubr.bf16.gmra.mxu0 %v1103
      %v1154 = vpop.f32.mrf.mxu0
      %v1155 = vadd.f32 0.0, %v1154
      %v1156 = vpop.f32.mrf.mxu0
      %v1157 = vpop.f32.mrf.mxu0
      %v1158 = vadd.f32 0.0, %v1157
      %v1159 = vpop.f32.mrf.mxu0
      %1160 = vmatprep.mubr.bf16.mxu0 0
      %1161 = vmatmul.mubr.bf16.gmra.mxu0 %v1106
      %v1162 = vpop.f32.mrf.mxu0
      %v1163 = vadd.f32 0.0, %v1162
      %v1164 = vpop.f32.mrf.mxu0
      %v1165 = vpop.f32.mrf.mxu0
      %v1166 = vadd.f32 0.0, %v1165
      %v1167 = vpop.f32.mrf.mxu0
      %1168 = vmatprep.mubr.bf16.mxu0 0
      %1169 = vmatmul.mubr.bf16.gmra.mxu0 %v1109
      %v1170 = vpop.f32.mrf.mxu0
      %v1171 = vadd.f32 0.0, %v1170
      %v1172 = vpop.f32.mrf.mxu0
      %v1173 = vpop.f32.mrf.mxu0
      %v1174 = vadd.f32 0.0, %v1173
      %v1175 = vpop.f32.mrf.mxu0
      %1176 = vmatprep.mubr.bf16.mxu0 0
      %1177 = vmatmul.mubr.bf16.gmra.mxu0 %v1112
      %v1178 = vpop.f32.mrf.mxu0
      %v1179 = vadd.f32 0.0, %v1178
      %v1180 = vpop.f32.mrf.mxu0
      %v1181 = vpop.f32.mrf.mxu0
      %v1182 = vadd.f32 0.0, %v1181
      %v1183 = vpop.f32.mrf.mxu0
      %1184 = vmatprep.mubr.bf16.mxu0 0
      %1185 = vmatmul.mubr.bf16.gmra.mxu0 %v1115
      %v1186 = vpop.f32.mrf.mxu0
      %v1187 = vadd.f32 0.0, %v1186
      %v1188 = vpop.f32.mrf.mxu0
      %v1189 = vpop.f32.mrf.mxu0
      %v1190 = vpop.f32.mrf.mxu0
      %1191 = vdwg.mxu0
      %1192 = vrot.lane.b32.xlu0 %v149, 32
      %v1193 = vpop.permute.xlu0 %1192
      %1194 = vrot.lane.b32.xlu0 %v150, 32
      %v1195 = vpop.permute.xlu0 %1194
      %1196 = vrot.lane.b32.xlu0 %v151, 32
      %v1197 = vpop.permute.xlu0 %1196
      %1198 = vrot.lane.b32.xlu0 %v152, 32
      %v1199 = vpop.permute.xlu0 %1198
      %1200 = vrot.lane.b32.xlu0 %v153, 32
      %v1201 = vpop.permute.xlu0 %1200
      %1202 = vrot.lane.b32.xlu0 %v154, 32
      %v1203 = vpop.permute.xlu0 %1202
      %1204 = vrot.lane.b32.xlu0 %v155, 32
      %v1205 = vpop.permute.xlu0 %1204
      %1206 = vrot.lane.b32.xlu0 %v156, 32
      %v1207 = vpop.permute.xlu0 %1206
      %1208 = vrot.lane.b32.xlu0 %v157, 32
      %v1209 = vpop.permute.xlu0 %1208
      %1210 = vrot.lane.b32.xlu0 %v158, 32
      %v1211 = vpop.permute.xlu0 %1210
      %v1213 = vsel %vm164, %v1193, 0
      %v1216 = vsel %vm164, %v1195, 0
      %v1219 = vsel %vm164, %v1197, 0
      %v1222 = vsel %vm164, %v1199, 0
      %v1225 = vsel %vm164, %v1201, 0
      %v1228 = vsel %vm164, %v1203, 0
      %v1231 = vsel %vm164, %v1205, 0
      %v1234 = vsel %vm164, %v1207, 0
      %v1237 = vsel %vm164, %v1209, 0
      %v1240 = vsel %vm164, %v1211, 0
      %1242 = vmatprep.subr.bf16.mxu0 0
      %1243 = vmatpush1.bf16.xpose.msra.mxu0 0
      %1244 = vmatprep.subr.bf16.mxu0 0
      %1245 = vmatpush1.bf16.xpose.msra.mxu0 0
      %1246 = vmatprep.subr.bf16.mxu0 0
      %1247 = vmatpush1.bf16.xpose.msra.mxu0 0
      %1248 = vmatprep.subr.bf16.mxu0 0
      %1249 = vmatpush1.bf16.xpose.msra.mxu0 %v1240
      %1250 = vmatprep.subr.bf16.mxu0 0
      %1251 = vmatpush1.bf16.xpose.msra.mxu0 %v1237
      %1252 = vmatprep.subr.bf16.mxu0 0
      %1253 = vmatpush1.bf16.xpose.msra.mxu0 %v1234
      %1254 = vmatprep.subr.bf16.mxu0 0
      %1255 = vmatpush1.bf16.xpose.msra.mxu0 %v1231
      %1256 = vmatprep.subr.bf16.mxu0 0
      %1257 = vmatpush1.bf16.xpose.msra.mxu0 %v1228
      %1258 = vmatprep.subr.bf16.mxu0 0
      %1259 = vmatpush2.bf16.xpose.msra.mxu0 0
      %1260 = vmatprep.subr.bf16.mxu0 0
      %1261 = vmatpush2.bf16.xpose.msra.mxu0 0
      %1262 = vmatprep.subr.bf16.mxu0 0
      %1263 = vmatpush2.bf16.xpose.msra.mxu0 0
      %1264 = vmatprep.subr.bf16.mxu0 0
      %1265 = vmatpush2.bf16.xpose.msra.mxu0 0
      %1266 = vmatprep.subr.bf16.mxu0 0
      %1267 = vmatpush2.bf16.xpose.msra.mxu0 0
      %1268 = vmatprep.subr.bf16.mxu0 0
      %1269 = vmatpush2.bf16.xpose.msra.mxu0 0
      %1270 = vmatprep.subr.bf16.mxu0 0
      %1271 = vmatpush2.bf16.xpose.msra.mxu0 0
      %1272 = vmatprep.subr.bf16.mxu0 0
      %1273 = vmatpush2.bf16.xpose.msra.mxu0 0
      %1274 = vmatprep.mubr.bf16.mxu0 0
      %1275 = vmatmul.mubr.bf16.gmra.mxu0 %v1213
      %v1276 = vpop.f32.mrf.mxu0
      %v1277 = vadd.f32 0.0, %v1276
      %v1278 = vpop.f32.mrf.mxu0
      %v1279 = vpop.f32.mrf.mxu0
      %v1280 = vadd.f32 0.0, %v1279
      %v1281 = vpop.f32.mrf.mxu0
      %1282 = vmatprep.mubr.bf16.mxu0 0
      %1283 = vmatmul.mubr.bf16.gmra.mxu0 %v1216
      %v1284 = vpop.f32.mrf.mxu0
      %v1285 = vadd.f32 0.0, %v1284
      %v1286 = vpop.f32.mrf.mxu0
      %v1287 = vpop.f32.mrf.mxu0
      %v1288 = vadd.f32 0.0, %v1287
      %v1289 = vpop.f32.mrf.mxu0
      %1290 = vmatprep.mubr.bf16.mxu0 0
      %1291 = vmatmul.mubr.bf16.gmra.mxu0 %v1219
      %v1292 = vpop.f32.mrf.mxu0
      %v1293 = vadd.f32 0.0, %v1292
      %v1294 = vpop.f32.mrf.mxu0
      %v1295 = vpop.f32.mrf.mxu0
      %v1296 = vadd.f32 0.0, %v1295
      %v1297 = vpop.f32.mrf.mxu0
      %1298 = vmatprep.mubr.bf16.mxu0 0
      %1299 = vmatmul.mubr.bf16.gmra.mxu0 %v1222
      %v1300 = vpop.f32.mrf.mxu0
      %v1301 = vadd.f32 0.0, %v1300
      %v1302 = vpop.f32.mrf.mxu0
      %v1303 = vpop.f32.mrf.mxu0
      %v1304 = vadd.f32 0.0, %v1303
      %v1305 = vpop.f32.mrf.mxu0
      %1306 = vmatprep.mubr.bf16.mxu0 0
      %1307 = vmatmul.mubr.bf16.gmra.mxu0 %v1225
      %v1308 = vpop.f32.mrf.mxu0
      %v1309 = vadd.f32 0.0, %v1308
      %v1310 = vpop.f32.mrf.mxu0
      %v1311 = vpop.f32.mrf.mxu0
      %v1312 = vpop.f32.mrf.mxu0
      %1313 = vdwg.mxu0
      %v1314 = vmul.f32 %v1277, 0.17677669
      %v1315 = vmul.f32 %v1280, 0.17677669
      %v1316 = vmul.f32 %v1285, 0.17677669
      %v1317 = vmul.f32 %v1288, 0.17677669
      %v1318 = vmul.f32 %v1293, 0.17677669
      %v1319 = vmul.f32 %v1296, 0.17677669
      %v1320 = vmul.f32 %v1301, 0.17677669
      %v1321 = vmul.f32 %v1304, 0.17677669
      %v1322 = vmul.f32 %v1309, 0.17677669
      %v1323 = vadd.f32 %v1314, %v148
      %v1324 = vadd.f32 %v1315, %v148
      %v1325 = vadd.f32 %v1316, %v148
      %v1326 = vadd.f32 %v1317, %v148
      %v1327 = vadd.f32 %v1318, %v148
      %v1328 = vadd.f32 %v1319, %v148
      %v1329 = vadd.f32 %v1320, %v148
      %v1330 = vadd.f32 %v1321, %v148
      %v1331 = vadd.f32 %v1322, %v148
      %v1332 = vsel %vm285, %v1323, -inf
      %1333 = vmax.xlane.f32.xlu0 %v1332
      %v1334 = vpop.xlane.xlu0 %1333
      %v1335 = vsel %vm285, %v1324, -inf
      %1336 = vmax.xlane.f32.xlu0 %v1335
      %v1337 = vpop.xlane.xlu0 %1336
      %v1338 = vsel %vm285, %v1325, -inf
      %1339 = vmax.xlane.f32.xlu0 %v1338
      %v1340 = vpop.xlane.xlu0 %1339
      %v1341 = vsel %vm285, %v1326, -inf
      %1342 = vmax.xlane.f32.xlu0 %v1341
      %v1343 = vpop.xlane.xlu0 %1342
      %v1344 = vsel %vm285, %v1327, -inf
      %1345 = vmax.xlane.f32.xlu0 %v1344
      %v1346 = vpop.xlane.xlu0 %1345
      %v1347 = vsel %vm285, %v1328, -inf
      %1348 = vmax.xlane.f32.xlu0 %v1347
      %v1349 = vpop.xlane.xlu0 %1348
      %v1350 = vsel %vm285, %v1329, -inf
      %1351 = vmax.xlane.f32.xlu0 %v1350
      %v1352 = vpop.xlane.xlu0 %1351
      %v1353 = vsel %vm285, %v1330, -inf
      %1354 = vmax.xlane.f32.xlu0 %v1353
      %v1355 = vpop.xlane.xlu0 %1354
      %v1356 = vsel %vm285, %v1331, -inf
      %1357 = vmax.xlane.f32.xlu0 %v1356
      %v1358 = vpop.xlane.xlu0 %1357
      %v1359 = vsub.f32 %v1323, %v1334
      %v1360 = vsub.f32 %v1324, %v1337
      %v1361 = vsub.f32 %v1325, %v1340
      %v1362 = vsub.f32 %v1326, %v1343
      %v1363 = vsub.f32 %v1327, %v1346
      %v1364 = vsub.f32 %v1328, %v1349
      %v1365 = vsub.f32 %v1329, %v1352
      %v1366 = vsub.f32 %v1330, %v1355
      %v1367 = vsub.f32 %v1331, %v1358
      %v1368 = vmul.f32 %v1359, 1.442695
      %v1369 = vpow.pop %v1368
      %v1370 = vmul.f32 %v1360, 1.442695
      %v1371 = vpow.pop %v1370
      %v1372 = vmul.f32 %v1361, 1.442695
      %v1373 = vpow.pop %v1372
      %v1374 = vmul.f32 %v1362, 1.442695
      %v1375 = vpow.pop %v1374
      %v1376 = vmul.f32 %v1363, 1.442695
      %v1377 = vpow.pop %v1376
      %v1378 = vmul.f32 %v1364, 1.442695
      %v1379 = vpow.pop %v1378
      %v1380 = vmul.f32 %v1365, 1.442695
      %v1381 = vpow.pop %v1380
      %v1382 = vmul.f32 %v1366, 1.442695
      %v1383 = vpow.pop %v1382
      %v1384 = vmul.f32 %v1367, 1.442695
      %v1385 = vpow.pop %v1384
      %v1386 = vsel %vm285, %v1369, 0.0
      %1387 = vadd.xlane.f32.xlu0 %v1386
      %v1388 = vpop.xlane.xlu0 %1387
      %v1389 = vsel %vm285, %v1371, 0.0
      %1390 = vadd.xlane.f32.xlu0 %v1389
      %v1391 = vpop.xlane.xlu0 %1390
      %v1392 = vsel %vm285, %v1373, 0.0
      %1393 = vadd.xlane.f32.xlu0 %v1392
      %v1394 = vpop.xlane.xlu0 %1393
      %v1395 = vsel %vm285, %v1375, 0.0
      %1396 = vadd.xlane.f32.xlu0 %v1395
      %v1397 = vpop.xlane.xlu0 %1396
      %v1398 = vsel %vm285, %v1377, 0.0
      %1399 = vadd.xlane.f32.xlu0 %v1398
      %v1400 = vpop.xlane.xlu0 %1399
      %v1401 = vsel %vm285, %v1379, 0.0
      %1402 = vadd.xlane.f32.xlu0 %v1401
      %v1403 = vpop.xlane.xlu0 %1402
      %v1404 = vsel %vm285, %v1381, 0.0
      %1405 = vadd.xlane.f32.xlu0 %v1404
      %v1406 = vpop.xlane.xlu0 %1405
      %v1407 = vsel %vm285, %v1383, 0.0
      %1408 = vadd.xlane.f32.xlu0 %v1407
      %v1409 = vpop.xlane.xlu0 %1408
      %v1410 = vsel %vm285, %v1385, 0.0
      %1411 = vadd.xlane.f32.xlu0 %v1410
      %v1412 = vpop.xlane.xlu0 %1411
      %v1413 = vrcp.pop %v1388
      %v1414 = vrcp.pop %v1391
      %v1415 = vrcp.pop %v1394
      %v1416 = vrcp.pop %v1397
      %v1417 = vrcp.pop %v1400
      %v1418 = vrcp.pop %v1403
      %v1419 = vrcp.pop %v1406
      %v1420 = vrcp.pop %v1409
      %v1421 = vrcp.pop %v1412
      %v1422 = vmul.f32 %v1369, %v1413
      %v1423 = vmul.f32 %v1371, %v1414
      %v1424 = vmul.f32 %v1373, %v1415
      %v1425 = vmul.f32 %v1375, %v1416
      %v1426 = vmul.f32 %v1377, %v1417
      %v1427 = vmul.f32 %v1379, %v1418
      %v1428 = vmul.f32 %v1381, %v1419
      %v1429 = vmul.f32 %v1383, %v1420
      %v1430 = vmul.f32 %v1385, %v1421
      %v1431 = vpack.c.bf16 %v1423, %v1422
      %v1432 = vpack.c.bf16 %v1425, %v1424
      %v1433 = vpack.c.bf16 %v1427, %v1426
      %v1434 = vpack.c.bf16 %v1429, %v1428
      %v1435 = vpack.c.bf16 %v1430, %v1430
      %1436 = vrot.lane.b32.xlu0 %v159, 32
      %v1437 = vpop.permute.xlu0 %1436
      %1438 = vrot.lane.b32.xlu0 %v160, 32
      %v1439 = vpop.permute.xlu0 %1438
      %1440 = vrot.lane.b32.xlu0 %v161, 32
      %v1441 = vpop.permute.xlu0 %1440
      %1442 = vrot.lane.b32.xlu0 %v162, 32
      %v1443 = vpop.permute.xlu0 %1442
      %1444 = vrot.lane.b32.xlu0 %v163, 32
      %v1445 = vpop.permute.xlu0 %1444
      %v1451 = vsel %vm285, %v1431, 0
      %v1454 = vsel %vm285, %v1432, 0
      %v1457 = vsel %vm285, %v1433, 0
      %v1460 = vsel %vm285, %v1434, 0
      %v1463 = vsel %vm285, %v1435, 0
      %v1466 = vsel %vm405, %v1445, 0
      %1468 = vmatprep.subr.bf16.mxu0 0
      %1469 = vmatpush1.bf16.msra.mxu0 0
      %1470 = vmatprep.subr.bf16.mxu0 0
      %1471 = vmatpush1.bf16.msra.mxu0 0
      %1472 = vmatprep.subr.bf16.mxu0 0
      %1473 = vmatpush1.bf16.msra.mxu0 0
      %1474 = vmatprep.subr.bf16.mxu0 0
      %1475 = vmatpush1.bf16.msra.mxu0 %v1466
      %1476 = vmatprep.subr.bf16.mxu0 0
      %1477 = vmatpush1.bf16.msra.mxu0 %v1443
      %1478 = vmatprep.subr.bf16.mxu0 0
      %1479 = vmatpush1.bf16.msra.mxu0 %v1441
      %1480 = vmatprep.subr.bf16.mxu0 0
      %1481 = vmatpush1.bf16.msra.mxu0 %v1439
      %1482 = vmatprep.subr.bf16.mxu0 0
      %1483 = vmatpush1.bf16.msra.mxu0 %v1437
      %1484 = vmatprep.subr.bf16.mxu0 0
      %1485 = vmatpush2.bf16.msra.mxu0 0
      %1486 = vmatprep.subr.bf16.mxu0 0
      %1487 = vmatpush2.bf16.msra.mxu0 0
      %1488 = vmatprep.subr.bf16.mxu0 0
      %1489 = vmatpush2.bf16.msra.mxu0 0
      %1490 = vmatprep.subr.bf16.mxu0 0
      %1491 = vmatpush2.bf16.msra.mxu0 0
      %1492 = vmatprep.subr.bf16.mxu0 0
      %1493 = vmatpush2.bf16.msra.mxu0 0
      %1494 = vmatprep.subr.bf16.mxu0 0
      %1495 = vmatpush2.bf16.msra.mxu0 0
      %1496 = vmatprep.subr.bf16.mxu0 0
      %1497 = vmatpush2.bf16.msra.mxu0 0
      %1498 = vmatprep.subr.bf16.mxu0 0
      %1499 = vmatpush2.bf16.msra.mxu0 0
      %1500 = vmatprep.mubr.bf16.mxu0 0
      %1501 = vmatmul.mubr.bf16.gmra.mxu0 %v1451
      %v1502 = vpop.f32.mrf.mxu0
      %v1503 = vadd.f32 0.0, %v1502
      %v1504 = vpop.f32.mrf.mxu0
      %v1505 = vpop.f32.mrf.mxu0
      %v1506 = vadd.f32 0.0, %v1505
      %v1507 = vpop.f32.mrf.mxu0
      %1508 = vmatprep.mubr.bf16.mxu0 0
      %1509 = vmatmul.mubr.bf16.gmra.mxu0 %v1454
      %v1510 = vpop.f32.mrf.mxu0
      %v1511 = vadd.f32 0.0, %v1510
      %v1512 = vpop.f32.mrf.mxu0
      %v1513 = vpop.f32.mrf.mxu0
      %v1514 = vadd.f32 0.0, %v1513
      %v1515 = vpop.f32.mrf.mxu0
      %1516 = vmatprep.mubr.bf16.mxu0 0
      %1517 = vmatmul.mubr.bf16.gmra.mxu0 %v1457
      %v1518 = vpop.f32.mrf.mxu0
      %v1519 = vadd.f32 0.0, %v1518
      %v1520 = vpop.f32.mrf.mxu0
      %v1521 = vpop.f32.mrf.mxu0
      %v1522 = vadd.f32 0.0, %v1521
      %v1523 = vpop.f32.mrf.mxu0
      %1524 = vmatprep.mubr.bf16.mxu0 0
      %1525 = vmatmul.mubr.bf16.gmra.mxu0 %v1460
      %v1526 = vpop.f32.mrf.mxu0
      %v1527 = vadd.f32 0.0, %v1526
      %v1528 = vpop.f32.mrf.mxu0
      %v1529 = vpop.f32.mrf.mxu0
      %v1530 = vadd.f32 0.0, %v1529
      %v1531 = vpop.f32.mrf.mxu0
      %1532 = vmatprep.mubr.bf16.mxu0 0
      %1533 = vmatmul.mubr.bf16.gmra.mxu0 %v1463
      %v1534 = vpop.f32.mrf.mxu0
      %v1535 = vadd.f32 0.0, %v1534
      %v1536 = vpop.f32.mrf.mxu0
      %v1537 = vpop.f32.mrf.mxu0
      %v1538 = vpop.f32.mrf.mxu0
      %1539 = vdwg.mxu0
      %1549 = vrot.lane.b32.xlu0 %v807, 32
      %v1550 = vpop.permute.xlu0 %1549
      %1551 = vrot.lane.b32.xlu0 %v810, 32
      %v1552 = vpop.permute.xlu0 %1551
      %1553 = vrot.lane.b32.xlu0 %v815, 32
      %v1554 = vpop.permute.xlu0 %1553
      %1555 = vrot.lane.b32.xlu0 %v818, 32
      %v1556 = vpop.permute.xlu0 %1555
      %1557 = vrot.lane.b32.xlu0 %v823, 32
      %v1558 = vpop.permute.xlu0 %1557
      %1559 = vrot.lane.b32.xlu0 %v826, 32
      %v1560 = vpop.permute.xlu0 %1559
      %1561 = vrot.lane.b32.xlu0 %v831, 32
      %v1562 = vpop.permute.xlu0 %1561
      %1563 = vrot.lane.b32.xlu0 %v834, 32
      %v1564 = vpop.permute.xlu0 %1563
      %1565 = vrot.lane.b32.xlu0 %v839, 32
      %v1566 = vpop.permute.xlu0 %1565
      %1585 = vrot.lane.b32.xlu0 %v1155, 64
      %v1586 = vpop.permute.xlu0 %1585
      %1587 = vrot.lane.b32.xlu0 %v1158, 64
      %v1588 = vpop.permute.xlu0 %1587
      %1589 = vrot.lane.b32.xlu0 %v1163, 64
      %v1590 = vpop.permute.xlu0 %1589
      %1591 = vrot.lane.b32.xlu0 %v1166, 64
      %v1592 = vpop.permute.xlu0 %1591
      %1593 = vrot.lane.b32.xlu0 %v1171, 64
      %v1594 = vpop.permute.xlu0 %1593
      %1595 = vrot.lane.b32.xlu0 %v1174, 64
      %v1596 = vpop.permute.xlu0 %1595
      %1597 = vrot.lane.b32.xlu0 %v1179, 64
      %v1598 = vpop.permute.xlu0 %1597
      %1599 = vrot.lane.b32.xlu0 %v1182, 64
      %v1600 = vpop.permute.xlu0 %1599
      %1601 = vrot.lane.b32.xlu0 %v1187, 64
      %v1602 = vpop.permute.xlu0 %1601
      %1621 = vrot.lane.b32.xlu0 %v1503, 96
      %v1622 = vpop.permute.xlu0 %1621
      %1623 = vrot.lane.b32.xlu0 %v1506, 96
      %v1624 = vpop.permute.xlu0 %1623
      %1625 = vrot.lane.b32.xlu0 %v1511, 96
      %v1626 = vpop.permute.xlu0 %1625
      %1627 = vrot.lane.b32.xlu0 %v1514, 96
      %v1628 = vpop.permute.xlu0 %1627
      %1629 = vrot.lane.b32.xlu0 %v1519, 96
      %v1630 = vpop.permute.xlu0 %1629
      %1631 = vrot.lane.b32.xlu0 %v1522, 96
      %v1632 = vpop.permute.xlu0 %1631
      %1633 = vrot.lane.b32.xlu0 %v1527, 96
      %v1634 = vpop.permute.xlu0 %1633
      %1635 = vrot.lane.b32.xlu0 %v1530, 96
      %v1636 = vpop.permute.xlu0 %1635
      %1637 = vrot.lane.b32.xlu0 %v1535, 96
      %v1638 = vpop.permute.xlu0 %1637
      %v1648 = vsel %vm164, %v444, %v1550
      %v1649 = vsel %vm164, %v447, %v1552
      %v1650 = vsel %vm164, %v452, %v1554
      %v1651 = vsel %vm164, %v455, %v1556
      %v1652 = vsel %vm164, %v460, %v1558
      %v1653 = vsel %vm164, %v463, %v1560
      %v1654 = vsel %vm164, %v468, %v1562
      %v1655 = vsel %vm164, %v471, %v1564
      %v1656 = vsel %vm164, %v476, %v1566
      %vm1657 = vcmask 523264
      %v1658 = vsel %vm1657, %v1648, %v1586
      %v1659 = vsel %vm1657, %v1649, %v1588
      %v1660 = vsel %vm1657, %v1650, %v1590
      %v1661 = vsel %vm1657, %v1651, %v1592
      %v1662 = vsel %vm1657, %v1652, %v1594
      %v1663 = vsel %vm1657, %v1653, %v1596
      %v1664 = vsel %vm1657, %v1654, %v1598
      %v1665 = vsel %vm1657, %v1655, %v1600
      %v1666 = vsel %vm1657, %v1656, %v1602
      %vm1667 = vcmask 785408
      %v1668 = vsel %vm1667, %v1658, %v1622
      %v1669 = vsel %vm1667, %v1659, %v1624
      %v1670 = vsel %vm1667, %v1660, %v1626
      %v1671 = vsel %vm1667, %v1661, %v1628
      %v1672 = vsel %vm1667, %v1662, %v1630
      %v1673 = vsel %vm1667, %v1663, %v1632
      %v1674 = vsel %vm1667, %v1664, %v1634
      %v1675 = vsel %vm1667, %v1665, %v1636
      %v1676 = vsel %vm1667, %v1666, %v1638
      %1677 = vst [vmem:[%s116] sm:$0xff] %v1668
      %1678 = vst [vmem:[%s116 + $0x8] sm:$0xff] %v1669
      %1679 = vst [vmem:[%s116 + $0x10] sm:$0xff] %v1670
      %1680 = vst [vmem:[%s116 + $0x18] sm:$0xff] %v1671
      %1681 = vst [vmem:[%s116 + $0x20] sm:$0xff] %v1672
      %1682 = vst [vmem:[%s116 + $0x28] sm:$0xff] %v1673
      %1683 = vst [vmem:[%s116 + $0x30] sm:$0xff] %v1674
      %1684 = vst [vmem:[%s116 + $0x38] sm:$0xff] %v1675
      %1685 = vst [vmem:[%s116 + $0x40] sm:$0xff] %v1676
      %p1686 = scmp.lt.s32.totalorder %s12, 1
      %s1687 = scalar_select %p1686, %s12, 1
      %s1688 = smul.addr %s1687, 9
      %s1689 = smul.addr %s1688, 8
      %s1690 = scalar_lea.vmem %s1, %s1689
      // Predicated region
      $region25: #{_lambda_.12} parent=23 // pred_check
        %p1691 = pneg %p56
      $region26: #{_lambda_.12} parent=23 // pred_check_branch
        %1693 = sbr.rel (%p1691) target = $region28
      $region27: #{_lambda_.12} parent=23 // pred_region
        _
      $region28: #{_lambda_.12} parent=23 // pred_fallthru
        _
    $region24: #{_lambda_.12} parent=5 // pred_fallthru
      _
    %p1694 = scmp.le.s32.totalorder 2, %s7
    // Predicated region
    $region29: #{_lambda_.12} parent=5 // pred_check
      %p1695 = pneg %p1694
    $region30: #{_lambda_.12} parent=5 // pred_check_branch
      %1697 = sbr.rel (%p1695) target = $region32
    $region31: #{_lambda_.12} parent=5 // pred_region
      %s1698 = ssub.s32 %s7, 2
      // Predicated region
      $region33: #{_lambda_.12} parent=31 // pred_check
        %p1699 = pneg %p62
      $region34: #{_lambda_.12} parent=31 // pred_check_branch
        %1701 = sbr.rel (%p1699) target = $region36
      $region35: #{_lambda_.12} parent=31 // pred_region
        %p1702 = scmp.lt.s32.totalorder %s13, 1
        %s1703 = scalar_select %p1702, %s13, 1
        %s1704 = smul.addr %s1703, 9
        %s1705 = smul.addr %s1704, 8
        %s1706 = scalar_lea.vmem %s1, %s1705
      $region36: #{_lambda_.12} parent=31 // pred_fallthru
        _
    $region32: #{_lambda_.12} parent=5 // pred_fallthru
      _
  $region6: #{_lambda_.12} parent=0 // loop_footer
    %s11 = sadd.s32 1, %s7
  $region7: #{_lambda_.12} parent=0 // loop_footer_branch
    %6 = sbr.rel target = $region3
  $region8: #{_lambda_.12} parent=0 // loop_exit
    _

// kernel: _lambda_.19
$region0: #{_lambda_.19}
  #allocation0 [shape = 'u32[]', space=smem, size = 0x4, offset = 0x4, fixed_abs, tag = 'smem constant byte address 0x4 - core index']
  #allocation1 [shape = 'u32[144,128]{1,0:T(1,128)}', space=vmem, size = 0x12000, scoped, tag = 'internal scratch']
  %s0 = inlined_call_operand.vmem [shape: f32[8,128], index: 0, kind: input, shape index: {}]
  %s1 = inlined_call_operand.vmem [shape: f32[1,128], index: 1, kind: input, shape index: {}]
  %s2 = inlined_call_operand.vmem [shape: f32[1,128], index: 2, kind: input, shape index: {}]
  %s3 = inlined_call_operand.vmem [shape: bf16[128,2], index: 3, kind: input, shape index: {}]
  %s4 = inlined_call_operand.vmem [shape: f32[1,2], index: 4, kind: input, shape index: {}]
  %s5 = inlined_call_operand.vmem [shape: f32[8,2], index: 5, kind: output, shape index: {}]
  %s6 = sld [smem:[#allocation0]]
  $region30: #{_lambda_.19} parent=0
    _
  %s8 = ssub.s32 1, %s6
  %s9 = scalar_select 0, %s8, %s6
  // Predicated region
  $region2: #{_lambda_.19} parent=0 // pred_check
    _
  $region3: #{_lambda_.19} parent=0 // pred_check_branch
    %11 = sbr.rel (0) target = $region5
  $region4: #{_lambda_.19} parent=0 // pred_region
    _
  $region5: #{_lambda_.19} parent=0 // pred_fallthru
    _
  // Predicated region
  $region6: #{_lambda_.19} parent=0 // pred_check
    _
  $region7: #{_lambda_.19} parent=0 // pred_check_branch
    %13 = sbr.rel (0) target = $region9
  $region8: #{_lambda_.19} parent=0 // pred_region
    _
  $region9: #{_lambda_.19} parent=0 // pred_fallthru
    _
  // Predicated region
  $region10: #{_lambda_.19} parent=0 // pred_check
    _
  $region11: #{_lambda_.19} parent=0 // pred_check_branch
    %15 = sbr.rel (0) target = $region13
  $region12: #{_lambda_.19} parent=0 // pred_region
    _
  $region13: #{_lambda_.19} parent=0 // pred_fallthru
    _
  // Predicated region
  $region14: #{_lambda_.19} parent=0 // pred_check
    _
  $region15: #{_lambda_.19} parent=0 // pred_check_branch
    %17 = sbr.rel (0) target = $region17
  $region16: #{_lambda_.19} parent=0 // pred_region
    _
  $region17: #{_lambda_.19} parent=0 // pred_fallthru
    _
  // Predicated region
  $region18: #{_lambda_.19} parent=0 // pred_check
    _
  $region19: #{_lambda_.19} parent=0 // pred_check_branch
    %19 = sbr.rel (0) target = $region21
  $region20: #{_lambda_.19} parent=0 // pred_region
    _
  $region21: #{_lambda_.19} parent=0 // pred_fallthru
    _
  %v21 = vld [vmem:[%s0] sm:$0xff]
  %v22 = vld [vmem:[%s1] sm:$0x1]
  %v23 = vld [vmem:[%s2] sm:$0x1]
  %24 = vadd.xlane.f32.xlu0 %v21
  %v25 = vpop.xlane.xlu0 %24
  %v26 = vrcp.pop 128.0
  %v27 = vmul.f32 %v25, %v26
  %v28 = vsub.f32 %v21, %v27
  %v29 = vmul.f32 %v28, %v28
  %30 = vadd.xlane.f32.xlu0 %v29
  %v31 = vpop.xlane.xlu0 %30
  %v32 = vmul.f32 %v31, %v26
  %v33 = vadd.f32 %v32, 1e-06
  %v34 = vrsqrt.pop %v33
  %v35 = vmul.f32 %v28, %v34
  %v37 = vlaneseq
  %v38 = vshrl.u32 %v37, 7
  %v39 = vsub.s32 0, %v38
  %v40 = vrot.slane %v22, %v39
  %v42 = vmul.f32 %v35, %v40
  %v44 = vlaneseq
  %v45 = vshrl.u32 %v44, 7
  %v46 = vsub.s32 0, %v45
  %v47 = vrot.slane %v23, %v46
  %v49 = vadd.f32 %v42, %v47
  %v50 = vpack.c.bf16 %v49, %v49
  %v51 = vld [vmem:[%s3] sm:$0xf]
  %v52 = vld [vmem:[%s3 + $0x4] sm:$0xf]
  %v53 = vld [vmem:[%s3 + $0x8] sm:$0xf]
  %v54 = vld [vmem:[%s3 + $0xc] sm:$0xf]
  %v55 = vld [vmem:[%s3 + $0x10] sm:$0xf]
  %v56 = vld [vmem:[%s3 + $0x14] sm:$0xf]
  %v57 = vld [vmem:[%s3 + $0x18] sm:$0xf]
  %v58 = vld [vmem:[%s3 + $0x1c] sm:$0xf]
  %v59 = vld [vmem:[%s3 + $0x20] sm:$0xf]
  %v60 = vld [vmem:[%s3 + $0x24] sm:$0xf]
  %v61 = vld [vmem:[%s3 + $0x28] sm:$0xf]
  %v62 = vld [vmem:[%s3 + $0x2c] sm:$0xf]
  %v63 = vld [vmem:[%s3 + $0x30] sm:$0xf]
  %v64 = vld [vmem:[%s3 + $0x34] sm:$0xf]
  %v65 = vld [vmem:[%s3 + $0x38] sm:$0xf]
  %v66 = vld [vmem:[%s3 + $0x3c] sm:$0xf]
  %v67 = vld [vmem:[%s4] sm:$0x1]
  %v69 = vlaneseq
  %v70 = vshrl.u32 %v69, 7
  %v71 = vsub.s32 0, %v70
  %v72 = vrot.slane %v67, %v71
  %v90 = vunpack.c.l.b16 %v51
  %v91 = vunpack.c.l.b16 %v52
  %v92 = vunpack.c.l.b16 %v53
  %v93 = vunpack.c.l.b16 %v54
  %v94 = vunpack.c.l.b16 %v55
  %v95 = vunpack.c.l.b16 %v56
  %v96 = vunpack.c.l.b16 %v57
  %v97 = vunpack.c.l.b16 %v58
  %v98 = vunpack.c.l.b16 %v59
  %v99 = vunpack.c.l.b16 %v60
  %v100 = vunpack.c.l.b16 %v61
  %v101 = vunpack.c.l.b16 %v62
  %v102 = vunpack.c.l.b16 %v63
  %v103 = vunpack.c.l.b16 %v64
  %v104 = vunpack.c.l.b16 %v65
  %v105 = vunpack.c.l.b16 %v66
  %v106 = vpack.c.b16 %v91, %v90
  %v107 = vpack.c.b16 %v93, %v92
  %v108 = vpack.c.b16 %v95, %v94
  %v109 = vpack.c.b16 %v97, %v96
  %v110 = vpack.c.b16 %v99, %v98
  %v111 = vpack.c.b16 %v101, %v100
  %v112 = vpack.c.b16 %v103, %v102
  %v113 = vpack.c.b16 %v105, %v104
  %122 = vmatprep.subr.bf16.mxu0 0
  %123 = vmatpush1.bf16.msra.mxu0 %v113
  %124 = vmatprep.subr.bf16.mxu0 0
  %125 = vmatpush1.bf16.msra.mxu0 %v112
  %126 = vmatprep.subr.bf16.mxu0 0
  %127 = vmatpush1.bf16.msra.mxu0 %v111
  %128 = vmatprep.subr.bf16.mxu0 0
  %129 = vmatpush1.bf16.msra.mxu0 %v110
  %130 = vmatprep.subr.bf16.mxu0 0
  %131 = vmatpush1.bf16.msra.mxu0 %v109
  %132 = vmatprep.subr.bf16.mxu0 0
  %133 = vmatpush1.bf16.msra.mxu0 %v108
  %134 = vmatprep.subr.bf16.mxu0 0
  %135 = vmatpush1.bf16.msra.mxu0 %v107
  %136 = vmatprep.subr.bf16.mxu0 0
  %137 = vmatpush1.bf16.msra.mxu0 %v106
  %138 = vmatprep.subr.bf16.mxu0 0
  %139 = vmatpush2.bf16.msra.mxu0 0
  %140 = vmatprep.subr.bf16.mxu0 0
  %141 = vmatpush2.bf16.msra.mxu0 0
  %142 = vmatprep.subr.bf16.mxu0 0
  %143 = vmatpush2.bf16.msra.mxu0 0
  %144 = vmatprep.subr.bf16.mxu0 0
  %145 = vmatpush2.bf16.msra.mxu0 0
  %146 = vmatprep.subr.bf16.mxu0 0
  %147 = vmatpush2.bf16.msra.mxu0 0
  %148 = vmatprep.subr.bf16.mxu0 0
  %149 = vmatpush2.bf16.msra.mxu0 0
  %150 = vmatprep.subr.bf16.mxu0 0
  %151 = vmatpush2.bf16.msra.mxu0 0
  %152 = vmatprep.subr.bf16.mxu0 0
  %153 = vmatpush2.bf16.msra.mxu0 0
  %154 = vmatprep.mubr.bf16.mxu0 0
  %155 = vmatmul.mubr.bf16.gmra.mxu0 %v50
  %v156 = vpop.f32.mrf.mxu0
  %v157 = vadd.f32 %v72, %v156
  %v158 = vpop.f32.mrf.mxu0
  %v159 = vpop.f32.mrf.mxu0
  %v160 = vpop.f32.mrf.mxu0
  %161 = vdwg.mxu0
  %vm162 = vcmask 15360
  %163 = vst.msk [vmem:[%s5] sm:$0xff] %vm162, %v157
  // Predicated region
  $region22: #{_lambda_.19} parent=0 // pred_check
    _
  $region23: #{_lambda_.19} parent=0 // pred_check_branch
    %165 = sbr.rel (0) target = $region25
  $region24: #{_lambda_.19} parent=0 // pred_region
    _
  $region25: #{_lambda_.19} parent=0 // pred_fallthru
    _
  // Predicated region
  $region26: #{_lambda_.19} parent=0 // pred_check
    _
  $region27: #{_lambda_.19} parent=0 // pred_check_branch
    %167 = sbr.rel (0) target = $region29
  $region28: #{_lambda_.19} parent=0 // pred_region
    _
  $region29: #{_lambda_.19} parent=0 // pred_fallthru
    _

// kernel: _lambda_.14
$region0: #{_lambda_.14}
  #allocation0 [shape = 'u32[]', space=smem, size = 0x4, offset = 0x4, fixed_abs, tag = 'smem constant byte address 0x4 - core index']
  #allocation1 [shape = 'u32[144,128]{1,0:T(1,128)}', space=vmem, size = 0x12000, scoped, tag = 'internal scratch']
  %s0 = inlined_call_operand.vmem [shape: f32[144,128], index: 0, kind: input, shape index: {}]
  %s1 = inlined_call_operand.vmem [shape: f32[1,128], index: 1, kind: input, shape index: {}]
  %s2 = inlined_call_operand.vmem [shape: f32[1,128], index: 2, kind: input, shape index: {}]
  %s3 = inlined_call_operand.vmem [shape: bf16[128,256], index: 3, kind: input, shape index: {}]
  %s4 = inlined_call_operand.vmem [shape: f32[1,256], index: 4, kind: input, shape index: {}]
  %s5 = inlined_call_operand.vmem [shape: bf16[256,128], index: 5, kind: input, shape index: {}]
  %s6 = inlined_call_operand.vmem [shape: f32[1,128], index: 6, kind: input, shape index: {}]
  %s7 = inlined_call_operand.vmem [shape: f32[144,128], index: 7, kind: output, shape index: {}]
  %s8 = sld [smem:[#allocation0]]
  $region61: #{_lambda_.14} parent=0
    _
  %s10 = ssub.s32 1, %s8
  %s11 = scalar_select 0, %s10, %s8
  loop: start=0, step=1, limit=4
  $region2: #{_lambda_.14} parent=0 // loop_pre_header
    _
  $region3: #{_lambda_.14} parent=0 // loop_header
    %s13 = sphi 0, %s17
    %p14 = scmp.ge.s32.totalorder %s13, 4
    %s23 = sphi 0, %s25
    %s26 = sphi 0, %s23
    %s27 = sphi 0, %s26
    %s43 = sphi 0, %s27
    %s47 = sphi 0, %s47
    %s49 = sphi 0, %s47
    %s50 = sphi 0, %s49
    %s64 = sphi 0, %s50
    %s68 = sphi 0, %s68
    %s70 = sphi 0, %s68
    %s71 = sphi 0, %s70
    %s85 = sphi 0, %s71
    %s89 = sphi 0, %s89
    %s91 = sphi 0, %s89
    %s92 = sphi 0, %s91
    %s106 = sphi 0, %s92
    %s110 = sphi 0, %s110
    %s112 = sphi 0, %s110
    %s113 = sphi 0, %s112
    %s127 = sphi 0, %s113
    %s131 = sphi 0, %s131
    %s133 = sphi 0, %s131
    %s134 = sphi 0, %s133
    %s148 = sphi 0, %s134
    %s152 = sphi 0, %s152
    %s154 = sphi 0, %s152
    %s155 = sphi 0, %s154
    %s169 = sphi 0, %s155
    %s175 = sphi 0, %s177
    %s178 = sphi 0, %s175
    %s179 = sphi 0, %s178
    %s195 = sphi 0, %s179
  $region4: #{_lambda_.14} parent=0 // loop_header_branch
    %16 = sbr.rel (%p14) target = $region8
  $region5: #{_lambda_.14} parent=0 // loop_body
    %s18 = ssub.s32 %s13, 1
    %s19 = ssub.s32 %s13, 2
    %s20 = sadd.s32 %s13, 1
    %s21 = ssub.s32 %s13, %s20
    %p22 = scmp.eq.s32.totalorder %s21, 0
    %s24 = sadd.s32 %s23, 1
    %s25 = scalar_select %p22, %s23, %s24
    %p28 = pneg %p22
    %p29 = scmp.eq.s32.totalorder %s13, 1
    %p30 = por %p28, %p29
    %p31 = scmp.ne.s32.totalorder %s23, %s26
    %p32 = scmp.eq.s32.totalorder %s13, 0
    %p33 = por %p31, %p32
    %p34 = scmp.ne.s32.totalorder %s23, %s26
    %p35 = scmp.eq.s32.totalorder %s18, 1
    %p36 = por %p34, %p35
    %p37 = scmp.ne.s32.totalorder %s26, %s27
    %p38 = scmp.eq.s32.totalorder %s18, 0
    %p39 = por %p37, %p38
    %p40 = scmp.ne.s32.totalorder %s26, %s27
    %p41 = scmp.eq.s32.totalorder %s19, 1
    %p42 = por %p40, %p41
    %p44 = scmp.ne.s32.totalorder %s27, %s43
    %p45 = scmp.eq.s32.totalorder %s19, 0
    %p46 = por %p44, %p45
    %s48 = sadd.s32 %s47, 1
    %p51 = scmp.eq.s32.totalorder %s13, 1
    %p52 = scmp.ne.s32.totalorder %s47, %s49
    %p53 = scmp.eq.s32.totalorder %s13, 0
    %p54 = por %p52, %p53
    %p55 = scmp.ne.s32.totalorder %s47, %s49
    %p56 = scmp.eq.s32.totalorder %s18, 1
    %p57 = por %p55, %p56
    %p58 = scmp.ne.s32.totalorder %s49, %s50
    %p59 = scmp.eq.s32.totalorder %s18, 0
    %p60 = por %p58, %p59
    %p61 = scmp.ne.s32.totalorder %s49, %s50
    %p62 = scmp.eq.s32.totalorder %s19, 1
    %p63 = por %p61, %p62
    %p65 = scmp.ne.s32.totalorder %s50, %s64
    %p66 = scmp.eq.s32.totalorder %s19, 0
    %p67 = por %p65, %p66
    %s69 = sadd.s32 %s68, 1
    %p72 = scmp.eq.s32.totalorder %s13, 1
    %p73 = scmp.ne.s32.totalorder %s68, %s70
    %p74 = scmp.eq.s32.totalorder %s13, 0
    %p75 = por %p73, %p74
    %p76 = scmp.ne.s32.totalorder %s68, %s70
    %p77 = scmp.eq.s32.totalorder %s18, 1
    %p78 = por %p76, %p77
    %p79 = scmp.ne.s32.totalorder %s70, %s71
    %p80 = scmp.eq.s32.totalorder %s18, 0
    %p81 = por %p79, %p80
    %p82 = scmp.ne.s32.totalorder %s70, %s71
    %p83 = scmp.eq.s32.totalorder %s19, 1
    %p84 = por %p82, %p83
    %p86 = scmp.ne.s32.totalorder %s71, %s85
    %p87 = scmp.eq.s32.totalorder %s19, 0
    %p88 = por %p86, %p87
    %s90 = sadd.s32 %s89, 1
    %p93 = scmp.eq.s32.totalorder %s13, 1
    %p94 = scmp.ne.s32.totalorder %s89, %s91
    %p95 = scmp.eq.s32.totalorder %s13, 0
    %p96 = por %p94, %p95
    %p97 = scmp.ne.s32.totalorder %s89, %s91
    %p98 = scmp.eq.s32.totalorder %s18, 1
    %p99 = por %p97, %p98
    %p100 = scmp.ne.s32.totalorder %s91, %s92
    %p101 = scmp.eq.s32.totalorder %s18, 0
    %p102 = por %p100, %p101
    %p103 = scmp.ne.s32.totalorder %s91, %s92
    %p104 = scmp.eq.s32.totalorder %s19, 1
    %p105 = por %p103, %p104
    %p107 = scmp.ne.s32.totalorder %s92, %s106
    %p108 = scmp.eq.s32.totalorder %s19, 0
    %p109 = por %p107, %p108
    %s111 = sadd.s32 %s110, 1
    %p114 = scmp.eq.s32.totalorder %s13, 1
    %p115 = scmp.ne.s32.totalorder %s110, %s112
    %p116 = scmp.eq.s32.totalorder %s13, 0
    %p117 = por %p115, %p116
    %p118 = scmp.ne.s32.totalorder %s110, %s112
    %p119 = scmp.eq.s32.totalorder %s18, 1
    %p120 = por %p118, %p119
    %p121 = scmp.ne.s32.totalorder %s112, %s113
    %p122 = scmp.eq.s32.totalorder %s18, 0
    %p123 = por %p121, %p122
    %p124 = scmp.ne.s32.totalorder %s112, %s113
    %p125 = scmp.eq.s32.totalorder %s19, 1
    %p126 = por %p124, %p125
    %p128 = scmp.ne.s32.totalorder %s113, %s127
    %p129 = scmp.eq.s32.totalorder %s19, 0
    %p130 = por %p128, %p129
    %s132 = sadd.s32 %s131, 1
    %p135 = scmp.eq.s32.totalorder %s13, 1
    %p136 = scmp.ne.s32.totalorder %s131, %s133
    %p137 = scmp.eq.s32.totalorder %s13, 0
    %p138 = por %p136, %p137
    %p139 = scmp.ne.s32.totalorder %s131, %s133
    %p140 = scmp.eq.s32.totalorder %s18, 1
    %p141 = por %p139, %p140
    %p142 = scmp.ne.s32.totalorder %s133, %s134
    %p143 = scmp.eq.s32.totalorder %s18, 0
    %p144 = por %p142, %p143
    %p145 = scmp.ne.s32.totalorder %s133, %s134
    %p146 = scmp.eq.s32.totalorder %s19, 1
    %p147 = por %p145, %p146
    %p149 = scmp.ne.s32.totalorder %s134, %s148
    %p150 = scmp.eq.s32.totalorder %s19, 0
    %p151 = por %p149, %p150
    %s153 = sadd.s32 %s152, 1
    %p156 = scmp.eq.s32.totalorder %s13, 1
    %p157 = scmp.ne.s32.totalorder %s152, %s154
    %p158 = scmp.eq.s32.totalorder %s13, 0
    %p159 = por %p157, %p158
    %p160 = scmp.ne.s32.totalorder %s152, %s154
    %p161 = scmp.eq.s32.totalorder %s18, 1
    %p162 = por %p160, %p161
    %p163 = scmp.ne.s32.totalorder %s154, %s155
    %p164 = scmp.eq.s32.totalorder %s18, 0
    %p165 = por %p163, %p164
    %p166 = scmp.ne.s32.totalorder %s154, %s155
    %p167 = scmp.eq.s32.totalorder %s19, 1
    %p168 = por %p166, %p167
    %p170 = scmp.ne.s32.totalorder %s155, %s169
    %p171 = scmp.eq.s32.totalorder %s19, 0
    %p172 = por %p170, %p171
    %s173 = ssub.s32 %s13, %s20
    %p174 = scmp.eq.s32.totalorder %s173, 0
    %s176 = sadd.s32 %s175, 1
    %s177 = scalar_select %p174, %s175, %s176
    %p180 = pneg %p174
    %p181 = scmp.eq.s32.totalorder %s13, 1
    %p182 = por %p180, %p181
    %p183 = scmp.ne.s32.totalorder %s175, %s178
    %p184 = scmp.eq.s32.totalorder %s13, 0
    %p185 = por %p183, %p184
    %p186 = scmp.ne.s32.totalorder %s175, %s178
    %p187 = scmp.eq.s32.totalorder %s18, 1
    %p188 = por %p186, %p187
    %p189 = scmp.ne.s32.totalorder %s178, %s179
    %p190 = scmp.eq.s32.totalorder %s18, 0
    %p191 = por %p189, %p190
    %p192 = scmp.ne.s32.totalorder %s178, %s179
    %p193 = scmp.eq.s32.totalorder %s19, 1
    %p194 = por %p192, %p193
    %p196 = scmp.ne.s32.totalorder %s179, %s195
    %p197 = scmp.eq.s32.totalorder %s19, 0
    %p198 = por %p196, %p197
    %p199 = scmp.le.s32.totalorder 1, %s13
    %p200 = scmp.lt.s32.totalorder %s13, 3
    %p201 = pnand %p199, %p200
    %p202 = pneg %p201
    // Predicated region
    $region9: #{_lambda_.14} parent=5 // pred_check
      _
    $region10: #{_lambda_.14} parent=5 // pred_check_branch
      %204 = sbr.rel (%p201) target = $region12
    $region11: #{_lambda_.14} parent=5 // pred_region
      %s205 = ssub.s32 %s13, 1
      // Predicated region
      $region13: #{_lambda_.14} parent=11 // pred_check
        %p206 = pneg %p60
      $region14: #{_lambda_.14} parent=11 // pred_check_branch
        %208 = sbr.rel (%p206) target = $region16
      $region15: #{_lambda_.14} parent=11 // pred_region
        _
      $region16: #{_lambda_.14} parent=11 // pred_fallthru
        _
      // Predicated region
      $region17: #{_lambda_.14} parent=11 // pred_check
        %p209 = pneg %p81
      $region18: #{_lambda_.14} parent=11 // pred_check_branch
        %211 = sbr.rel (%p209) target = $region20
      $region19: #{_lambda_.14} parent=11 // pred_region
        _
      $region20: #{_lambda_.14} parent=11 // pred_fallthru
        _
      // Predicated region
      $region21: #{_lambda_.14} parent=11 // pred_check
        %p212 = pneg %p102
      $region22: #{_lambda_.14} parent=11 // pred_check_branch
        %214 = sbr.rel (%p212) target = $region24
      $region23: #{_lambda_.14} parent=11 // pred_region
        _
      $region24: #{_lambda_.14} parent=11 // pred_fallthru
        _
      // Predicated region
      $region25: #{_lambda_.14} parent=11 // pred_check
        %p215 = pneg %p123
      $region26: #{_lambda_.14} parent=11 // pred_check_branch
        %217 = sbr.rel (%p215) target = $region28
      $region27: #{_lambda_.14} parent=11 // pred_region
        _
      $region28: #{_lambda_.14} parent=11 // pred_fallthru
        _
      // Predicated region
      $region29: #{_lambda_.14} parent=11 // pred_check
        %p218 = pneg %p144
      $region30: #{_lambda_.14} parent=11 // pred_check_branch
        %220 = sbr.rel (%p218) target = $region32
      $region31: #{_lambda_.14} parent=11 // pred_region
        _
      $region32: #{_lambda_.14} parent=11 // pred_fallthru
        _
      // Predicated region
      $region33: #{_lambda_.14} parent=11 // pred_check
        %p221 = pneg %p165
      $region34: #{_lambda_.14} parent=11 // pred_check_branch
        %223 = sbr.rel (%p221) target = $region36
      $region35: #{_lambda_.14} parent=11 // pred_region
        _
      $region36: #{_lambda_.14} parent=11 // pred_fallthru
        _
    $region12: #{_lambda_.14} parent=5 // pred_fallthru
      _
    %p224 = scmp.lt.s32.totalorder %s13, 2
    // Predicated region
    $region37: #{_lambda_.14} parent=5 // pred_check
      %p225 = pneg %p224
    $region38: #{_lambda_.14} parent=5 // pred_check_branch
      %227 = sbr.rel (%p225) target = $region40
    $region39: #{_lambda_.14} parent=5 // pred_region
      // Predicated region
      $region41: #{_lambda_.14} parent=39 // pred_check
        %p228 = pneg %p33
      $region42: #{_lambda_.14} parent=39 // pred_check_branch
        %230 = sbr.rel (%p228) target = $region44
      $region43: #{_lambda_.14} parent=39 // pred_region
        %s231 = smul.u32 9, %s13
        %p232 = scmp.lt.s32.totalorder %s231, 17
        %s233 = scalar_select %p232, %s231, 17
        %s234 = smul.addr %s233, 8
        %s235 = scalar_lea.vmem %s0, %s234
        %s236 = smul.u32 9, %s13
      $region44: #{_lambda_.14} parent=39 // pred_fallthru
        _
    $region40: #{_lambda_.14} parent=5 // pred_fallthru
      _
    %p237 = scmp.le.s32.totalorder 1, %s13
    %p238 = scmp.lt.s32.totalorder %s13, 3
    %p239 = pnand %p237, %p238
    %p240 = pneg %p239
    // Predicated region
    $region45: #{_lambda_.14} parent=5 // pred_check
      _
    $region46: #{_lambda_.14} parent=5 // pred_check_branch
      %242 = sbr.rel (%p239) target = $region48
    $region47: #{_lambda_.14} parent=5 // pred_region
      %s243 = ssub.s32 %s13, 1
      %s244 = smul.u32 9, %s18
      %p245 = scmp.lt.s32.totalorder %s244, 17
      %s246 = scalar_select %p245, %s244, 17
      %s247 = smul.addr %s246, 8
      %s248 = scalar_lea.vmem %s0, %s247
      %p249 = pneg %p39
      %p250 = pneg %p36
      %p251 = pneg %p60
      %p252 = pneg %p57
      %p253 = pneg %p81
      %p254 = pneg %p78
      %p255 = pneg %p102
      %p256 = pneg %p99
      %p257 = pneg %p123
      %p258 = pneg %p120
      %p259 = pneg %p144
      %p260 = pneg %p141
      %p261 = pneg %p165
      %p262 = pneg %p162
      %p263 = pneg %p191
      %p264 = pneg %p188
      %s265 = smul.u32 9, %s18
      %p266 = scmp.lt.s32.totalorder %s265, 17
      %s267 = scalar_select %p266, %s265, 17
      %s268 = smul.addr %s267, 8
      %s269 = scalar_lea.vmem %s7, %s268
      %s270 = smul.u32 9, %s18
      %p271 = scmp.lt.s32.totalorder %s270, 17
      %s272 = scalar_select %p271, %s270, 17
      %s273 = smul.addr %s272, 8
      %s274 = scalar_lea.vmem %s0, %s273
      %s275 = smul.u32 9, %s18
      %s276 = smul.u32 9, %s18
      %p277 = scmp.lt.s32.totalorder %s276, 17
      %s278 = scalar_select %p277, %s276, 17
      %s279 = smul.addr %s278, 8
      %s280 = scalar_lea.vmem %s7, %s279
      %s281 = smul.u32 9, %s18
      %v283 = vld [vmem:[%s274] sm:$0xff]
      %v284 = vld [vmem:[%s274 + $0x8] sm:$0xff]
      %v285 = vld [vmem:[%s274 + $0x10] sm:$0xff]
      %v286 = vld [vmem:[%s274 + $0x18] sm:$0xff]
      %v287 = vld [vmem:[%s274 + $0x20] sm:$0xff]
      %v288 = vld [vmem:[%s274 + $0x28] sm:$0xff]
      %v289 = vld [vmem:[%s274 + $0x30] sm:$0xff]
      %v290 = vld [vmem:[%s274 + $0x38] sm:$0xff]
      %v291 = vld [vmem:[%s274 + $0x40] sm:$0xff]
      %v292 = vld [vmem:[%s1] sm:$0x1]
      %v293 = vld [vmem:[%s2] sm:$0x1]
      %294 = vadd.xlane.f32.xlu0 %v283
      %v295 = vpop.xlane.xlu0 %294
      %296 = vadd.xlane.f32.xlu0 %v284
      %v297 = vpop.xlane.xlu0 %296
      %298 = vadd.xlane.f32.xlu0 %v285
      %v299 = vpop.xlane.xlu0 %298
      %300 = vadd.xlane.f32.xlu0 %v286
      %v301 = vpop.xlane.xlu0 %300
      %302 = vadd.xlane.f32.xlu0 %v287
      %v303 = vpop.xlane.xlu0 %302
      %304 = vadd.xlane.f32.xlu0 %v288
      %v305 = vpop.xlane.xlu0 %304
      %306 = vadd.xlane.f32.xlu0 %v289
      %v307 = vpop.xlane.xlu0 %306
      %308 = vadd.xlane.f32.xlu0 %v290
      %v309 = vpop.xlane.xlu0 %308
      %310 = vadd.xlane.f32.xlu0 %v291
      %v311 = vpop.xlane.xlu0 %310
      %v312 = vrcp.pop 128.0
      %v313 = vmul.f32 %v295, %v312
      %v314 = vmul.f32 %v297, %v312
      %v315 = vmul.f32 %v299, %v312
      %v316 = vmul.f32 %v301, %v312
      %v317 = vmul.f32 %v303, %v312
      %v318 = vmul.f32 %v305, %v312
      %v319 = vmul.f32 %v307, %v312
      %v320 = vmul.f32 %v309, %v312
      %v321 = vmul.f32 %v311, %v312
      %v322 = vsub.f32 %v283, %v313
      %v323 = vsub.f32 %v284, %v314
      %v324 = vsub.f32 %v285, %v315
      %v325 = vsub.f32 %v286, %v316
      %v326 = vsub.f32 %v287, %v317
      %v327 = vsub.f32 %v288, %v318
      %v328 = vsub.f32 %v289, %v319
      %v329 = vsub.f32 %v290, %v320
      %v330 = vsub.f32 %v291, %v321
      %v331 = vmul.f32 %v322, %v322
      %v332 = vmul.f32 %v323, %v323
      %v333 = vmul.f32 %v324, %v324
      %v334 = vmul.f32 %v325, %v325
      %v335 = vmul.f32 %v326, %v326
      %v336 = vmul.f32 %v327, %v327
      %v337 = vmul.f32 %v328, %v328
      %v338 = vmul.f32 %v329, %v329
      %v339 = vmul.f32 %v330, %v330
      %340 = vadd.xlane.f32.xlu0 %v331
      %v341 = vpop.xlane.xlu0 %340
      %342 = vadd.xlane.f32.xlu0 %v332
      %v343 = vpop.xlane.xlu0 %342
      %344 = vadd.xlane.f32.xlu0 %v333
      %v345 = vpop.xlane.xlu0 %344
      %346 = vadd.xlane.f32.xlu0 %v334
      %v347 = vpop.xlane.xlu0 %346
      %348 = vadd.xlane.f32.xlu0 %v335
      %v349 = vpop.xlane.xlu0 %348
      %350 = vadd.xlane.f32.xlu0 %v336
      %v351 = vpop.xlane.xlu0 %350
      %352 = vadd.xlane.f32.xlu0 %v337
      %v353 = vpop.xlane.xlu0 %352
      %354 = vadd.xlane.f32.xlu0 %v338
      %v355 = vpop.xlane.xlu0 %354
      %356 = vadd.xlane.f32.xlu0 %v339
      %v357 = vpop.xlane.xlu0 %356
      %v358 = vmul.f32 %v341, %v312
      %v359 = vmul.f32 %v343, %v312
      %v360 = vmul.f32 %v345, %v312
      %v361 = vmul.f32 %v347, %v312
      %v362 = vmul.f32 %v349, %v312
      %v363 = vmul.f32 %v351, %v312
      %v364 = vmul.f32 %v353, %v312
      %v365 = vmul.f32 %v355, %v312
      %v366 = vmul.f32 %v357, %v312
      %v367 = vadd.f32 %v358, 1e-06
      %v368 = vadd.f32 %v359, 1e-06
      %v369 = vadd.f32 %v360, 1e-06
      %v370 = vadd.f32 %v361, 1e-06
      %v371 = vadd.f32 %v362, 1e-06
      %v372 = vadd.f32 %v363, 1e-06
      %v373 = vadd.f32 %v364, 1e-06
      %v374 = vadd.f32 %v365, 1e-06
      %v375 = vadd.f32 %v366, 1e-06
      %v376 = vrsqrt.pop %v367
      %v377 = vrsqrt.pop %v368
      %v378 = vrsqrt.pop %v369
      %v379 = vrsqrt.pop %v370
      %v380 = vrsqrt.pop %v371
      %v381 = vrsqrt.pop %v372
      %v382 = vrsqrt.pop %v373
      %v383 = vrsqrt.pop %v374
      %v384 = vrsqrt.pop %v375
      %v385 = vmul.f32 %v322, %v376
      %v386 = vmul.f32 %v323, %v377
      %v387 = vmul.f32 %v324, %v378
      %v388 = vmul.f32 %v325, %v379
      %v389 = vmul.f32 %v326, %v380
      %v390 = vmul.f32 %v327, %v381
      %v391 = vmul.f32 %v328, %v382
      %v392 = vmul.f32 %v329, %v383
      %v393 = vmul.f32 %v330, %v384
      %v395 = vlaneseq
      %v396 = vshrl.u32 %v395, 7
      %v397 = vsub.s32 0, %v396
      %v398 = vrot.slane %v292, %v397
      %v400 = vmul.f32 %v385, %v398
      %v401 = vmul.f32 %v386, %v398
      %v402 = vmul.f32 %v387, %v398
      %v403 = vmul.f32 %v388, %v398
      %v404 = vmul.f32 %v389, %v398
      %v405 = vmul.f32 %v390, %v398
      %v406 = vmul.f32 %v391, %v398
      %v407 = vmul.f32 %v392, %v398
      %v408 = vmul.f32 %v393, %v398
      %v410 = vlaneseq
      %v411 = vshrl.u32 %v410, 7
      %v412 = vsub.s32 0, %v411
      %v413 = vrot.slane %v293, %v412
      %v415 = vadd.f32 %v400, %v413
      %v416 = vadd.f32 %v401, %v413
      %v417 = vadd.f32 %v402, %v413
      %v418 = vadd.f32 %v403, %v413
      %v419 = vadd.f32 %v404, %v413
      %v420 = vadd.f32 %v405, %v413
      %v421 = vadd.f32 %v406, %v413
      %v422 = vadd.f32 %v407, %v413
      %v423 = vadd.f32 %v408, %v413
      %v424 = vpack.c.bf16 %v416, %v415
      %v425 = vpack.c.bf16 %v418, %v417
      %v426 = vpack.c.bf16 %v420, %v419
      %v427 = vpack.c.bf16 %v422, %v421
      %v428 = vpack.c.bf16 %v423, %v423
      %v429 = vld [vmem:[%s3] sm:$0xff]
      %v430 = vld [vmem:[%s3 + $0x8] sm:$0xff]
      %v431 = vld [vmem:[%s3 + $0x10] sm:$0xff]
      %v432 = vld [vmem:[%s3 + $0x18] sm:$0xff]
      %v433 = vld [vmem:[%s3 + $0x20] sm:$0xff]
      %v434 = vld [vmem:[%s3 + $0x28] sm:$0xff]
      %v435 = vld [vmem:[%s3 + $0x30] sm:$0xff]
      %v436 = vld [vmem:[%s3 + $0x38] sm:$0xff]
      %v437 = vld [vmem:[%s3 + $0x40] sm:$0xff]
      %v438 = vld [vmem:[%s3 + $0x48] sm:$0xff]
      %v439 = vld [vmem:[%s3 + $0x50] sm:$0xff]
      %v440 = vld [vmem:[%s3 + $0x58] sm:$0xff]
      %v441 = vld [vmem:[%s3 + $0x60] sm:$0xff]
      %v442 = vld [vmem:[%s3 + $0x68] sm:$0xff]
      %v443 = vld [vmem:[%s3 + $0x70] sm:$0xff]
      %v444 = vld [vmem:[%s3 + $0x78] sm:$0xff]
      %v445 = vld [vmem:[%s4] sm:$0x3]
      %v447 = vlaneseq
      %v448 = vshrl.u32 %v447, 7
      %v449 = vsub.s32 0, %v448
      %v450 = vrot.slane %v445, %v449
      %v451 = vlaneseq
      %v452 = vshrl.u32 %v451, 7
      %v453 = vsub.s32 1, %v452
      %v454 = vrot.slane %v445, %v453
      %v473 = vunpack.c.l.b16 %v429
      %v474 = vunpack.c.h.b16 %v429
      %v475 = vunpack.c.l.b16 %v430
      %v476 = vunpack.c.h.b16 %v430
      %v477 = vunpack.c.l.b16 %v431
      %v478 = vunpack.c.h.b16 %v431
      %v479 = vunpack.c.l.b16 %v432
      %v480 = vunpack.c.h.b16 %v432
      %v481 = vunpack.c.l.b16 %v433
      %v482 = vunpack.c.h.b16 %v433
      %v483 = vunpack.c.l.b16 %v434
      %v484 = vunpack.c.h.b16 %v434
      %v485 = vunpack.c.l.b16 %v435
      %v486 = vunpack.c.h.b16 %v435
      %v487 = vunpack.c.l.b16 %v436
      %v488 = vunpack.c.h.b16 %v436
      %v489 = vunpack.c.l.b16 %v437
      %v490 = vunpack.c.h.b16 %v437
      %v491 = vunpack.c.l.b16 %v438
      %v492 = vunpack.c.h.b16 %v438
      %v493 = vunpack.c.l.b16 %v439
      %v494 = vunpack.c.h.b16 %v439
      %v495 = vunpack.c.l.b16 %v440
      %v496 = vunpack.c.h.b16 %v440
      %v497 = vunpack.c.l.b16 %v441
      %v498 = vunpack.c.h.b16 %v441
      %v499 = vunpack.c.l.b16 %v442
      %v500 = vunpack.c.h.b16 %v442
      %v501 = vunpack.c.l.b16 %v443
      %v502 = vunpack.c.h.b16 %v443
      %v503 = vunpack.c.l.b16 %v444
      %v504 = vunpack.c.h.b16 %v444
      %v505 = vpack.c.b16 %v475, %v473
      %v506 = vpack.c.b16 %v476, %v474
      %v507 = vpack.c.b16 %v479, %v477
      %v508 = vpack.c.b16 %v480, %v478
      %v509 = vpack.c.b16 %v483, %v481
      %v510 = vpack.c.b16 %v484, %v482
      %v511 = vpack.c.b16 %v487, %v485
      %v512 = vpack.c.b16 %v488, %v486
      %v513 = vpack.c.b16 %v491, %v489
      %v514 = vpack.c.b16 %v492, %v490
      %v515 = vpack.c.b16 %v495, %v493
      %v516 = vpack.c.b16 %v496, %v494
      %v517 = vpack.c.b16 %v499, %v497
      %v518 = vpack.c.b16 %v500, %v498
      %v519 = vpack.c.b16 %v503, %v501
      %v520 = vpack.c.b16 %v504, %v502
      %537 = vmatprep.subr.bf16.mxu0 %v520
      %538 = vmatpush1.bf16.msra.mxu0 %v519
      %539 = vmatprep.subr.bf16.mxu0 %v518
      %540 = vmatpush1.bf16.msra.mxu0 %v517
      %541 = vmatprep.subr.bf16.mxu0 %v516
      %542 = vmatpush1.bf16.msra.mxu0 %v515
      %543 = vmatprep.subr.bf16.mxu0 %v514
      %544 = vmatpush1.bf16.msra.mxu0 %v513
      %545 = vmatprep.subr.bf16.mxu0 %v512
      %546 = vmatpush1.bf16.msra.mxu0 %v511
      %547 = vmatprep.subr.bf16.mxu0 %v510
      %548 = vmatpush1.bf16.msra.mxu0 %v509
      %549 = vmatprep.subr.bf16.mxu0 %v508
      %550 = vmatpush1.bf16.msra.mxu0 %v507
      %551 = vmatprep.subr.bf16.mxu0 %v506
      %552 = vmatpush1.bf16.msra.mxu0 %v505
      %553 = vmatprep.subr.bf16.mxu0 0
      %554 = vmatpush2.bf16.msra.mxu0 0
      %555 = vmatprep.subr.bf16.mxu0 0
      %556 = vmatpush2.bf16.msra.mxu0 0
      %557 = vmatprep.subr.bf16.mxu0 0
      %558 = vmatpush2.bf16.msra.mxu0 0
      %559 = vmatprep.subr.bf16.mxu0 0
      %560 = vmatpush2.bf16.msra.mxu0 0
      %561 = vmatprep.subr.bf16.mxu0 0
      %562 = vmatpush2.bf16.msra.mxu0 0
      %563 = vmatprep.subr.bf16.mxu0 0
      %564 = vmatpush2.bf16.msra.mxu0 0
      %565 = vmatprep.subr.bf16.mxu0 0
      %566 = vmatpush2.bf16.msra.mxu0 0
      %567 = vmatprep.subr.bf16.mxu0 0
      %568 = vmatpush2.bf16.msra.mxu0 0
      %569 = vmatprep.mubr.bf16.mxu0 0
      %570 = vmatmul.mubr.bf16.gmra.mxu0 %v424
      %v571 = vpop.f32.mrf.mxu0
      %v572 = vadd.f32 %v450, %v571
      %v573 = vpop.f32.mrf.mxu0
      %v574 = vadd.f32 %v454, %v573
      %v575 = vpop.f32.mrf.mxu0
      %v576 = vadd.f32 %v450, %v575
      %v577 = vpop.f32.mrf.mxu0
      %v578 = vadd.f32 %v454, %v577
      %579 = vmatprep.mubr.bf16.mxu0 0
      %580 = vmatmul.mubr.bf16.gmra.mxu0 %v425
      %v581 = vpop.f32.mrf.mxu0
      %v582 = vadd.f32 %v450, %v581
      %v583 = vpop.f32.mrf.mxu0
      %v584 = vadd.f32 %v454, %v583
      %v585 = vpop.f32.mrf.mxu0
      %v586 = vadd.f32 %v450, %v585
      %v587 = vpop.f32.mrf.mxu0
      %v588 = vadd.f32 %v454, %v587
      %589 = vmatprep.mubr.bf16.mxu0 0
      %590 = vmatmul.mubr.bf16.gmra.mxu0 %v426
      %v591 = vpop.f32.mrf.mxu0
      %v592 = vadd.f32 %v450, %v591
      %v593 = vpop.f32.mrf.mxu0
      %v594 = vadd.f32 %v454, %v593
      %v595 = vpop.f32.mrf.mxu0
      %v596 = vadd.f32 %v450, %v595
      %v597 = vpop.f32.mrf.mxu0
      %v598 = vadd.f32 %v454, %v597
      %599 = vmatprep.mubr.bf16.mxu0 0
      %600 = vmatmul.mubr.bf16.gmra.mxu0 %v427
      %v601 = vpop.f32.mrf.mxu0
      %v602 = vadd.f32 %v450, %v601
      %v603 = vpop.f32.mrf.mxu0
      %v604 = vadd.f32 %v454, %v603
      %v605 = vpop.f32.mrf.mxu0
      %v606 = vadd.f32 %v450, %v605
      %v607 = vpop.f32.mrf.mxu0
      %v608 = vadd.f32 %v454, %v607
      %609 = vmatprep.mubr.bf16.mxu0 0
      %610 = vmatmul.mubr.bf16.gmra.mxu0 %v428
      %v611 = vpop.f32.mrf.mxu0
      %v612 = vadd.f32 %v450, %v611
      %v613 = vpop.f32.mrf.mxu0
      %v614 = vadd.f32 %v454, %v613
      %v615 = vpop.f32.mrf.mxu0
      %v616 = vpop.f32.mrf.mxu0
      %617 = vdwg.mxu0
      %v618 = vmul.f32 %v572, 0.5
      %v619 = vmul.f32 %v574, 0.5
      %v620 = vmul.f32 %v576, 0.5
      %v621 = vmul.f32 %v578, 0.5
      %v622 = vmul.f32 %v582, 0.5
      %v623 = vmul.f32 %v584, 0.5
      %v624 = vmul.f32 %v586, 0.5
      %v625 = vmul.f32 %v588, 0.5
      %v626 = vmul.f32 %v592, 0.5
      %v627 = vmul.f32 %v594, 0.5
      %v628 = vmul.f32 %v596, 0.5
      %v629 = vmul.f32 %v598, 0.5
      %v630 = vmul.f32 %v602, 0.5
      %v631 = vmul.f32 %v604, 0.5
      %v632 = vmul.f32 %v606, 0.5
      %v633 = vmul.f32 %v608, 0.5
      %v634 = vmul.f32 %v612, 0.5
      %v635 = vmul.f32 %v614, 0.5
      %v636 = vmul.f32 %v572, 0.70710677
      %v637 = vmul.f32 %v574, 0.70710677
      %v638 = vmul.f32 %v576, 0.70710677
      %v639 = vmul.f32 %v578, 0.70710677
      %v640 = vmul.f32 %v582, 0.70710677
      %v641 = vmul.f32 %v584, 0.70710677
      %v642 = vmul.f32 %v586, 0.70710677
      %v643 = vmul.f32 %v588, 0.70710677
      %v644 = vmul.f32 %v592, 0.70710677
      %v645 = vmul.f32 %v594, 0.70710677
      %v646 = vmul.f32 %v596, 0.70710677
      %v647 = vmul.f32 %v598, 0.70710677
      %v648 = vmul.f32 %v602, 0.70710677
      %v649 = vmul.f32 %v604, 0.70710677
      %v650 = vmul.f32 %v606, 0.70710677
      %v651 = vmul.f32 %v608, 0.70710677
      %v652 = vmul.f32 %v612, 0.70710677
      %v653 = vmul.f32 %v614, 0.70710677
      %v654 = verf.f32.pop %v636
      %v655 = verf.f32.pop %v637
      %v656 = verf.f32.pop %v638
      %v657 = verf.f32.pop %v639
      %v658 = verf.f32.pop %v640
      %v659 = verf.f32.pop %v641
      %v660 = verf.f32.pop %v642
      %v661 = verf.f32.pop %v643
      %v662 = verf.f32.pop %v644
      %v663 = verf.f32.pop %v645
      %v664 = verf.f32.pop %v646
      %v665 = verf.f32.pop %v647
      %v666 = verf.f32.pop %v648
      %v667 = verf.f32.pop %v649
      %v668 = verf.f32.pop %v650
      %v669 = verf.f32.pop %v651
      %v670 = verf.f32.pop %v652
      %v671 = verf.f32.pop %v653
      %v672 = vadd.f32 %v654, 1.0
      %v673 = vadd.f32 %v655, 1.0
      %v674 = vadd.f32 %v656, 1.0
      %v675 = vadd.f32 %v657, 1.0
      %v676 = vadd.f32 %v658, 1.0
      %v677 = vadd.f32 %v659, 1.0
      %v678 = vadd.f32 %v660, 1.0
      %v679 = vadd.f32 %v661, 1.0
      %v680 = vadd.f32 %v662, 1.0
      %v681 = vadd.f32 %v663, 1.0
      %v682 = vadd.f32 %v664, 1.0
      %v683 = vadd.f32 %v665, 1.0
      %v684 = vadd.f32 %v666, 1.0
      %v685 = vadd.f32 %v667, 1.0
      %v686 = vadd.f32 %v668, 1.0
      %v687 = vadd.f32 %v669, 1.0
      %v688 = vadd.f32 %v670, 1.0
      %v689 = vadd.f32 %v671, 1.0
      %v690 = vmul.f32 %v618, %v672
      %v691 = vmul.f32 %v619, %v673
      %v692 = vmul.f32 %v620, %v674
      %v693 = vmul.f32 %v621, %v675
      %v694 = vmul.f32 %v622, %v676
      %v695 = vmul.f32 %v623, %v677
      %v696 = vmul.f32 %v624, %v678
      %v697 = vmul.f32 %v625, %v679
      %v698 = vmul.f32 %v626, %v680
      %v699 = vmul.f32 %v627, %v681
      %v700 = vmul.f32 %v628, %v682
      %v701 = vmul.f32 %v629, %v683
      %v702 = vmul.f32 %v630, %v684
      %v703 = vmul.f32 %v631, %v685
      %v704 = vmul.f32 %v632, %v686
      %v705 = vmul.f32 %v633, %v687
      %v706 = vmul.f32 %v634, %v688
      %v707 = vmul.f32 %v635, %v689
      %v708 = vpack.c.bf16 %v692, %v690
      %v709 = vpack.c.bf16 %v693, %v691
      %v710 = vpack.c.bf16 %v696, %v694
      %v711 = vpack.c.bf16 %v697, %v695
      %v712 = vpack.c.bf16 %v700, %v698
      %v713 = vpack.c.bf16 %v701, %v699
      %v714 = vpack.c.bf16 %v704, %v702
      %v715 = vpack.c.bf16 %v705, %v703
      %v716 = vpack.c.bf16 %v706, %v706
      %v717 = vpack.c.bf16 %v707, %v707
      %v718 = vld [vmem:[%s5] sm:$0xf]
      %v719 = vld [vmem:[%s5 + $0x4] sm:$0xf]
      %v720 = vld [vmem:[%s5 + $0x8] sm:$0xf]
      %v721 = vld [vmem:[%s5 + $0xc] sm:$0xf]
      %v722 = vld [vmem:[%s5 + $0x10] sm:$0xf]
      %v723 = vld [vmem:[%s5 + $0x14] sm:$0xf]
      %v724 = vld [vmem:[%s5 + $0x18] sm:$0xf]
      %v725 = vld [vmem:[%s5 + $0x1c] sm:$0xf]
      %v726 = vld [vmem:[%s5 + $0x20] sm:$0xf]
      %v727 = vld [vmem:[%s5 + $0x24] sm:$0xf]
      %v728 = vld [vmem:[%s5 + $0x28] sm:$0xf]
      %v729 = vld [vmem:[%s5 + $0x2c] sm:$0xf]
      %v730 = vld [vmem:[%s5 + $0x30] sm:$0xf]
      %v731 = vld [vmem:[%s5 + $0x34] sm:$0xf]
      %v732 = vld [vmem:[%s5 + $0x38] sm:$0xf]
      %v733 = vld [vmem:[%s5 + $0x3c] sm:$0xf]
      %v734 = vld [vmem:[%s5 + $0x40] sm:$0xf]
      %v735 = vld [vmem:[%s5 + $0x44] sm:$0xf]
      %v736 = vld [vmem:[%s5 + $0x48] sm:$0xf]
      %v737 = vld [vmem:[%s5 + $0x4c] sm:$0xf]
      %v738 = vld [vmem:[%s5 + $0x50] sm:$0xf]
      %v739 = vld [vmem:[%s5 + $0x54] sm:$0xf]
      %v740 = vld [vmem:[%s5 + $0x58] sm:$0xf]
      %v741 = vld [vmem:[%s5 + $0x5c] sm:$0xf]
      %v742 = vld [vmem:[%s5 + $0x60] sm:$0xf]
      %v743 = vld [vmem:[%s5 + $0x64] sm:$0xf]
      %v744 = vld [vmem:[%s5 + $0x68] sm:$0xf]
      %v745 = vld [vmem:[%s5 + $0x6c] sm:$0xf]
      %v746 = vld [vmem:[%s5 + $0x70] sm:$0xf]
      %v747 = vld [vmem:[%s5 + $0x74] sm:$0xf]
      %v748 = vld [vmem:[%s5 + $0x78] sm:$0xf]
      %v749 = vld [vmem:[%s5 + $0x7c] sm:$0xf]
      %v782 = vunpack.c.l.b16 %v718
      %v783 = vunpack.c.l.b16 %v719
      %v784 = vunpack.c.l.b16 %v720
      %v785 = vunpack.c.l.b16 %v721
      %v786 = vunpack.c.l.b16 %v722
      %v787 = vunpack.c.l.b16 %v723
      %v788 = vunpack.c.l.b16 %v724
      %v789 = vunpack.c.l.b16 %v725
      %v790 = vunpack.c.l.b16 %v726
      %v791 = vunpack.c.l.b16 %v727
      %v792 = vunpack.c.l.b16 %v728
      %v793 = vunpack.c.l.b16 %v729
      %v794 = vunpack.c.l.b16 %v730
      %v795 = vunpack.c.l.b16 %v731
      %v796 = vunpack.c.l.b16 %v732
      %v797 = vunpack.c.l.b16 %v733
      %v798 = vunpack.c.l.b16 %v734
      %v799 = vunpack.c.l.b16 %v735
      %v800 = vunpack.c.l.b16 %v736
      %v801 = vunpack.c.l.b16 %v737
      %v802 = vunpack.c.l.b16 %v738
      %v803 = vunpack.c.l.b16 %v739
      %v804 = vunpack.c.l.b16 %v740
      %v805 = vunpack.c.l.b16 %v741
      %v806 = vunpack.c.l.b16 %v742
      %v807 = vunpack.c.l.b16 %v743
      %v808 = vunpack.c.l.b16 %v744
      %v809 = vunpack.c.l.b16 %v745
      %v810 = vunpack.c.l.b16 %v746
      %v811 = vunpack.c.l.b16 %v747
      %v812 = vunpack.c.l.b16 %v748
      %v813 = vunpack.c.l.b16 %v749
      %v814 = vpack.c.b16 %v783, %v782
      %v815 = vpack.c.b16 %v785, %v784
      %v816 = vpack.c.b16 %v787, %v786
      %v817 = vpack.c.b16 %v789, %v788
      %v818 = vpack.c.b16 %v791, %v790
      %v819 = vpack.c.b16 %v793, %v792
      %v820 = vpack.c.b16 %v795, %v794
      %v821 = vpack.c.b16 %v797, %v796
      %v822 = vpack.c.b16 %v799, %v798
      %v823 = vpack.c.b16 %v801, %v800
      %v824 = vpack.c.b16 %v803, %v802
      %v825 = vpack.c.b16 %v805, %v804
      %v826 = vpack.c.b16 %v807, %v806
      %v827 = vpack.c.b16 %v809, %v808
      %v828 = vpack.c.b16 %v811, %v810
      %v829 = vpack.c.b16 %v813, %v812
      %846 = vmatprep.subr.bf16.mxu0 0
      %847 = vmatpush1.bf16.msra.mxu0 %v821
      %848 = vmatprep.subr.bf16.mxu0 0
      %849 = vmatpush1.bf16.msra.mxu0 %v820
      %850 = vmatprep.subr.bf16.mxu0 0
      %851 = vmatpush1.bf16.msra.mxu0 %v819
      %852 = vmatprep.subr.bf16.mxu0 0
      %853 = vmatpush1.bf16.msra.mxu0 %v818
      %854 = vmatprep.subr.bf16.mxu0 0
      %855 = vmatpush1.bf16.msra.mxu0 %v817
      %856 = vmatprep.subr.bf16.mxu0 0
      %857 = vmatpush1.bf16.msra.mxu0 %v816
      %858 = vmatprep.subr.bf16.mxu0 0
      %859 = vmatpush1.bf16.msra.mxu0 %v815
      %860 = vmatprep.subr.bf16.mxu0 0
      %861 = vmatpush1.bf16.msra.mxu0 %v814
      %862 = vmatprep.subr.bf16.mxu0 0
      %863 = vmatpush2.bf16.msra.mxu0 %v829
      %864 = vmatprep.subr.bf16.mxu0 0
      %865 = vmatpush2.bf16.msra.mxu0 %v828
      %866 = vmatprep.subr.bf16.mxu0 0
      %867 = vmatpush2.bf16.msra.mxu0 %v827
      %868 = vmatprep.subr.bf16.mxu0 0
      %869 = vmatpush2.bf16.msra.mxu0 %v826
      %870 = vmatprep.subr.bf16.mxu0 0
      %871 = vmatpush2.bf16.msra.mxu0 %v825
      %872 = vmatprep.subr.bf16.mxu0 0
      %873 = vmatpush2.bf16.msra.mxu0 %v824
      %874 = vmatprep.subr.bf16.mxu0 0
      %875 = vmatpush2.bf16.msra.mxu0 %v823
      %876 = vmatprep.subr.bf16.mxu0 0
      %877 = vmatpush2.bf16.msra.mxu0 %v822
      %878 = vmatprep.mubr.bf16.mxu0 %v709
      %879 = vmatmul.mubr.bf16.gmra.mxu0 %v708
      %v880 = vpop.f32.mrf.mxu0
      %v881 = vadd.f32 0.0, %v880
      %v882 = vpop.f32.mrf.mxu0
      %v883 = vpop.f32.mrf.mxu0
      %v884 = vadd.f32 0.0, %v883
      %v885 = vpop.f32.mrf.mxu0
      %886 = vmatprep.mubr.bf16.mxu0 %v711
      %887 = vmatmul.mubr.bf16.gmra.mxu0 %v710
      %v888 = vpop.f32.mrf.mxu0
      %v889 = vadd.f32 0.0, %v888
      %v890 = vpop.f32.mrf.mxu0
      %v891 = vpop.f32.mrf.mxu0
      %v892 = vadd.f32 0.0, %v891
      %v893 = vpop.f32.mrf.mxu0
      %894 = vmatprep.mubr.bf16.mxu0 %v713
      %895 = vmatmul.mubr.bf16.gmra.mxu0 %v712
      %v896 = vpop.f32.mrf.mxu0
      %v897 = vadd.f32 0.0, %v896
      %v898 = vpop.f32.mrf.mxu0
      %v899 = vpop.f32.mrf.mxu0
      %v900 = vadd.f32 0.0, %v899
      %v901 = vpop.f32.mrf.mxu0
      %902 = vmatprep.mubr.bf16.mxu0 %v715
      %903 = vmatmul.mubr.bf16.gmra.mxu0 %v714
      %v904 = vpop.f32.mrf.mxu0
      %v905 = vadd.f32 0.0, %v904
      %v906 = vpop.f32.mrf.mxu0
      %v907 = vpop.f32.mrf.mxu0
      %v908 = vadd.f32 0.0, %v907
      %v909 = vpop.f32.mrf.mxu0
      %910 = vmatprep.mubr.bf16.mxu0 %v717
      %911 = vmatmul.mubr.bf16.gmra.mxu0 %v716
      %v912 = vpop.f32.mrf.mxu0
      %v913 = vadd.f32 0.0, %v912
      %v914 = vpop.f32.mrf.mxu0
      %v915 = vpop.f32.mrf.mxu0
      %v916 = vpop.f32.mrf.mxu0
      %917 = vdwg.mxu0
      %v918 = vadd.f32 %v283, %v881
      %v919 = vadd.f32 %v284, %v884
      %v920 = vadd.f32 %v285, %v889
      %v921 = vadd.f32 %v286, %v892
      %v922 = vadd.f32 %v287, %v897
      %v923 = vadd.f32 %v288, %v900
      %v924 = vadd.f32 %v289, %v905
      %v925 = vadd.f32 %v290, %v908
      %v926 = vadd.f32 %v291, %v913
      %v927 = vld [vmem:[%s6] sm:$0x1]
      %v929 = vlaneseq
      %v930 = vshrl.u32 %v929, 7
      %v931 = vsub.s32 0, %v930
      %v932 = vrot.slane %v927, %v931
      %v934 = vadd.f32 %v918, %v932
      %v935 = vadd.f32 %v919, %v932
      %v936 = vadd.f32 %v920, %v932
      %v937 = vadd.f32 %v921, %v932
      %v938 = vadd.f32 %v922, %v932
      %v939 = vadd.f32 %v923, %v932
      %v940 = vadd.f32 %v924, %v932
      %v941 = vadd.f32 %v925, %v932
      %v942 = vadd.f32 %v926, %v932
      %943 = vst [vmem:[%s280] sm:$0xff] %v934
      %944 = vst [vmem:[%s280 + $0x8] sm:$0xff] %v935
      %945 = vst [vmem:[%s280 + $0x10] sm:$0xff] %v936
      %946 = vst [vmem:[%s280 + $0x18] sm:$0xff] %v937
      %947 = vst [vmem:[%s280 + $0x20] sm:$0xff] %v938
      %948 = vst [vmem:[%s280 + $0x28] sm:$0xff] %v939
      %949 = vst [vmem:[%s280 + $0x30] sm:$0xff] %v940
      %950 = vst [vmem:[%s280 + $0x38] sm:$0xff] %v941
      %951 = vst [vmem:[%s280 + $0x40] sm:$0xff] %v942
      %s952 = smul.u32 9, %s18
      %p953 = scmp.lt.s32.totalorder %s952, 17
      %s954 = scalar_select %p953, %s952, 17
      %s955 = smul.addr %s954, 8
      %s956 = scalar_lea.vmem %s7, %s955
      // Predicated region
      $region49: #{_lambda_.14} parent=47 // pred_check
        %p957 = pneg %p188
      $region50: #{_lambda_.14} parent=47 // pred_check_branch
        %959 = sbr.rel (%p957) target = $region52
      $region51: #{_lambda_.14} parent=47 // pred_region
        %s960 = smul.u32 9, %s18
      $region52: #{_lambda_.14} parent=47 // pred_fallthru
        _
    $region48: #{_lambda_.14} parent=5 // pred_fallthru
      _
    %p961 = scmp.le.s32.totalorder 2, %s13
    // Predicated region
    $region53: #{_lambda_.14} parent=5 // pred_check
      %p962 = pneg %p961
    $region54: #{_lambda_.14} parent=5 // pred_check_branch
      %964 = sbr.rel (%p962) target = $region56
    $region55: #{_lambda_.14} parent=5 // pred_region
      %s965 = ssub.s32 %s13, 2
      // Predicated region
      $region57: #{_lambda_.14} parent=55 // pred_check
        %p966 = pneg %p194
      $region58: #{_lambda_.14} parent=55 // pred_check_branch
        %968 = sbr.rel (%p966) target = $region60
      $region59: #{_lambda_.14} parent=55 // pred_region
        %s969 = smul.u32 9, %s19
        %p970 = scmp.lt.s32.totalorder %s969, 17
        %s971 = scalar_select %p970, %s969, 17
        %s972 = smul.addr %s971, 8
        %s973 = scalar_lea.vmem %s7, %s972
      $region60: #{_lambda_.14} parent=55 // pred_fallthru
        _
    $region56: #{_lambda_.14} parent=5 // pred_fallthru
      _
  $region6: #{_lambda_.14} parent=0 // loop_footer
    %s17 = sadd.s32 1, %s13
  $region7: #{_lambda_.14} parent=0 // loop_footer_branch
    %12 = sbr.rel target = $region3
  $region8: #{_lambda_.14} parent=0 // loop_exit
    _

</llo_original>
